<compile_context>
chip_gen: v7x
topology: tpu7x:2x2x1
jax: 0.10.0
libtpu: 0.0.40
codegen_flags: <defaults>
</compile_context>

<pallas_src>
import numpy as np
import jax
import jax.numpy as jnp
from jax import lax
from jax.experimental import pallas as pl
from jax.experimental.pallas import tpu as pltpu


# ------------------------------ Pallas kernel --------------------------------
def _fused_upsample_conv_kernel(x_ref, ah_ref, bw_ref, wq_ref, b_ref,
                                o_ref, u_ref):
    # x_ref : (D, H, W*Cin)              small input for batch n (resident)
    # ah_ref: (H2+2, H)                  H-upsample matrix, zero pad rows
    # bw_ref: (W*Cin, (W2+2)*Cin)        W-upsample (x) channel id, zero pad cols
    # wq_ref: (3, 3, (W2+2)*Cin, W2*Co)  banded conv weights (kw folded in)
    # b_ref : (1, W2*Co)                 bias tiled along W2
    # o_ref : (TD*H2, W2*Co)             TD output depth slices, row = t*H2 + h
    # u_ref : (TD+2, H2+2, (W2+2)*Cin)   scratch: upsampled + conv-padded slices
    D = x_ref.shape[0]
    H2 = ah_ref.shape[0] - 2
    WCp = bw_ref.shape[1]
    WCo = o_ref.shape[1]
    TDH2 = o_ref.shape[0]
    TD = TDH2 // H2
    TJ = TD // 2
    n_u = TD + 2

    j0 = pl.program_id(1) * TJ          # first input depth of this block
    ah = ah_ref[...]
    bw_mat = bw_ref[...]

    # ---- build the TD+2 upsampled & padded depth slices ----------------------
    # scratch slice t_u holds upsampled depth g = 2*j0 - 1 + t_u;
    # g == -1 and g == 2*D are the conv zero-pad slices (weights forced to 0).
    for t_u in range(n_u):
        p = (t_u - 1) % 2               # parity of the upsampled depth index
        j = j0 + (t_u - 1 - p) // 2     # source input depth
        if p == 1:                      # odd : 0.75*x[j]   + 0.25*x[j+1]
            wa0, wb0 = 0.75, 0.25
            ia, ib = j, j + 1
        else:                           # even: 0.25*x[j-1] + 0.75*x[j]
            wa0, wb0 = 0.25, 0.75
            ia, ib = j - 1, j
        valid = jnp.logical_and(j >= 0, j <= D - 1)
        fa = jnp.where(valid, wa0, 0.0)
        fb = jnp.where(valid, wb0, 0.0)
        ia = jnp.clip(ia, 0, D - 1)     # edge replication == align_corners=False clamp
        ib = jnp.clip(ib, 0, D - 1)
        v = fa * x_ref[ia] + fb * x_ref[ib]                        # (H, W*Cin)
        vw = jnp.dot(v, bw_mat, preferred_element_type=jnp.float32)  # (H, (W2+2)*Cin)
        u_ref[t_u] = jnp.dot(ah, vw, preferred_element_type=jnp.float32)

    # ---- 3x3x3 conv as 9 banded matmuls, f32 acc, bias-initialized -----------
    acc = jnp.broadcast_to(b_ref[...], (TDH2, WCo)).astype(jnp.float32)
    for kh in range(3):
        base = u_ref[:, kh:kh + H2, :].reshape(n_u * H2, WCp)      # aligned slices
        for kd in range(3):
            full = jnp.dot(base, wq_ref[kd, kh],
                           preferred_element_type=jnp.float32)     # (n_u*H2, W2*Co)
            acc = acc + full[kd * H2:kd * H2 + TDH2]
    o_ref[...] = jnp.maximum(acc, 0.0).astype(o_ref.dtype)         # ReLU, lane-dense store


# --------------------------- parameter packing --------------------------------
def _interp_matrix_x2(L):
    """(2L, L) matrix of torch Upsample(scale=2, mode='linear', align_corners=False)."""
    A = np.zeros((2 * L, L), np.float32)
    for j in range(L):
        A[2 * j, max(j - 1, 0)] += 0.25
        A[2 * j, j] += 0.75
        A[2 * j + 1, j] += 0.75
        A[2 * j + 1, min(j + 1, L - 1)] += 0.25
    return A


def _pack_params(w_dhwio, bias, H, W):
    Kd, Kh, Kw, Cin, Co = w_dhwio.shape
    H2, W2 = 2 * H, 2 * W
    # H upsample with zero rows at both ends (conv zero padding along H).
    ah = np.zeros((H2 + 2, H), np.float32)
    ah[1:H2 + 1] = _interp_matrix_x2(H)
    # W upsample (per channel) with zero pad columns, flattened (W*Cin) layout.
    awp = np.zeros((W2 + 2, W), np.float32)
    awp[1:W2 + 1] = _interp_matrix_x2(W)
    bw = np.kron(awp.T, np.eye(Cin, dtype=np.float32))          # (W*Cin, (W2+2)*Cin)
    # Banded conv weights: wq[kd,kh, (w+kw)*Cin+ci, w*Co+co] = W[kd,kh,kw,ci,co]
    P = np.stack([np.eye(W2 + 2, W2, k=-kw, dtype=np.float32) for kw in range(Kw)])
    wq = jnp.einsum('kpw,dhkio->dhpiwo', jnp.asarray(P),
                    w_dhwio.astype(jnp.float32))
    wq = wq.reshape(Kd, Kh, (W2 + 2) * Cin, W2 * Co)
    bias_b = jnp.tile(bias.astype(jnp.float32), W2).reshape(1, W2 * Co)
    return jnp.asarray(ah), jnp.asarray(bw), wq, bias_b


# --------------------------------- wrapper ------------------------------------
def upsampling_forward(x_ncdhw, w_dhwio, bias):
    """VNet UpSampling: trilinear x2 upsample -> Conv3d(k3, pad1) -> ReLU."""
    N, Cin, D, H, W = x_ncdhw.shape
    Co = w_dhwio.shape[-1]
    D2, H2, W2 = 2 * D, 2 * H, 2 * W

    # NCDHW -> lane-packed channels-last (N, D, H, W*Cin).
    x = jnp.transpose(x_ncdhw, (0, 2, 3, 4, 1)).reshape(N, D, H, W * Cin)
    x = x.astype(jnp.float32)

    ah, bw, wq, bias_b = _pack_params(w_dhwio, bias, H, W)

    # Depth tiling: TD = 2*TJ output depth slices per grid step (<=128 rows).
    TJ = 1
    for cand in range(D, 0, -1):
        if D % cand == 0 and 2 * cand * H2 <= 128 and (2 * cand * H2) % 8 == 0:
            TJ = cand
            break
    TD = 2 * TJ
    assert D % TJ == 0

    # TODO(synk): for very large decoder volumes, switch x to memory_space=pl.ANY
    # and double-buffer a (TJ+2)-slice depth halo with pltpu.make_async_copy
    # instead of keeping the whole (small) per-batch volume resident.

    out_flat = pl.pallas_call(
        _fused_upsample_conv_kernel,
        out_shape=jax.ShapeDtypeStruct((N, D2 * H2, W2 * Co), jnp.float32),
        grid_spec=pltpu.PrefetchScalarGridSpec(
            num_scalar_prefetch=0,
            grid=(N, D // TJ),
            in_specs=[
                pl.BlockSpec((None, D, H, W * Cin), lambda n, jb: (n, 0, 0, 0)),
                pl.BlockSpec((H2 + 2, H), lambda n, jb: (0, 0)),
                pl.BlockSpec((W * Cin, (W2 + 2) * Cin), lambda n, jb: (0, 0)),
                pl.BlockSpec((3, 3, (W2 + 2) * Cin, W2 * Co),
                             lambda n, jb: (0, 0, 0, 0)),
                pl.BlockSpec((1, W2 * Co), lambda n, jb: (0, 0)),
            ],
            out_specs=pl.BlockSpec((None, TD * H2, W2 * Co),
                                   lambda n, jb: (n, jb, 0)),
            scratch_shapes=[
                pltpu.VMEM((TD + 2, H2 + 2, (W2 + 2) * Cin), jnp.float32)],
        ),
        compiler_params=pltpu.CompilerParams(
            dimension_semantics=("parallel", "parallel")),
    )(x, ah, bw, wq, bias_b)

    y = out_flat.reshape(N, D2, H2, W2, Co)
    return jnp.transpose(y, (0, 4, 1, 2, 3)).astype(x_ncdhw.dtype)


# ----------------------------------- main --------------------------------------
if __name__ == "__main__":
    n_filters_in, n_filters_out = 4, 8
    N, D, H, W = 2, 8, 8, 8

    key = jax.random.PRNGKey(0)
    kx, kwt, kb = jax.random.split(key, 3)

    x = jax.random.normal(kx, (N, n_filters_in, D, H, W), jnp.float32)

    # Conv3d(kernel_size=3, padding=1) params (kaiming-uniform-ish bounds), DHWIO.
    fan_in = n_filters_in * 27
    bound = 1.0 / float(np.sqrt(fan_in))
    w = jax.random.uniform(kwt, (3, 3, 3, n_filters_in, n_filters_out),
                           jnp.float32, -bound, bound)
    b = jax.random.uniform(kb, (n_filters_out,), jnp.float32, -bound, bound)

    out = upsampling_forward(x, w, b)
    out = jax.block_until_ready(out)

    # Independent reference: gather-based trilinear upsample + XLA conv.
    def _upsample_linear_axis(v, axis, scale=2):
        L = v.shape[axis]
        i = jnp.arange(L * scale, dtype=jnp.float32)
        src = jnp.maximum((i + 0.5) / scale - 0.5, 0.0)
        i0 = jnp.floor(src).astype(jnp.int32)
        i1 = jnp.minimum(i0 + 1, L - 1)
        w1 = src - i0.astype(jnp.float32)
        shp = [1] * v.ndim
        shp[axis] = L * scale
        return (jnp.take(v, i0, axis=axis) * (1.0 - w1).reshape(shp)
                + jnp.take(v, i1, axis=axis) * w1.reshape(shp))

    x_up = jnp.transpose(x, (0, 2, 3, 4, 1))
    for ax in (1, 2, 3):
        x_up = _upsample_linear_axis(x_up, ax)
    ref = lax.conv_general_dilated(
        x_up, w, window_strides=(1, 1, 1), padding="SAME",
        dimension_numbers=("NDHWC", "DHWIO", "NDHWC"),
        precision=lax.Precision.HIGHEST) + b
    ref = jnp.maximum(ref, 0.0)
    ref = jnp.transpose(ref, (0, 4, 1, 2, 3))

    assert out.shape == (N, n_filters_out, 2 * D, 2 * H, 2 * W)
    max_err = jnp.max(jnp.abs(out - ref))
    assert jnp.allclose(out, ref, atol=2e-2, rtol=2e-2), (
        f"mismatch vs XLA reference (max abs err {max_err})")
    print("KERNEL_OK")
</pallas_src>

<mosaic_0001>
module attributes {stable_mosaic.version = 11 : i64} {
  func.func @_fused_upsample_conv_kernel(%arg0: i32, %arg1: i32, %arg2: memref<1x8x8x32xf32, #tpu.memory_space<vmem>>, %arg3: memref<18x8xf32, #tpu.memory_space<vmem>>, %arg4: memref<32x72xf32, #tpu.memory_space<vmem>>, %arg5: memref<3x3x72x128xf32, #tpu.memory_space<vmem>>, %arg6: memref<1x128xf32, #tpu.memory_space<vmem>>, %arg7: memref<1x128x128xf32, #tpu.memory_space<vmem>>, %arg8: memref<10x18x72xf32, #tpu.memory_space<vmem>>) attributes {dimension_semantics = [#tpu.dimension_semantics<parallel>, #tpu.dimension_semantics<parallel>], iteration_bounds = array<i64: 2, 2>, scalar_prefetch = 0 : i64, scratch_operands = 1 : i64, tpu.core_type = #tpu.core_type<tc>, window_params = [{transform_indices = @transform_0, window_bounds = array<i64: 1, 8, 8, 32>}, {pipeline_mode = #tpu.pipeline_mode<synchronous>, transform_indices = @transform_1, window_bounds = array<i64: 18, 8>}, {pipeline_mode = #tpu.pipeline_mode<synchronous>, transform_indices = @transform_2, window_bounds = array<i64: 32, 72>}, {pipeline_mode = #tpu.pipeline_mode<synchronous>, transform_indices = @transform_3, window_bounds = array<i64: 3, 3, 72, 128>}, {pipeline_mode = #tpu.pipeline_mode<synchronous>, transform_indices = @transform_4, window_bounds = array<i64: 1, 128>}, {transform_indices = @transform_5, window_bounds = array<i64: 1, 128, 128>}]} {
    %c4_i32 = arith.constant 4 : i32
    %0 = arith.muli %arg1, %c4_i32 : i32
    %c0 = arith.constant 0 : index
    %c0_0 = arith.constant 0 : index
    %1 = vector.load %arg3[%c0, %c0_0] : memref<18x8xf32, #tpu.memory_space<vmem>>, vector<18x8xf32>
    %c0_1 = arith.constant 0 : index
    %c0_2 = arith.constant 0 : index
    %2 = vector.load %arg4[%c0_1, %c0_2] : memref<32x72xf32, #tpu.memory_space<vmem>>, vector<32x72xf32>
    %c-1_i32 = arith.constant -1 : i32
    %3 = arith.addi %0, %c-1_i32 : i32
    %c1_i32 = arith.constant 1 : i32
    %4 = arith.addi %3, %c1_i32 : i32
    %c0_i32 = arith.constant 0 : i32
    %5 = arith.cmpi sge, %3, %c0_i32 : i32
    %c7_i32 = arith.constant 7 : i32
    %6 = arith.cmpi sle, %3, %c7_i32 : i32
    %7 = arith.andi %5, %6 : i1
    %cst = arith.constant 7.500000e-01 : f32
    %cst_3 = arith.constant 0.000000e+00 : f32
    %8 = arith.select %7, %cst, %cst_3 : f32
    %cst_4 = arith.constant 2.500000e-01 : f32
    %cst_5 = arith.constant 0.000000e+00 : f32
    %9 = arith.select %7, %cst_4, %cst_5 : f32
    %c0_i32_6 = arith.constant 0 : i32
    %c7_i32_7 = arith.constant 7 : i32
    %10 = arith.maxsi %c0_i32_6, %3 : i32
    %11 = arith.minsi %c7_i32_7, %10 : i32
    %c0_i32_8 = arith.constant 0 : i32
    %c7_i32_9 = arith.constant 7 : i32
    %12 = arith.maxsi %c0_i32_8, %4 : i32
    %13 = arith.minsi %c7_i32_9, %12 : i32
    %c0_10 = arith.constant 0 : index
    %14 = arith.index_cast %11 : i32 to index
    %c0_11 = arith.constant 0 : index
    %c0_12 = arith.constant 0 : index
    %15 = vector.load %arg2[%c0_10, %14, %c0_11, %c0_12] : memref<1x8x8x32xf32, #tpu.memory_space<vmem>>, vector<1x1x8x32xf32>
    %16 = vector.shape_cast %15 : vector<1x1x8x32xf32> to vector<8x32xf32>
    %17 = vector.broadcast %8 : f32 to vector<8x32xf32>
    %18 = arith.mulf %17, %16 : vector<8x32xf32>
    %c0_13 = arith.constant 0 : index
    %19 = arith.index_cast %13 : i32 to index
    %c0_14 = arith.constant 0 : index
    %c0_15 = arith.constant 0 : index
    %20 = vector.load %arg2[%c0_13, %19, %c0_14, %c0_15] : memref<1x8x8x32xf32, #tpu.memory_space<vmem>>, vector<1x1x8x32xf32>
    %21 = vector.shape_cast %20 : vector<1x1x8x32xf32> to vector<8x32xf32>
    %22 = vector.broadcast %9 : f32 to vector<8x32xf32>
    %23 = arith.mulf %22, %21 : vector<8x32xf32>
    %24 = arith.addf %18, %23 : vector<8x32xf32>
    %cst_16 = arith.constant dense<0.000000e+00> : vector<8x72xf32>
    %25 = tpu.matmul %24, %2, %cst_16 {dimension_numbers = #tpu.dot_dimension_numbers<[1], [0], [0], [1], [0, 0, 1, 1], [], []>} : vector<8x32xf32>, vector<32x72xf32>, vector<8x72xf32> -> vector<8x72xf32>
    %cst_17 = arith.constant dense<0.000000e+00> : vector<18x72xf32>
    %26 = tpu.matmul %1, %25, %cst_17 {dimension_numbers = #tpu.dot_dimension_numbers<[1], [0], [0], [1], [0, 0, 1, 1], [], []>} : vector<18x8xf32>, vector<8x72xf32>, vector<18x72xf32> -> vector<18x72xf32>
    %c0_18 = arith.constant 0 : index
    %c0_19 = arith.constant 0 : index
    %c0_20 = arith.constant 0 : index
    %27 = vector.load %arg8[%c0_18, %c0_19, %c0_20] : memref<10x18x72xf32, #tpu.memory_space<vmem>>, vector<1x18x72xf32>
    %28 = vector.shape_cast %27 : vector<1x18x72xf32> to vector<18x72xf32>
    %29 = vector.shape_cast %26 : vector<18x72xf32> to vector<1x18x72xf32>
    tpu.vector_store %arg8[%c0_18, %c0_19, %c0_20], %29 {strides = array<i32>} : memref<10x18x72xf32, #tpu.memory_space<vmem>>, vector<1x18x72xf32>,
    %c0_i32_21 = arith.constant 0 : i32
    %30 = arith.addi %0, %c0_i32_21 : i32
    %c1_i32_22 = arith.constant 1 : i32
    %31 = arith.subi %30, %c1_i32_22 : i32
    %c0_i32_23 = arith.constant 0 : i32
    %32 = arith.cmpi sge, %30, %c0_i32_23 : i32
    %c7_i32_24 = arith.constant 7 : i32
    %33 = arith.cmpi sle, %30, %c7_i32_24 : i32
    %34 = arith.andi %32, %33 : i1
    %cst_25 = arith.constant 2.500000e-01 : f32
    %cst_26 = arith.constant 0.000000e+00 : f32
    %35 = arith.select %34, %cst_25, %cst_26 : f32
    %cst_27 = arith.constant 7.500000e-01 : f32
    %cst_28 = arith.constant 0.000000e+00 : f32
    %36 = arith.select %34, %cst_27, %cst_28 : f32
    %c0_i32_29 = arith.constant 0 : i32
    %c7_i32_30 = arith.constant 7 : i32
    %37 = arith.maxsi %c0_i32_29, %31 : i32
    %38 = arith.minsi %c7_i32_30, %37 : i32
    %c0_i32_31 = arith.constant 0 : i32
    %c7_i32_32 = arith.constant 7 : i32
    %39 = arith.maxsi %c0_i32_31, %30 : i32
    %40 = arith.minsi %c7_i32_32, %39 : i32
    %c0_33 = arith.constant 0 : index
    %41 = arith.index_cast %38 : i32 to index
    %c0_34 = arith.constant 0 : index
    %c0_35 = arith.constant 0 : index
    %42 = vector.load %arg2[%c0_33, %41, %c0_34, %c0_35] : memref<1x8x8x32xf32, #tpu.memory_space<vmem>>, vector<1x1x8x32xf32>
    %43 = vector.shape_cast %42 : vector<1x1x8x32xf32> to vector<8x32xf32>
    %44 = vector.broadcast %35 : f32 to vector<8x32xf32>
    %45 = arith.mulf %44, %43 : vector<8x32xf32>
    %c0_36 = arith.constant 0 : index
    %46 = arith.index_cast %40 : i32 to index
    %c0_37 = arith.constant 0 : index
    %c0_38 = arith.constant 0 : index
    %47 = vector.load %arg2[%c0_36, %46, %c0_37, %c0_38] : memref<1x8x8x32xf32, #tpu.memory_space<vmem>>, vector<1x1x8x32xf32>
    %48 = vector.shape_cast %47 : vector<1x1x8x32xf32> to vector<8x32xf32>
    %49 = vector.broadcast %36 : f32 to vector<8x32xf32>
    %50 = arith.mulf %49, %48 : vector<8x32xf32>
    %51 = arith.addf %45, %50 : vector<8x32xf32>
    %cst_39 = arith.constant dense<0.000000e+00> : vector<8x72xf32>
    %52 = tpu.matmul %51, %2, %cst_39 {dimension_numbers = #tpu.dot_dimension_numbers<[1], [0], [0], [1], [0, 0, 1, 1], [], []>} : vector<8x32xf32>, vector<32x72xf32>, vector<8x72xf32> -> vector<8x72xf32>
    %cst_40 = arith.constant dense<0.000000e+00> : vector<18x72xf32>
    %53 = tpu.matmul %1, %52, %cst_40 {dimension_numbers = #tpu.dot_dimension_numbers<[1], [0], [0], [1], [0, 0, 1, 1], [], []>} : vector<18x8xf32>, vector<8x72xf32>, vector<18x72xf32> -> vector<18x72xf32>
    %c1 = arith.constant 1 : index
    %c0_41 = arith.constant 0 : index
    %c0_42 = arith.constant 0 : index
    %54 = vector.load %arg8[%c1, %c0_41, %c0_42] : memref<10x18x72xf32, #tpu.memory_space<vmem>>, vector<1x18x72xf32>
    %55 = vector.shape_cast %54 : vector<1x18x72xf32> to vector<18x72xf32>
    %56 = vector.shape_cast %53 : vector<18x72xf32> to vector<1x18x72xf32>
    tpu.vector_store %arg8[%c1, %c0_41, %c0_42], %56 {strides = array<i32>} : memref<10x18x72xf32, #tpu.memory_space<vmem>>, vector<1x18x72xf32>,
    %c0_i32_43 = arith.constant 0 : i32
    %57 = arith.addi %0, %c0_i32_43 : i32
    %c1_i32_44 = arith.constant 1 : i32
    %58 = arith.addi %57, %c1_i32_44 : i32
    %c0_i32_45 = arith.constant 0 : i32
    %59 = arith.cmpi sge, %57, %c0_i32_45 : i32
    %c7_i32_46 = arith.constant 7 : i32
    %60 = arith.cmpi sle, %57, %c7_i32_46 : i32
    %61 = arith.andi %59, %60 : i1
    %cst_47 = arith.constant 7.500000e-01 : f32
    %cst_48 = arith.constant 0.000000e+00 : f32
    %62 = arith.select %61, %cst_47, %cst_48 : f32
    %cst_49 = arith.constant 2.500000e-01 : f32
    %cst_50 = arith.constant 0.000000e+00 : f32
    %63 = arith.select %61, %cst_49, %cst_50 : f32
    %c0_i32_51 = arith.constant 0 : i32
    %c7_i32_52 = arith.constant 7 : i32
    %64 = arith.maxsi %c0_i32_51, %57 : i32
    %65 = arith.minsi %c7_i32_52, %64 : i32
    %c0_i32_53 = arith.constant 0 : i32
    %c7_i32_54 = arith.constant 7 : i32
    %66 = arith.maxsi %c0_i32_53, %58 : i32
    %67 = arith.minsi %c7_i32_54, %66 : i32
    %c0_55 = arith.constant 0 : index
    %68 = arith.index_cast %65 : i32 to index
    %c0_56 = arith.constant 0 : index
    %c0_57 = arith.constant 0 : index
    %69 = vector.load %arg2[%c0_55, %68, %c0_56, %c0_57] : memref<1x8x8x32xf32, #tpu.memory_space<vmem>>, vector<1x1x8x32xf32>
    %70 = vector.shape_cast %69 : vector<1x1x8x32xf32> to vector<8x32xf32>
    %71 = vector.broadcast %62 : f32 to vector<8x32xf32>
    %72 = arith.mulf %71, %70 : vector<8x32xf32>
    %c0_58 = arith.constant 0 : index
    %73 = arith.index_cast %67 : i32 to index
    %c0_59 = arith.constant 0 : index
    %c0_60 = arith.constant 0 : index
    %74 = vector.load %arg2[%c0_58, %73, %c0_59, %c0_60] : memref<1x8x8x32xf32, #tpu.memory_space<vmem>>, vector<1x1x8x32xf32>
    %75 = vector.shape_cast %74 : vector<1x1x8x32xf32> to vector<8x32xf32>
    %76 = vector.broadcast %63 : f32 to vector<8x32xf32>
    %77 = arith.mulf %76, %75 : vector<8x32xf32>
    %78 = arith.addf %72, %77 : vector<8x32xf32>
    %cst_61 = arith.constant dense<0.000000e+00> : vector<8x72xf32>
    %79 = tpu.matmul %78, %2, %cst_61 {dimension_numbers = #tpu.dot_dimension_numbers<[1], [0], [0], [1], [0, 0, 1, 1], [], []>} : vector<8x32xf32>, vector<32x72xf32>, vector<8x72xf32> -> vector<8x72xf32>
    %cst_62 = arith.constant dense<0.000000e+00> : vector<18x72xf32>
    %80 = tpu.matmul %1, %79, %cst_62 {dimension_numbers = #tpu.dot_dimension_numbers<[1], [0], [0], [1], [0, 0, 1, 1], [], []>} : vector<18x8xf32>, vector<8x72xf32>, vector<18x72xf32> -> vector<18x72xf32>
    %c2 = arith.constant 2 : index
    %c0_63 = arith.constant 0 : index
    %c0_64 = arith.constant 0 : index
    %81 = vector.load %arg8[%c2, %c0_63, %c0_64] : memref<10x18x72xf32, #tpu.memory_space<vmem>>, vector<1x18x72xf32>
    %82 = vector.shape_cast %81 : vector<1x18x72xf32> to vector<18x72xf32>
    %83 = vector.shape_cast %80 : vector<18x72xf32> to vector<1x18x72xf32>
    tpu.vector_store %arg8[%c2, %c0_63, %c0_64], %83 {strides = array<i32>} : memref<10x18x72xf32, #tpu.memory_space<vmem>>, vector<1x18x72xf32>,
    %c1_i32_65 = arith.constant 1 : i32
    %84 = arith.addi %0, %c1_i32_65 : i32
    %c1_i32_66 = arith.constant 1 : i32
    %85 = arith.subi %84, %c1_i32_66 : i32
    %c0_i32_67 = arith.constant 0 : i32
    %86 = arith.cmpi sge, %84, %c0_i32_67 : i32
    %c7_i32_68 = arith.constant 7 : i32
    %87 = arith.cmpi sle, %84, %c7_i32_68 : i32
    %88 = arith.andi %86, %87 : i1
    %cst_69 = arith.constant 2.500000e-01 : f32
    %cst_70 = arith.constant 0.000000e+00 : f32
    %89 = arith.select %88, %cst_69, %cst_70 : f32
    %cst_71 = arith.constant 7.500000e-01 : f32
    %cst_72 = arith.constant 0.000000e+00 : f32
    %90 = arith.select %88, %cst_71, %cst_72 : f32
    %c0_i32_73 = arith.constant 0 : i32
    %c7_i32_74 = arith.constant 7 : i32
    %91 = arith.maxsi %c0_i32_73, %85 : i32
    %92 = arith.minsi %c7_i32_74, %91 : i32
    %c0_i32_75 = arith.constant 0 : i32
    %c7_i32_76 = arith.constant 7 : i32
    %93 = arith.maxsi %c0_i32_75, %84 : i32
    %94 = arith.minsi %c7_i32_76, %93 : i32
    %c0_77 = arith.constant 0 : index
    %95 = arith.index_cast %92 : i32 to index
    %c0_78 = arith.constant 0 : index
    %c0_79 = arith.constant 0 : index
    %96 = vector.load %arg2[%c0_77, %95, %c0_78, %c0_79] : memref<1x8x8x32xf32, #tpu.memory_space<vmem>>, vector<1x1x8x32xf32>
    %97 = vector.shape_cast %96 : vector<1x1x8x32xf32> to vector<8x32xf32>
    %98 = vector.broadcast %89 : f32 to vector<8x32xf32>
    %99 = arith.mulf %98, %97 : vector<8x32xf32>
    %c0_80 = arith.constant 0 : index
    %100 = arith.index_cast %94 : i32 to index
    %c0_81 = arith.constant 0 : index
    %c0_82 = arith.constant 0 : index
    %101 = vector.load %arg2[%c0_80, %100, %c0_81, %c0_82] : memref<1x8x8x32xf32, #tpu.memory_space<vmem>>, vector<1x1x8x32xf32>
    %102 = vector.shape_cast %101 : vector<1x1x8x32xf32> to vector<8x32xf32>
    %103 = vector.broadcast %90 : f32 to vector<8x32xf32>
    %104 = arith.mulf %103, %102 : vector<8x32xf32>
    %105 = arith.addf %99, %104 : vector<8x32xf32>
    %cst_83 = arith.constant dense<0.000000e+00> : vector<8x72xf32>
    %106 = tpu.matmul %105, %2, %cst_83 {dimension_numbers = #tpu.dot_dimension_numbers<[1], [0], [0], [1], [0, 0, 1, 1], [], []>} : vector<8x32xf32>, vector<32x72xf32>, vector<8x72xf32> -> vector<8x72xf32>
    %cst_84 = arith.constant dense<0.000000e+00> : vector<18x72xf32>
    %107 = tpu.matmul %1, %106, %cst_84 {dimension_numbers = #tpu.dot_dimension_numbers<[1], [0], [0], [1], [0, 0, 1, 1], [], []>} : vector<18x8xf32>, vector<8x72xf32>, vector<18x72xf32> -> vector<18x72xf32>
    %c3 = arith.constant 3 : index
    %c0_85 = arith.constant 0 : index
    %c0_86 = arith.constant 0 : index
    %108 = vector.load %arg8[%c3, %c0_85, %c0_86] : memref<10x18x72xf32, #tpu.memory_space<vmem>>, vector<1x18x72xf32>
    %109 = vector.shape_cast %108 : vector<1x18x72xf32> to vector<18x72xf32>
    %110 = vector.shape_cast %107 : vector<18x72xf32> to vector<1x18x72xf32>
    tpu.vector_store %arg8[%c3, %c0_85, %c0_86], %110 {strides = array<i32>} : memref<10x18x72xf32, #tpu.memory_space<vmem>>, vector<1x18x72xf32>,
    %c1_i32_87 = arith.constant 1 : i32
    %111 = arith.addi %0, %c1_i32_87 : i32
    %c1_i32_88 = arith.constant 1 : i32
    %112 = arith.addi %111, %c1_i32_88 : i32
    %c0_i32_89 = arith.constant 0 : i32
    %113 = arith.cmpi sge, %111, %c0_i32_89 : i32
    %c7_i32_90 = arith.constant 7 : i32
    %114 = arith.cmpi sle, %111, %c7_i32_90 : i32
    %115 = arith.andi %113, %114 : i1
    %cst_91 = arith.constant 7.500000e-01 : f32
    %cst_92 = arith.constant 0.000000e+00 : f32
    %116 = arith.select %115, %cst_91, %cst_92 : f32
    %cst_93 = arith.constant 2.500000e-01 : f32
    %cst_94 = arith.constant 0.000000e+00 : f32
    %117 = arith.select %115, %cst_93, %cst_94 : f32
    %c0_i32_95 = arith.constant 0 : i32
    %c7_i32_96 = arith.constant 7 : i32
    %118 = arith.maxsi %c0_i32_95, %111 : i32
    %119 = arith.minsi %c7_i32_96, %118 : i32
    %c0_i32_97 = arith.constant 0 : i32
    %c7_i32_98 = arith.constant 7 : i32
    %120 = arith.maxsi %c0_i32_97, %112 : i32
    %121 = arith.minsi %c7_i32_98, %120 : i32
    %c0_99 = arith.constant 0 : index
    %122 = arith.index_cast %119 : i32 to index
    %c0_100 = arith.constant 0 : index
    %c0_101 = arith.constant 0 : index
    %123 = vector.load %arg2[%c0_99, %122, %c0_100, %c0_101] : memref<1x8x8x32xf32, #tpu.memory_space<vmem>>, vector<1x1x8x32xf32>
    %124 = vector.shape_cast %123 : vector<1x1x8x32xf32> to vector<8x32xf32>
    %125 = vector.broadcast %116 : f32 to vector<8x32xf32>
    %126 = arith.mulf %125, %124 : vector<8x32xf32>
    %c0_102 = arith.constant 0 : index
    %127 = arith.index_cast %121 : i32 to index
    %c0_103 = arith.constant 0 : index
    %c0_104 = arith.constant 0 : index
    %128 = vector.load %arg2[%c0_102, %127, %c0_103, %c0_104] : memref<1x8x8x32xf32, #tpu.memory_space<vmem>>, vector<1x1x8x32xf32>
    %129 = vector.shape_cast %128 : vector<1x1x8x32xf32> to vector<8x32xf32>
    %130 = vector.broadcast %117 : f32 to vector<8x32xf32>
    %131 = arith.mulf %130, %129 : vector<8x32xf32>
    %132 = arith.addf %126, %131 : vector<8x32xf32>
    %cst_105 = arith.constant dense<0.000000e+00> : vector<8x72xf32>
    %133 = tpu.matmul %132, %2, %cst_105 {dimension_numbers = #tpu.dot_dimension_numbers<[1], [0], [0], [1], [0, 0, 1, 1], [], []>} : vector<8x32xf32>, vector<32x72xf32>, vector<8x72xf32> -> vector<8x72xf32>
    %cst_106 = arith.constant dense<0.000000e+00> : vector<18x72xf32>
    %134 = tpu.matmul %1, %133, %cst_106 {dimension_numbers = #tpu.dot_dimension_numbers<[1], [0], [0], [1], [0, 0, 1, 1], [], []>} : vector<18x8xf32>, vector<8x72xf32>, vector<18x72xf32> -> vector<18x72xf32>
    %c4 = arith.constant 4 : index
    %c0_107 = arith.constant 0 : index
    %c0_108 = arith.constant 0 : index
    %135 = vector.load %arg8[%c4, %c0_107, %c0_108] : memref<10x18x72xf32, #tpu.memory_space<vmem>>, vector<1x18x72xf32>
    %136 = vector.shape_cast %135 : vector<1x18x72xf32> to vector<18x72xf32>
    %137 = vector.shape_cast %134 : vector<18x72xf32> to vector<1x18x72xf32>
    tpu.vector_store %arg8[%c4, %c0_107, %c0_108], %137 {strides = array<i32>} : memref<10x18x72xf32, #tpu.memory_space<vmem>>, vector<1x18x72xf32>,
    %c2_i32 = arith.constant 2 : i32
    %138 = arith.addi %0, %c2_i32 : i32
    %c1_i32_109 = arith.constant 1 : i32
    %139 = arith.subi %138, %c1_i32_109 : i32
    %c0_i32_110 = arith.constant 0 : i32
    %140 = arith.cmpi sge, %138, %c0_i32_110 : i32
    %c7_i32_111 = arith.constant 7 : i32
    %141 = arith.cmpi sle, %138, %c7_i32_111 : i32
    %142 = arith.andi %140, %141 : i1
    %cst_112 = arith.constant 2.500000e-01 : f32
    %cst_113 = arith.constant 0.000000e+00 : f32
    %143 = arith.select %142, %cst_112, %cst_113 : f32
    %cst_114 = arith.constant 7.500000e-01 : f32
    %cst_115 = arith.constant 0.000000e+00 : f32
    %144 = arith.select %142, %cst_114, %cst_115 : f32
    %c0_i32_116 = arith.constant 0 : i32
    %c7_i32_117 = arith.constant 7 : i32
    %145 = arith.maxsi %c0_i32_116, %139 : i32
    %146 = arith.minsi %c7_i32_117, %145 : i32
    %c0_i32_118 = arith.constant 0 : i32
    %c7_i32_119 = arith.constant 7 : i32
    %147 = arith.maxsi %c0_i32_118, %138 : i32
    %148 = arith.minsi %c7_i32_119, %147 : i32
    %c0_120 = arith.constant 0 : index
    %149 = arith.index_cast %146 : i32 to index
    %c0_121 = arith.constant 0 : index
    %c0_122 = arith.constant 0 : index
    %150 = vector.load %arg2[%c0_120, %149, %c0_121, %c0_122] : memref<1x8x8x32xf32, #tpu.memory_space<vmem>>, vector<1x1x8x32xf32>
    %151 = vector.shape_cast %150 : vector<1x1x8x32xf32> to vector<8x32xf32>
    %152 = vector.broadcast %143 : f32 to vector<8x32xf32>
    %153 = arith.mulf %152, %151 : vector<8x32xf32>
    %c0_123 = arith.constant 0 : index
    %154 = arith.index_cast %148 : i32 to index
    %c0_124 = arith.constant 0 : index
    %c0_125 = arith.constant 0 : index
    %155 = vector.load %arg2[%c0_123, %154, %c0_124, %c0_125] : memref<1x8x8x32xf32, #tpu.memory_space<vmem>>, vector<1x1x8x32xf32>
    %156 = vector.shape_cast %155 : vector<1x1x8x32xf32> to vector<8x32xf32>
    %157 = vector.broadcast %144 : f32 to vector<8x32xf32>
    %158 = arith.mulf %157, %156 : vector<8x32xf32>
    %159 = arith.addf %153, %158 : vector<8x32xf32>
    %cst_126 = arith.constant dense<0.000000e+00> : vector<8x72xf32>
    %160 = tpu.matmul %159, %2, %cst_126 {dimension_numbers = #tpu.dot_dimension_numbers<[1], [0], [0], [1], [0, 0, 1, 1], [], []>} : vector<8x32xf32>, vector<32x72xf32>, vector<8x72xf32> -> vector<8x72xf32>
    %cst_127 = arith.constant dense<0.000000e+00> : vector<18x72xf32>
    %161 = tpu.matmul %1, %160, %cst_127 {dimension_numbers = #tpu.dot_dimension_numbers<[1], [0], [0], [1], [0, 0, 1, 1], [], []>} : vector<18x8xf32>, vector<8x72xf32>, vector<18x72xf32> -> vector<18x72xf32>
    %c5 = arith.constant 5 : index
    %c0_128 = arith.constant 0 : index
    %c0_129 = arith.constant 0 : index
    %162 = vector.load %arg8[%c5, %c0_128, %c0_129] : memref<10x18x72xf32, #tpu.memory_space<vmem>>, vector<1x18x72xf32>
    %163 = vector.shape_cast %162 : vector<1x18x72xf32> to vector<18x72xf32>
    %164 = vector.shape_cast %161 : vector<18x72xf32> to vector<1x18x72xf32>
    tpu.vector_store %arg8[%c5, %c0_128, %c0_129], %164 {strides = array<i32>} : memref<10x18x72xf32, #tpu.memory_space<vmem>>, vector<1x18x72xf32>,
    %c2_i32_130 = arith.constant 2 : i32
    %165 = arith.addi %0, %c2_i32_130 : i32
    %c1_i32_131 = arith.constant 1 : i32
    %166 = arith.addi %165, %c1_i32_131 : i32
    %c0_i32_132 = arith.constant 0 : i32
    %167 = arith.cmpi sge, %165, %c0_i32_132 : i32
    %c7_i32_133 = arith.constant 7 : i32
    %168 = arith.cmpi sle, %165, %c7_i32_133 : i32
    %169 = arith.andi %167, %168 : i1
    %cst_134 = arith.constant 7.500000e-01 : f32
    %cst_135 = arith.constant 0.000000e+00 : f32
    %170 = arith.select %169, %cst_134, %cst_135 : f32
    %cst_136 = arith.constant 2.500000e-01 : f32
    %cst_137 = arith.constant 0.000000e+00 : f32
    %171 = arith.select %169, %cst_136, %cst_137 : f32
    %c0_i32_138 = arith.constant 0 : i32
    %c7_i32_139 = arith.constant 7 : i32
    %172 = arith.maxsi %c0_i32_138, %165 : i32
    %173 = arith.minsi %c7_i32_139, %172 : i32
    %c0_i32_140 = arith.constant 0 : i32
    %c7_i32_141 = arith.constant 7 : i32
    %174 = arith.maxsi %c0_i32_140, %166 : i32
    %175 = arith.minsi %c7_i32_141, %174 : i32
    %c0_142 = arith.constant 0 : index
    %176 = arith.index_cast %173 : i32 to index
    %c0_143 = arith.constant 0 : index
    %c0_144 = arith.constant 0 : index
    %177 = vector.load %arg2[%c0_142, %176, %c0_143, %c0_144] : memref<1x8x8x32xf32, #tpu.memory_space<vmem>>, vector<1x1x8x32xf32>
    %178 = vector.shape_cast %177 : vector<1x1x8x32xf32> to vector<8x32xf32>
    %179 = vector.broadcast %170 : f32 to vector<8x32xf32>
    %180 = arith.mulf %179, %178 : vector<8x32xf32>
    %c0_145 = arith.constant 0 : index
    %181 = arith.index_cast %175 : i32 to index
    %c0_146 = arith.constant 0 : index
    %c0_147 = arith.constant 0 : index
    %182 = vector.load %arg2[%c0_145, %181, %c0_146, %c0_147] : memref<1x8x8x32xf32, #tpu.memory_space<vmem>>, vector<1x1x8x32xf32>
    %183 = vector.shape_cast %182 : vector<1x1x8x32xf32> to vector<8x32xf32>
    %184 = vector.broadcast %171 : f32 to vector<8x32xf32>
    %185 = arith.mulf %184, %183 : vector<8x32xf32>
    %186 = arith.addf %180, %185 : vector<8x32xf32>
    %cst_148 = arith.constant dense<0.000000e+00> : vector<8x72xf32>
    %187 = tpu.matmul %186, %2, %cst_148 {dimension_numbers = #tpu.dot_dimension_numbers<[1], [0], [0], [1], [0, 0, 1, 1], [], []>} : vector<8x32xf32>, vector<32x72xf32>, vector<8x72xf32> -> vector<8x72xf32>
    %cst_149 = arith.constant dense<0.000000e+00> : vector<18x72xf32>
    %188 = tpu.matmul %1, %187, %cst_149 {dimension_numbers = #tpu.dot_dimension_numbers<[1], [0], [0], [1], [0, 0, 1, 1], [], []>} : vector<18x8xf32>, vector<8x72xf32>, vector<18x72xf32> -> vector<18x72xf32>
    %c6 = arith.constant 6 : index
    %c0_150 = arith.constant 0 : index
    %c0_151 = arith.constant 0 : index
    %189 = vector.load %arg8[%c6, %c0_150, %c0_151] : memref<10x18x72xf32, #tpu.memory_space<vmem>>, vector<1x18x72xf32>
    %190 = vector.shape_cast %189 : vector<1x18x72xf32> to vector<18x72xf32>
    %191 = vector.shape_cast %188 : vector<18x72xf32> to vector<1x18x72xf32>
    tpu.vector_store %arg8[%c6, %c0_150, %c0_151], %191 {strides = array<i32>} : memref<10x18x72xf32, #tpu.memory_space<vmem>>, vector<1x18x72xf32>,
    %c3_i32 = arith.constant 3 : i32
    %192 = arith.addi %0, %c3_i32 : i32
    %c1_i32_152 = arith.constant 1 : i32
    %193 = arith.subi %192, %c1_i32_152 : i32
    %c0_i32_153 = arith.constant 0 : i32
    %194 = arith.cmpi sge, %192, %c0_i32_153 : i32
    %c7_i32_154 = arith.constant 7 : i32
    %195 = arith.cmpi sle, %192, %c7_i32_154 : i32
    %196 = arith.andi %194, %195 : i1
    %cst_155 = arith.constant 2.500000e-01 : f32
    %cst_156 = arith.constant 0.000000e+00 : f32
    %197 = arith.select %196, %cst_155, %cst_156 : f32
    %cst_157 = arith.constant 7.500000e-01 : f32
    %cst_158 = arith.constant 0.000000e+00 : f32
    %198 = arith.select %196, %cst_157, %cst_158 : f32
    %c0_i32_159 = arith.constant 0 : i32
    %c7_i32_160 = arith.constant 7 : i32
    %199 = arith.maxsi %c0_i32_159, %193 : i32
    %200 = arith.minsi %c7_i32_160, %199 : i32
    %c0_i32_161 = arith.constant 0 : i32
    %c7_i32_162 = arith.constant 7 : i32
    %201 = arith.maxsi %c0_i32_161, %192 : i32
    %202 = arith.minsi %c7_i32_162, %201 : i32
    %c0_163 = arith.constant 0 : index
    %203 = arith.index_cast %200 : i32 to index
    %c0_164 = arith.constant 0 : index
    %c0_165 = arith.constant 0 : index
    %204 = vector.load %arg2[%c0_163, %203, %c0_164, %c0_165] : memref<1x8x8x32xf32, #tpu.memory_space<vmem>>, vector<1x1x8x32xf32>
    %205 = vector.shape_cast %204 : vector<1x1x8x32xf32> to vector<8x32xf32>
    %206 = vector.broadcast %197 : f32 to vector<8x32xf32>
    %207 = arith.mulf %206, %205 : vector<8x32xf32>
    %c0_166 = arith.constant 0 : index
    %208 = arith.index_cast %202 : i32 to index
    %c0_167 = arith.constant 0 : index
    %c0_168 = arith.constant 0 : index
    %209 = vector.load %arg2[%c0_166, %208, %c0_167, %c0_168] : memref<1x8x8x32xf32, #tpu.memory_space<vmem>>, vector<1x1x8x32xf32>
    %210 = vector.shape_cast %209 : vector<1x1x8x32xf32> to vector<8x32xf32>
    %211 = vector.broadcast %198 : f32 to vector<8x32xf32>
    %212 = arith.mulf %211, %210 : vector<8x32xf32>
    %213 = arith.addf %207, %212 : vector<8x32xf32>
    %cst_169 = arith.constant dense<0.000000e+00> : vector<8x72xf32>
    %214 = tpu.matmul %213, %2, %cst_169 {dimension_numbers = #tpu.dot_dimension_numbers<[1], [0], [0], [1], [0, 0, 1, 1], [], []>} : vector<8x32xf32>, vector<32x72xf32>, vector<8x72xf32> -> vector<8x72xf32>
    %cst_170 = arith.constant dense<0.000000e+00> : vector<18x72xf32>
    %215 = tpu.matmul %1, %214, %cst_170 {dimension_numbers = #tpu.dot_dimension_numbers<[1], [0], [0], [1], [0, 0, 1, 1], [], []>} : vector<18x8xf32>, vector<8x72xf32>, vector<18x72xf32> -> vector<18x72xf32>
    %c7 = arith.constant 7 : index
    %c0_171 = arith.constant 0 : index
    %c0_172 = arith.constant 0 : index
    %216 = vector.load %arg8[%c7, %c0_171, %c0_172] : memref<10x18x72xf32, #tpu.memory_space<vmem>>, vector<1x18x72xf32>
    %217 = vector.shape_cast %216 : vector<1x18x72xf32> to vector<18x72xf32>
    %218 = vector.shape_cast %215 : vector<18x72xf32> to vector<1x18x72xf32>
    tpu.vector_store %arg8[%c7, %c0_171, %c0_172], %218 {strides = array<i32>} : memref<10x18x72xf32, #tpu.memory_space<vmem>>, vector<1x18x72xf32>,
    %c3_i32_173 = arith.constant 3 : i32
    %219 = arith.addi %0, %c3_i32_173 : i32
    %c1_i32_174 = arith.constant 1 : i32
    %220 = arith.addi %219, %c1_i32_174 : i32
    %c0_i32_175 = arith.constant 0 : i32
    %221 = arith.cmpi sge, %219, %c0_i32_175 : i32
    %c7_i32_176 = arith.constant 7 : i32
    %222 = arith.cmpi sle, %219, %c7_i32_176 : i32
    %223 = arith.andi %221, %222 : i1
    %cst_177 = arith.constant 7.500000e-01 : f32
    %cst_178 = arith.constant 0.000000e+00 : f32
    %224 = arith.select %223, %cst_177, %cst_178 : f32
    %cst_179 = arith.constant 2.500000e-01 : f32
    %cst_180 = arith.constant 0.000000e+00 : f32
    %225 = arith.select %223, %cst_179, %cst_180 : f32
    %c0_i32_181 = arith.constant 0 : i32
    %c7_i32_182 = arith.constant 7 : i32
    %226 = arith.maxsi %c0_i32_181, %219 : i32
    %227 = arith.minsi %c7_i32_182, %226 : i32
    %c0_i32_183 = arith.constant 0 : i32
    %c7_i32_184 = arith.constant 7 : i32
    %228 = arith.maxsi %c0_i32_183, %220 : i32
    %229 = arith.minsi %c7_i32_184, %228 : i32
    %c0_185 = arith.constant 0 : index
    %230 = arith.index_cast %227 : i32 to index
    %c0_186 = arith.constant 0 : index
    %c0_187 = arith.constant 0 : index
    %231 = vector.load %arg2[%c0_185, %230, %c0_186, %c0_187] : memref<1x8x8x32xf32, #tpu.memory_space<vmem>>, vector<1x1x8x32xf32>
    %232 = vector.shape_cast %231 : vector<1x1x8x32xf32> to vector<8x32xf32>
    %233 = vector.broadcast %224 : f32 to vector<8x32xf32>
    %234 = arith.mulf %233, %232 : vector<8x32xf32>
    %c0_188 = arith.constant 0 : index
    %235 = arith.index_cast %229 : i32 to index
    %c0_189 = arith.constant 0 : index
    %c0_190 = arith.constant 0 : index
    %236 = vector.load %arg2[%c0_188, %235, %c0_189, %c0_190] : memref<1x8x8x32xf32, #tpu.memory_space<vmem>>, vector<1x1x8x32xf32>
    %237 = vector.shape_cast %236 : vector<1x1x8x32xf32> to vector<8x32xf32>
    %238 = vector.broadcast %225 : f32 to vector<8x32xf32>
    %239 = arith.mulf %238, %237 : vector<8x32xf32>
    %240 = arith.addf %234, %239 : vector<8x32xf32>
    %cst_191 = arith.constant dense<0.000000e+00> : vector<8x72xf32>
    %241 = tpu.matmul %240, %2, %cst_191 {dimension_numbers = #tpu.dot_dimension_numbers<[1], [0], [0], [1], [0, 0, 1, 1], [], []>} : vector<8x32xf32>, vector<32x72xf32>, vector<8x72xf32> -> vector<8x72xf32>
    %cst_192 = arith.constant dense<0.000000e+00> : vector<18x72xf32>
    %242 = tpu.matmul %1, %241, %cst_192 {dimension_numbers = #tpu.dot_dimension_numbers<[1], [0], [0], [1], [0, 0, 1, 1], [], []>} : vector<18x8xf32>, vector<8x72xf32>, vector<18x72xf32> -> vector<18x72xf32>
    %c8 = arith.constant 8 : index
    %c0_193 = arith.constant 0 : index
    %c0_194 = arith.constant 0 : index
    %243 = vector.load %arg8[%c8, %c0_193, %c0_194] : memref<10x18x72xf32, #tpu.memory_space<vmem>>, vector<1x18x72xf32>
    %244 = vector.shape_cast %243 : vector<1x18x72xf32> to vector<18x72xf32>
    %245 = vector.shape_cast %242 : vector<18x72xf32> to vector<1x18x72xf32>
    tpu.vector_store %arg8[%c8, %c0_193, %c0_194], %245 {strides = array<i32>} : memref<10x18x72xf32, #tpu.memory_space<vmem>>, vector<1x18x72xf32>,
    %c4_i32_195 = arith.constant 4 : i32
    %246 = arith.addi %0, %c4_i32_195 : i32
    %c1_i32_196 = arith.constant 1 : i32
    %247 = arith.subi %246, %c1_i32_196 : i32
    %c0_i32_197 = arith.constant 0 : i32
    %248 = arith.cmpi sge, %246, %c0_i32_197 : i32
    %c7_i32_198 = arith.constant 7 : i32
    %249 = arith.cmpi sle, %246, %c7_i32_198 : i32
    %250 = arith.andi %248, %249 : i1
    %cst_199 = arith.constant 2.500000e-01 : f32
    %cst_200 = arith.constant 0.000000e+00 : f32
    %251 = arith.select %250, %cst_199, %cst_200 : f32
    %cst_201 = arith.constant 7.500000e-01 : f32
    %cst_202 = arith.constant 0.000000e+00 : f32
    %252 = arith.select %250, %cst_201, %cst_202 : f32
    %c0_i32_203 = arith.constant 0 : i32
    %c7_i32_204 = arith.constant 7 : i32
    %253 = arith.maxsi %c0_i32_203, %247 : i32
    %254 = arith.minsi %c7_i32_204, %253 : i32
    %c0_i32_205 = arith.constant 0 : i32
    %c7_i32_206 = arith.constant 7 : i32
    %255 = arith.maxsi %c0_i32_205, %246 : i32
    %256 = arith.minsi %c7_i32_206, %255 : i32
    %c0_207 = arith.constant 0 : index
    %257 = arith.index_cast %254 : i32 to index
    %c0_208 = arith.constant 0 : index
    %c0_209 = arith.constant 0 : index
    %258 = vector.load %arg2[%c0_207, %257, %c0_208, %c0_209] : memref<1x8x8x32xf32, #tpu.memory_space<vmem>>, vector<1x1x8x32xf32>
    %259 = vector.shape_cast %258 : vector<1x1x8x32xf32> to vector<8x32xf32>
    %260 = vector.broadcast %251 : f32 to vector<8x32xf32>
    %261 = arith.mulf %260, %259 : vector<8x32xf32>
    %c0_210 = arith.constant 0 : index
    %262 = arith.index_cast %256 : i32 to index
    %c0_211 = arith.constant 0 : index
    %c0_212 = arith.constant 0 : index
    %263 = vector.load %arg2[%c0_210, %262, %c0_211, %c0_212] : memref<1x8x8x32xf32, #tpu.memory_space<vmem>>, vector<1x1x8x32xf32>
    %264 = vector.shape_cast %263 : vector<1x1x8x32xf32> to vector<8x32xf32>
    %265 = vector.broadcast %252 : f32 to vector<8x32xf32>
    %266 = arith.mulf %265, %264 : vector<8x32xf32>
    %267 = arith.addf %261, %266 : vector<8x32xf32>
    %cst_213 = arith.constant dense<0.000000e+00> : vector<8x72xf32>
    %268 = tpu.matmul %267, %2, %cst_213 {dimension_numbers = #tpu.dot_dimension_numbers<[1], [0], [0], [1], [0, 0, 1, 1], [], []>} : vector<8x32xf32>, vector<32x72xf32>, vector<8x72xf32> -> vector<8x72xf32>
    %cst_214 = arith.constant dense<0.000000e+00> : vector<18x72xf32>
    %269 = tpu.matmul %1, %268, %cst_214 {dimension_numbers = #tpu.dot_dimension_numbers<[1], [0], [0], [1], [0, 0, 1, 1], [], []>} : vector<18x8xf32>, vector<8x72xf32>, vector<18x72xf32> -> vector<18x72xf32>
    %c9 = arith.constant 9 : index
    %c0_215 = arith.constant 0 : index
    %c0_216 = arith.constant 0 : index
    %270 = vector.load %arg8[%c9, %c0_215, %c0_216] : memref<10x18x72xf32, #tpu.memory_space<vmem>>, vector<1x18x72xf32>
    %271 = vector.shape_cast %270 : vector<1x18x72xf32> to vector<18x72xf32>
    %272 = vector.shape_cast %269 : vector<18x72xf32> to vector<1x18x72xf32>
    tpu.vector_store %arg8[%c9, %c0_215, %c0_216], %272 {strides = array<i32>} : memref<10x18x72xf32, #tpu.memory_space<vmem>>, vector<1x18x72xf32>,
    %c0_217 = arith.constant 0 : index
    %c0_218 = arith.constant 0 : index
    %273 = vector.load %arg6[%c0_217, %c0_218] : memref<1x128xf32, #tpu.memory_space<vmem>>, vector<1x128xf32>
    %274 = vector.shape_cast %273 : vector<1x128xf32> to vector<1x128xf32>
    %275 = vector.broadcast %274 : vector<1x128xf32> to vector<128x128xf32>
    %c0_219 = arith.constant 0 : index
    %c0_220 = arith.constant 0 : index
    %c0_221 = arith.constant 0 : index
    %276 = vector.load %arg8[%c0_219, %c0_220, %c0_221] : memref<10x18x72xf32, #tpu.memory_space<vmem>>, vector<10x16x72xf32>
    %277 = vector.shape_cast %276 : vector<10x16x72xf32> to vector<160x72xf32>
    %c0_222 = arith.constant 0 : index
    %c0_223 = arith.constant 0 : index
    %c0_224 = arith.constant 0 : index
    %c0_225 = arith.constant 0 : index
    %278 = vector.load %arg5[%c0_222, %c0_223, %c0_224, %c0_225] : memref<3x3x72x128xf32, #tpu.memory_space<vmem>>, vector<1x1x72x128xf32>
    %279 = vector.shape_cast %278 : vector<1x1x72x128xf32> to vector<72x128xf32>
    %cst_226 = arith.constant dense<0.000000e+00> : vector<160x128xf32>
    %280 = tpu.matmul %277, %279, %cst_226 {dimension_numbers = #tpu.dot_dimension_numbers<[1], [0], [0], [1], [0, 0, 1, 1], [], []>} : vector<160x72xf32>, vector<72x128xf32>, vector<160x128xf32> -> vector<160x128xf32>
    %281 = vector.extract_strided_slice %280 {offsets = [0, 0], sizes = [128, 128], strides = [1, 1]} : vector<160x128xf32> to vector<128x128xf32>
    %282 = arith.addf %275, %281 : vector<128x128xf32>
    %c1_227 = arith.constant 1 : index
    %c0_228 = arith.constant 0 : index
    %c0_229 = arith.constant 0 : index
    %c0_230 = arith.constant 0 : index
    %283 = vector.load %arg5[%c1_227, %c0_228, %c0_229, %c0_230] : memref<3x3x72x128xf32, #tpu.memory_space<vmem>>, vector<1x1x72x128xf32>
    %284 = vector.shape_cast %283 : vector<1x1x72x128xf32> to vector<72x128xf32>
    %cst_231 = arith.constant dense<0.000000e+00> : vector<160x128xf32>
    %285 = tpu.matmul %277, %284, %cst_231 {dimension_numbers = #tpu.dot_dimension_numbers<[1], [0], [0], [1], [0, 0, 1, 1], [], []>} : vector<160x72xf32>, vector<72x128xf32>, vector<160x128xf32> -> vector<160x128xf32>
    %286 = vector.extract_strided_slice %285 {offsets = [16, 0], sizes = [128, 128], strides = [1, 1]} : vector<160x128xf32> to vector<128x128xf32>
    %287 = arith.addf %282, %286 : vector<128x128xf32>
    %c2_232 = arith.constant 2 : index
    %c0_233 = arith.constant 0 : index
    %c0_234 = arith.constant 0 : index
    %c0_235 = arith.constant 0 : index
    %288 = vector.load %arg5[%c2_232, %c0_233, %c0_234, %c0_235] : memref<3x3x72x128xf32, #tpu.memory_space<vmem>>, vector<1x1x72x128xf32>
    %289 = vector.shape_cast %288 : vector<1x1x72x128xf32> to vector<72x128xf32>
    %cst_236 = arith.constant dense<0.000000e+00> : vector<160x128xf32>
    %290 = tpu.matmul %277, %289, %cst_236 {dimension_numbers = #tpu.dot_dimension_numbers<[1], [0], [0], [1], [0, 0, 1, 1], [], []>} : vector<160x72xf32>, vector<72x128xf32>, vector<160x128xf32> -> vector<160x128xf32>
    %291 = vector.extract_strided_slice %290 {offsets = [32, 0], sizes = [128, 128], strides = [1, 1]} : vector<160x128xf32> to vector<128x128xf32>
    %292 = arith.addf %287, %291 : vector<128x128xf32>
    %c0_237 = arith.constant 0 : index
    %c1_238 = arith.constant 1 : index
    %c0_239 = arith.constant 0 : index
    %293 = vector.load %arg8[%c0_237, %c1_238, %c0_239] : memref<10x18x72xf32, #tpu.memory_space<vmem>>, vector<10x16x72xf32>
    %294 = vector.shape_cast %293 : vector<10x16x72xf32> to vector<160x72xf32>
    %c0_240 = arith.constant 0 : index
    %c1_241 = arith.constant 1 : index
    %c0_242 = arith.constant 0 : index
    %c0_243 = arith.constant 0 : index
    %295 = vector.load %arg5[%c0_240, %c1_241, %c0_242, %c0_243] : memref<3x3x72x128xf32, #tpu.memory_space<vmem>>, vector<1x1x72x128xf32>
    %296 = vector.shape_cast %295 : vector<1x1x72x128xf32> to vector<72x128xf32>
    %cst_244 = arith.constant dense<0.000000e+00> : vector<160x128xf32>
    %297 = tpu.matmul %294, %296, %cst_244 {dimension_numbers = #tpu.dot_dimension_numbers<[1], [0], [0], [1], [0, 0, 1, 1], [], []>} : vector<160x72xf32>, vector<72x128xf32>, vector<160x128xf32> -> vector<160x128xf32>
    %298 = vector.extract_strided_slice %297 {offsets = [0, 0], sizes = [128, 128], strides = [1, 1]} : vector<160x128xf32> to vector<128x128xf32>
    %299 = arith.addf %292, %298 : vector<128x128xf32>
    %c1_245 = arith.constant 1 : index
    %c1_246 = arith.constant 1 : index
    %c0_247 = arith.constant 0 : index
    %c0_248 = arith.constant 0 : index
    %300 = vector.load %arg5[%c1_245, %c1_246, %c0_247, %c0_248] : memref<3x3x72x128xf32, #tpu.memory_space<vmem>>, vector<1x1x72x128xf32>
    %301 = vector.shape_cast %300 : vector<1x1x72x128xf32> to vector<72x128xf32>
    %cst_249 = arith.constant dense<0.000000e+00> : vector<160x128xf32>
    %302 = tpu.matmul %294, %301, %cst_249 {dimension_numbers = #tpu.dot_dimension_numbers<[1], [0], [0], [1], [0, 0, 1, 1], [], []>} : vector<160x72xf32>, vector<72x128xf32>, vector<160x128xf32> -> vector<160x128xf32>
    %303 = vector.extract_strided_slice %302 {offsets = [16, 0], sizes = [128, 128], strides = [1, 1]} : vector<160x128xf32> to vector<128x128xf32>
    %304 = arith.addf %299, %303 : vector<128x128xf32>
    %c2_250 = arith.constant 2 : index
    %c1_251 = arith.constant 1 : index
    %c0_252 = arith.constant 0 : index
    %c0_253 = arith.constant 0 : index
    %305 = vector.load %arg5[%c2_250, %c1_251, %c0_252, %c0_253] : memref<3x3x72x128xf32, #tpu.memory_space<vmem>>, vector<1x1x72x128xf32>
    %306 = vector.shape_cast %305 : vector<1x1x72x128xf32> to vector<72x128xf32>
    %cst_254 = arith.constant dense<0.000000e+00> : vector<160x128xf32>
    %307 = tpu.matmul %294, %306, %cst_254 {dimension_numbers = #tpu.dot_dimension_numbers<[1], [0], [0], [1], [0, 0, 1, 1], [], []>} : vector<160x72xf32>, vector<72x128xf32>, vector<160x128xf32> -> vector<160x128xf32>
    %308 = vector.extract_strided_slice %307 {offsets = [32, 0], sizes = [128, 128], strides = [1, 1]} : vector<160x128xf32> to vector<128x128xf32>
    %309 = arith.addf %304, %308 : vector<128x128xf32>
    %c0_255 = arith.constant 0 : index
    %c2_256 = arith.constant 2 : index
    %c0_257 = arith.constant 0 : index
    %310 = vector.load %arg8[%c0_255, %c2_256, %c0_257] : memref<10x18x72xf32, #tpu.memory_space<vmem>>, vector<10x16x72xf32>
    %311 = vector.shape_cast %310 : vector<10x16x72xf32> to vector<160x72xf32>
    %c0_258 = arith.constant 0 : index
    %c2_259 = arith.constant 2 : index
    %c0_260 = arith.constant 0 : index
    %c0_261 = arith.constant 0 : index
    %312 = vector.load %arg5[%c0_258, %c2_259, %c0_260, %c0_261] : memref<3x3x72x128xf32, #tpu.memory_space<vmem>>, vector<1x1x72x128xf32>
    %313 = vector.shape_cast %312 : vector<1x1x72x128xf32> to vector<72x128xf32>
    %cst_262 = arith.constant dense<0.000000e+00> : vector<160x128xf32>
    %314 = tpu.matmul %311, %313, %cst_262 {dimension_numbers = #tpu.dot_dimension_numbers<[1], [0], [0], [1], [0, 0, 1, 1], [], []>} : vector<160x72xf32>, vector<72x128xf32>, vector<160x128xf32> -> vector<160x128xf32>
    %315 = vector.extract_strided_slice %314 {offsets = [0, 0], sizes = [128, 128], strides = [1, 1]} : vector<160x128xf32> to vector<128x128xf32>
    %316 = arith.addf %309, %315 : vector<128x128xf32>
    %c1_263 = arith.constant 1 : index
    %c2_264 = arith.constant 2 : index
    %c0_265 = arith.constant 0 : index
    %c0_266 = arith.constant 0 : index
    %317 = vector.load %arg5[%c1_263, %c2_264, %c0_265, %c0_266] : memref<3x3x72x128xf32, #tpu.memory_space<vmem>>, vector<1x1x72x128xf32>
    %318 = vector.shape_cast %317 : vector<1x1x72x128xf32> to vector<72x128xf32>
    %cst_267 = arith.constant dense<0.000000e+00> : vector<160x128xf32>
    %319 = tpu.matmul %311, %318, %cst_267 {dimension_numbers = #tpu.dot_dimension_numbers<[1], [0], [0], [1], [0, 0, 1, 1], [], []>} : vector<160x72xf32>, vector<72x128xf32>, vector<160x128xf32> -> vector<160x128xf32>
    %320 = vector.extract_strided_slice %319 {offsets = [16, 0], sizes = [128, 128], strides = [1, 1]} : vector<160x128xf32> to vector<128x128xf32>
    %321 = arith.addf %316, %320 : vector<128x128xf32>
    %c2_268 = arith.constant 2 : index
    %c2_269 = arith.constant 2 : index
    %c0_270 = arith.constant 0 : index
    %c0_271 = arith.constant 0 : index
    %322 = vector.load %arg5[%c2_268, %c2_269, %c0_270, %c0_271] : memref<3x3x72x128xf32, #tpu.memory_space<vmem>>, vector<1x1x72x128xf32>
    %323 = vector.shape_cast %322 : vector<1x1x72x128xf32> to vector<72x128xf32>
    %cst_272 = arith.constant dense<0.000000e+00> : vector<160x128xf32>
    %324 = tpu.matmul %311, %323, %cst_272 {dimension_numbers = #tpu.dot_dimension_numbers<[1], [0], [0], [1], [0, 0, 1, 1], [], []>} : vector<160x72xf32>, vector<72x128xf32>, vector<160x128xf32> -> vector<160x128xf32>
    %325 = vector.extract_strided_slice %324 {offsets = [32, 0], sizes = [128, 128], strides = [1, 1]} : vector<160x128xf32> to vector<128x128xf32>
    %326 = arith.addf %321, %325 : vector<128x128xf32>
    %cst_273 = arith.constant 0.000000e+00 : f32
    %327 = vector.broadcast %cst_273 : f32 to vector<128x128xf32>
    %328 = arith.maximumf %326, %327 : vector<128x128xf32>
    %c0_274 = arith.constant 0 : index
    %c0_275 = arith.constant 0 : index
    %c0_276 = arith.constant 0 : index
    %329 = vector.load %arg7[%c0_274, %c0_275, %c0_276] : memref<1x128x128xf32, #tpu.memory_space<vmem>>, vector<1x128x128xf32>
    %330 = vector.shape_cast %329 : vector<1x128x128xf32> to vector<128x128xf32>
    %331 = vector.shape_cast %328 : vector<128x128xf32> to vector<1x128x128xf32>
    tpu.vector_store %arg7[%c0_274, %c0_275, %c0_276], %331 {strides = array<i32>} : memref<1x128x128xf32, #tpu.memory_space<vmem>>, vector<1x128x128xf32>,
    return
  }
  func.func @transform_0(%arg0: i32, %arg1: i32) -> (i32, i32, i32, i32) {
    %c0_i32 = arith.constant 0 : i32
    %c0_i32_0 = arith.constant 0 : i32
    %c0_i32_1 = arith.constant 0 : i32
    %c0_i32_2 = arith.constant 0 : i32
    return %arg0, %c0_i32, %c0_i32_0, %c0_i32_1 : i32, i32, i32, i32
  }
  func.func @transform_1(%arg0: i32, %arg1: i32) -> (i32, i32) {
    %c0_i32 = arith.constant 0 : i32
    %c0_i32_0 = arith.constant 0 : i32
    %c0_i32_1 = arith.constant 0 : i32
    return %c0_i32, %c0_i32_0 : i32, i32
  }
  func.func @transform_2(%arg0: i32, %arg1: i32) -> (i32, i32) {
    %c0_i32 = arith.constant 0 : i32
    %c0_i32_0 = arith.constant 0 : i32
    %c0_i32_1 = arith.constant 0 : i32
    return %c0_i32, %c0_i32_0 : i32, i32
  }
  func.func @transform_3(%arg0: i32, %arg1: i32) -> (i32, i32, i32, i32) {
    %c0_i32 = arith.constant 0 : i32
    %c0_i32_0 = arith.constant 0 : i32
    %c0_i32_1 = arith.constant 0 : i32
    %c0_i32_2 = arith.constant 0 : i32
    %c0_i32_3 = arith.constant 0 : i32
    return %c0_i32, %c0_i32_0, %c0_i32_1, %c0_i32_2 : i32, i32, i32, i32
  }
  func.func @transform_4(%arg0: i32, %arg1: i32) -> (i32, i32) {
    %c0_i32 = arith.constant 0 : i32
    %c0_i32_0 = arith.constant 0 : i32
    %c0_i32_1 = arith.constant 0 : i32
    return %c0_i32, %c0_i32_0 : i32, i32
  }
  func.func @transform_5(%arg0: i32, %arg1: i32) -> (i32, i32, i32) {
    %c0_i32 = arith.constant 0 : i32
    %c0_i32_0 = arith.constant 0 : i32
    return %arg0, %arg1, %c0_i32 : i32, i32, i32
  }
}

</mosaic_0001>

<llo_original>
// kernel: tpu_custom_call.1
$region0: #{tpu_custom_call.1}
  #allocation0 [shape = 'u32[]', space=smem, size = 0x4, offset = 0x4, fixed_abs, tag = 'smem constant byte address 0x4 - core index']
  #allocation1 [shape = 'u32[144,128]{1,0:T(1,128)}', space=vmem, size = 0x12000, scoped, tag = 'internal scratch']
  #allocation2 [shape = 'f32[10,18,72]{2,1,0:T(8,128)}', space=vmem, size = 0x1e000, scoped, tag = 'scratch operand']
  %s0 = inlined_call_operand.hbm [shape: f32[2,8,8,32], index: 0, kind: input, shape index: {}]
  %s1 = inlined_call_operand.vmem [shape: f32[18,8], index: 1, kind: input, shape index: {}]
  %s2 = inlined_call_operand.vmem [shape: f32[32,72], index: 2, kind: input, shape index: {}]
  %s3 = inlined_call_operand.hbm [shape: f32[3,3,72,128], index: 3, kind: input, shape index: {}]
  %s4 = inlined_call_operand.vmem [shape: f32[1,128], index: 4, kind: input, shape index: {}]
  %s5 = inlined_call_operand.hbm [shape: f32[2,256,128], index: 5, kind: output, shape index: {}]
  %s6 = sld [smem:[#allocation0]]
  $region61: #{tpu_custom_call.1} parent=0
    _
  %s8 = ssub.s32 1, %s6
  %s9 = scalar_select 0, %s8, %s6
  $region1: #{tpu_custom_call.1} parent=0
    #allocation3 [shape = 'u8[65536]{0}', space=vmem, size = 0x10000, scoped, tag = 'input window, operand 0']
    #allocation4 [shape = 's32[2]{0}', space=sflag, size = 0x8, scoped, tag = 'scoped memory for tpu_custom_call.1']
    #allocation5 [shape = 's32[2]{0}', space=sflag, size = 0x8, scoped, tag = 'scoped memory for tpu_custom_call.1']
    #allocation6 [shape = 'u8[331776]{0}', space=vmem, size = 0x51000, scoped, tag = 'input window, operand 3, single buffered']
    #allocation7 [shape = 's32[1]{0}', space=sflag, size = 0x4, scoped, tag = 'scoped memory for tpu_custom_call.1']
    #allocation8 [shape = 'u8[131072]{0}', space=vmem, size = 0x20000, scoped, tag = 'output window, operand 0']
    %10 = vsyncpa [#allocation4], 0
    %s11 = scalar_lea.sflag [#allocation4], 1
    %12 = vsyncpa %s11, 0
    %13 = vsyncpa [#allocation7], 0
    %14 = vsyncpa [#allocation5], 0
    %s15 = scalar_lea.sflag [#allocation5], 1
    %16 = vsyncpa %s15, 0
    loop: start=0, step=1, limit=6
    $region2: #{tpu_custom_call.1} parent=1 // loop_pre_header
      _
    $region3: #{tpu_custom_call.1} parent=1 // loop_header
      %s18 = sphi 0, %s22
      %p19 = scmp.ge.s32.totalorder %s18, 6
      %s25 = sphi 0, %s37
      %s26 = sphi 0, %s33
      %s27 = sphi 0, %s25
      %s28 = sphi 0, %s26
      %s29 = sphi 0, %s27
      %s30 = sphi 0, %s28
      %s40 = sphi 0, %s42
      %s43 = sphi 0, %s40
      %s44 = sphi 0, %s43
      %s60 = sphi 0, %s44
      %s64 = sphi 0, %s64
      %s66 = sphi 0, %s64
      %s67 = sphi 0, %s66
      %s81 = sphi 0, %s67
      %s85 = sphi 0, %s85
      %s87 = sphi 0, %s85
      %s88 = sphi 0, %s87
      %s102 = sphi 0, %s88
      %s106 = sphi 0, %s106
      %s108 = sphi 0, %s106
      %s109 = sphi 0, %s108
      %s123 = sphi 0, %s109
      %s127 = sphi 0, %s127
      %s129 = sphi 0, %s127
      %s130 = sphi 0, %s129
      %s144 = sphi 0, %s130
      %s152 = sphi 0, %s154
      %s155 = sphi 0, %s152
      %s156 = sphi 0, %s155
      %s172 = sphi 0, %s156
    $region4: #{tpu_custom_call.1} parent=1 // loop_header_branch
      %21 = sbr.rel (%p19) target = $region8
    $region5: #{tpu_custom_call.1} parent=1 // loop_body
      %s23 = ssub.s32 %s18, 1
      %s24 = ssub.s32 %s18, 2
      %s31 = sadd.s32 1, %s26
      %p32 = scmp.ge.s32.totalorder %s31, 2
      %s33 = scalar_select %p32, 0, %s31
      %s34 = sadd.s32 1, %s25
      %s35 = scalar_select %p32, %s34, %s25
      %p36 = scmp.ge.s32.totalorder %s35, 2
      %s37 = scalar_select %p36, 0, %s35
      %s38 = ssub.s32 %s25, %s37
      %p39 = scmp.eq.s32.totalorder %s38, 0
      %s41 = sadd.s32 %s40, 1
      %s42 = scalar_select %p39, %s40, %s41
      %p45 = pneg %p39
      %p46 = scmp.eq.s32.totalorder %s18, 3
      %p47 = por %p45, %p46
      %p48 = scmp.ne.s32.totalorder %s40, %s43
      %p49 = scmp.eq.s32.totalorder %s18, 0
      %p50 = por %p48, %p49
      %p51 = scmp.ne.s32.totalorder %s40, %s43
      %p52 = scmp.eq.s32.totalorder %s23, 3
      %p53 = por %p51, %p52
      %p54 = scmp.ne.s32.totalorder %s43, %s44
      %p55 = scmp.eq.s32.totalorder %s23, 0
      %p56 = por %p54, %p55
      %p57 = scmp.ne.s32.totalorder %s43, %s44
      %p58 = scmp.eq.s32.totalorder %s24, 3
      %p59 = por %p57, %p58
      %p61 = scmp.ne.s32.totalorder %s44, %s60
      %p62 = scmp.eq.s32.totalorder %s24, 0
      %p63 = por %p61, %p62
      %s65 = sadd.s32 %s64, 1
      %p68 = scmp.eq.s32.totalorder %s18, 3
      %p69 = scmp.ne.s32.totalorder %s64, %s66
      %p70 = scmp.eq.s32.totalorder %s18, 0
      %p71 = por %p69, %p70
      %p72 = scmp.ne.s32.totalorder %s64, %s66
      %p73 = scmp.eq.s32.totalorder %s23, 3
      %p74 = por %p72, %p73
      %p75 = scmp.ne.s32.totalorder %s66, %s67
      %p76 = scmp.eq.s32.totalorder %s23, 0
      %p77 = por %p75, %p76
      %p78 = scmp.ne.s32.totalorder %s66, %s67
      %p79 = scmp.eq.s32.totalorder %s24, 3
      %p80 = por %p78, %p79
      %p82 = scmp.ne.s32.totalorder %s67, %s81
      %p83 = scmp.eq.s32.totalorder %s24, 0
      %p84 = por %p82, %p83
      %s86 = sadd.s32 %s85, 1
      %p89 = scmp.eq.s32.totalorder %s18, 3
      %p90 = scmp.ne.s32.totalorder %s85, %s87
      %p91 = scmp.eq.s32.totalorder %s18, 0
      %p92 = por %p90, %p91
      %p93 = scmp.ne.s32.totalorder %s85, %s87
      %p94 = scmp.eq.s32.totalorder %s23, 3
      %p95 = por %p93, %p94
      %p96 = scmp.ne.s32.totalorder %s87, %s88
      %p97 = scmp.eq.s32.totalorder %s23, 0
      %p98 = por %p96, %p97
      %p99 = scmp.ne.s32.totalorder %s87, %s88
      %p100 = scmp.eq.s32.totalorder %s24, 3
      %p101 = por %p99, %p100
      %p103 = scmp.ne.s32.totalorder %s88, %s102
      %p104 = scmp.eq.s32.totalorder %s24, 0
      %p105 = por %p103, %p104
      %s107 = sadd.s32 %s106, 1
      %p110 = scmp.eq.s32.totalorder %s18, 3
      %p111 = scmp.ne.s32.totalorder %s106, %s108
      %p112 = scmp.eq.s32.totalorder %s18, 0
      %p113 = por %p111, %p112
      %p114 = scmp.ne.s32.totalorder %s106, %s108
      %p115 = scmp.eq.s32.totalorder %s23, 3
      %p116 = por %p114, %p115
      %p117 = scmp.ne.s32.totalorder %s108, %s109
      %p118 = scmp.eq.s32.totalorder %s23, 0
      %p119 = por %p117, %p118
      %p120 = scmp.ne.s32.totalorder %s108, %s109
      %p121 = scmp.eq.s32.totalorder %s24, 3
      %p122 = por %p120, %p121
      %p124 = scmp.ne.s32.totalorder %s109, %s123
      %p125 = scmp.eq.s32.totalorder %s24, 0
      %p126 = por %p124, %p125
      %s128 = sadd.s32 %s127, 1
      %p131 = scmp.eq.s32.totalorder %s18, 3
      %p132 = scmp.ne.s32.totalorder %s127, %s129
      %p133 = scmp.eq.s32.totalorder %s18, 0
      %p134 = por %p132, %p133
      %p135 = scmp.ne.s32.totalorder %s127, %s129
      %p136 = scmp.eq.s32.totalorder %s23, 3
      %p137 = por %p135, %p136
      %p138 = scmp.ne.s32.totalorder %s129, %s130
      %p139 = scmp.eq.s32.totalorder %s23, 0
      %p140 = por %p138, %p139
      %p141 = scmp.ne.s32.totalorder %s129, %s130
      %p142 = scmp.eq.s32.totalorder %s24, 3
      %p143 = por %p141, %p142
      %p145 = scmp.ne.s32.totalorder %s130, %s144
      %p146 = scmp.eq.s32.totalorder %s24, 0
      %p147 = por %p145, %p146
      %s148 = ssub.s32 %s25, %s37
      %s149 = ssub.s32 %s26, %s33
      %s150 = sor.u32 %s148, %s149
      %p151 = scmp.eq.s32.totalorder %s150, 0
      %s153 = sadd.s32 %s152, 1
      %s154 = scalar_select %p151, %s152, %s153
      %p157 = pneg %p151
      %p158 = scmp.eq.s32.totalorder %s18, 3
      %p159 = por %p157, %p158
      %p160 = scmp.ne.s32.totalorder %s152, %s155
      %p161 = scmp.eq.s32.totalorder %s18, 0
      %p162 = por %p160, %p161
      %p163 = scmp.ne.s32.totalorder %s152, %s155
      %p164 = scmp.eq.s32.totalorder %s23, 3
      %p165 = por %p163, %p164
      %p166 = scmp.ne.s32.totalorder %s155, %s156
      %p167 = scmp.eq.s32.totalorder %s23, 0
      %p168 = por %p166, %p167
      %p169 = scmp.ne.s32.totalorder %s155, %s156
      %p170 = scmp.eq.s32.totalorder %s24, 3
      %p171 = por %p169, %p170
      %p173 = scmp.ne.s32.totalorder %s156, %s172
      %p174 = scmp.eq.s32.totalorder %s24, 0
      %p175 = por %p173, %p174
      %p176 = scmp.le.s32.totalorder 1, %s18
      %p177 = scmp.lt.s32.totalorder %s18, 5
      %p178 = pnand %p176, %p177
      %p179 = pneg %p178
      // Predicated region
      $region9: #{tpu_custom_call.1} parent=5 // pred_check
        _
      $region10: #{tpu_custom_call.1} parent=5 // pred_check_branch
        %181 = sbr.rel (%p178) target = $region12
      $region11: #{tpu_custom_call.1} parent=5 // pred_region
        %s182 = ssub.s32 %s18, 1
        // Predicated region
        $region13: #{tpu_custom_call.1} parent=11 // pred_check
          %p183 = pneg %p77
        $region14: #{tpu_custom_call.1} parent=11 // pred_check_branch
          %185 = sbr.rel (%p183) target = $region16
        $region15: #{tpu_custom_call.1} parent=11 // pred_region
          _
        $region16: #{tpu_custom_call.1} parent=11 // pred_fallthru
          _
        // Predicated region
        $region17: #{tpu_custom_call.1} parent=11 // pred_check
          %p186 = pneg %p98
        $region18: #{tpu_custom_call.1} parent=11 // pred_check_branch
          %188 = sbr.rel (%p186) target = $region20
        $region19: #{tpu_custom_call.1} parent=11 // pred_region
          _
        $region20: #{tpu_custom_call.1} parent=11 // pred_fallthru
          _
        // Predicated region
        $region21: #{tpu_custom_call.1} parent=11 // pred_check
          %p189 = pneg %p119
        $region22: #{tpu_custom_call.1} parent=11 // pred_check_branch
          %191 = sbr.rel (%p189) target = $region24
        $region23: #{tpu_custom_call.1} parent=11 // pred_region
          %s193 = ssub.s32 10368, 10368
          %194 = vsyncadd [#allocation7], %s193
          %s195 = sshll.u32 [#allocation6], 4
          %s196 = int_to_ptr.vmem [resolvable:$true] %s195
          %201 = dma.hbm_to_vmem [thread:$0]  %s3, 10368, %s196, [#allocation7], 128, 128, 8
        $region24: #{tpu_custom_call.1} parent=11 // pred_fallthru
          _
        // Predicated region
        $region25: #{tpu_custom_call.1} parent=11 // pred_check
          %p202 = pneg %p140
        $region26: #{tpu_custom_call.1} parent=11 // pred_check_branch
          %204 = sbr.rel (%p202) target = $region28
        $region27: #{tpu_custom_call.1} parent=11 // pred_region
          _
        $region28: #{tpu_custom_call.1} parent=11 // pred_fallthru
          _
      $region12: #{tpu_custom_call.1} parent=5 // pred_fallthru
        _
      %p205 = scmp.lt.s32.totalorder %s18, 4
      // Predicated region
      $region29: #{tpu_custom_call.1} parent=5 // pred_check
        %p206 = pneg %p205
      $region30: #{tpu_custom_call.1} parent=5 // pred_check_branch
        %208 = sbr.rel (%p206) target = $region32
      $region31: #{tpu_custom_call.1} parent=5 // pred_region
        // Predicated region
        $region33: #{tpu_custom_call.1} parent=31 // pred_check
          %p209 = pneg %p50
        $region34: #{tpu_custom_call.1} parent=31 // pred_check_branch
          %211 = sbr.rel (%p209) target = $region36
        $region35: #{tpu_custom_call.1} parent=31 // pred_region
          %s212 = sand.u32 %s40, 1
          %s213 = scalar_lea.sflag [#allocation4], %s212
          %s214 = sand.u32 %s40, 1
          %s215 = smul.addr %s214, 64
          %s216 = scalar_lea.vmem [#allocation3], %s215
          %s218 = ssub.s32 1024, 1024
          %219 = vsyncadd %s213, %s218
          %s220 = smul.addr %s25, 8
          %s221 = smul.addr %s220, 128
          %s222 = scalar_lea.hbm %s0, %s221
          %s223 = sshll.u32 %s216, 4
          %s224 = int_to_ptr.vmem [resolvable:$true] %s223
          %229 = dma.hbm_to_vmem [thread:$0]  %s222, 1024, %s224, %s213, 128, 128, 8
        $region36: #{tpu_custom_call.1} parent=31 // pred_fallthru
          _
      $region32: #{tpu_custom_call.1} parent=5 // pred_fallthru
        _
      %p230 = scmp.le.s32.totalorder 1, %s18
      %p231 = scmp.lt.s32.totalorder %s18, 5
      %p232 = pnand %p230, %p231
      %p233 = pneg %p232
      // Predicated region
      $region37: #{tpu_custom_call.1} parent=5 // pred_check
        _
      $region38: #{tpu_custom_call.1} parent=5 // pred_check_branch
        %235 = sbr.rel (%p232) target = $region40
      $region39: #{tpu_custom_call.1} parent=5 // pred_region
        %s236 = ssub.s32 %s18, 1
        %s237 = sand.u32 %s43, 1
        %s238 = scalar_lea.sflag [#allocation4], %s237
        %s239 = sand.u32 %s43, 1
        %s240 = smul.addr %s239, 64
        %s241 = scalar_lea.vmem [#allocation3], %s240
        // Predicated region
        $region41: #{tpu_custom_call.1} parent=39 // pred_check
          %p242 = pneg %p56
        $region42: #{tpu_custom_call.1} parent=39 // pred_check_branch
          %244 = sbr.rel (%p242) target = $region44
        $region43: #{tpu_custom_call.1} parent=39 // pred_region
          %245 = dma.done %s238, 1024
        $region44: #{tpu_custom_call.1} parent=39 // pred_fallthru
          _
        // Predicated region
        $region45: #{tpu_custom_call.1} parent=39 // pred_check
          %p246 = pneg %p119
        $region46: #{tpu_custom_call.1} parent=39 // pred_check_branch
          %248 = sbr.rel (%p246) target = $region48
        $region47: #{tpu_custom_call.1} parent=39 // pred_region
          %249 = dma.done [#allocation7], 10368
        $region48: #{tpu_custom_call.1} parent=39 // pred_fallthru
          _
        %s250 = sand.u32 %s43, 1
        %s251 = scalar_lea.sflag [#allocation4], %s250
        %s252 = sand.u32 %s43, 1
        %s253 = smul.addr %s252, 64
        %s254 = scalar_lea.vmem [#allocation3], %s253
        %p255 = pneg %p56
        %p256 = pneg %p53
        %p257 = pneg %p77
        %p258 = pneg %p74
        %p259 = pneg %p98
        %p260 = pneg %p95
        %p261 = pneg %p119
        %p262 = pneg %p116
        %p263 = pneg %p140
        %p264 = pneg %p137
        %p265 = pneg %p168
        %p266 = pneg %p165
        %s267 = sand.u32 %s155, 1
        %s268 = scalar_lea.sflag [#allocation5], %s267
        %s269 = sand.u32 %s155, 1
        %s270 = smul.addr %s269, 128
        %s271 = scalar_lea.vmem [#allocation8], %s270
        %s272 = smul.u32 16, %s28
        %s273 = smul.u32 %s28, 4
        %v274 = vld [vmem:[%s1] sm:$0xff]
        %v275 = vld [vmem:[%s1 + $0x8] sm:$0xff]
        %v276 = vld [vmem:[%s1 + $0x10] sm:$0x3]
        %v277 = vld [vmem:[%s2] sm:$0xff]
        %v278 = vld [vmem:[%s2 + $0x8] sm:$0xff]
        %v279 = vld [vmem:[%s2 + $0x10] sm:$0xff]
        %v280 = vld [vmem:[%s2 + $0x18] sm:$0xff]
        %s281 = sadd.s32 %s273, 4294967295
        %p282 = scmp.ge.s32.totalorder %s281, 0
        %p283 = scmp.le.s32.totalorder %s281, 7
        %p284 = pnand %p282, %p283
        %p285 = pneg %p284
        %s286 = scalar_select %p285, 0.75, 0.0
        %s287 = scalar_select %p285, 0.25, 0.0
        %p288 = scmp.gt.s32.totalorder %s281, 0
        %s289 = scalar_select %p288, %s281, 0
        %p290 = scmp.lt.s32.totalorder %s289, 7
        %s291 = scalar_select %p290, %s289, 7
        %p292 = scmp.gt.s32.totalorder %s273, 0
        %s293 = scalar_select %p292, %s273, 0
        %p294 = scmp.lt.s32.totalorder %s293, 7
        %s295 = scalar_select %p294, %s293, 7
        %s296 = smul.u32 %s291, 8
        %s297 = scalar_lea.vmem %s241, %s296 [#allocation3]
        %v298 = vld [vmem:[%s297] sm:$0xff]
        %v299 = vstv %s286
        %v300 = vmul.f32 %v299, %v298
        %s301 = smul.u32 %s295, 8
        %s302 = scalar_lea.vmem %s241, %s301 [#allocation3]
        %v303 = vld [vmem:[%s302] sm:$0xff]
        %v304 = vstv %s287
        %v305 = vmul.f32 %v304, %v303
        %v306 = vadd.f32 %v300, %v305
        %vm307 = vcmask 261120
        %v309 = vsel %vm307, %v306, 0
        %311 = vmatprep.subr.mxu0 0.0
        %312 = vmatpush1.msra.mxu0 %v277
        %313 = vmatprep.subr.mxu0 0.0
        %314 = vmatpush1.msra.mxu0 %v278
        %315 = vmatprep.subr.mxu0 0.0
        %316 = vmatpush1.msra.mxu0 %v279
        %317 = vmatprep.subr.mxu0 0.0
        %318 = vmatpush1.msra.mxu0 %v280
        %319 = vmatprep.subr.mxu0 0.0
        %320 = vmatpush1.msra.mxu0 0.0
        %321 = vmatprep.subr.mxu0 0.0
        %322 = vmatpush1.msra.mxu0 0.0
        %323 = vmatprep.subr.mxu0 0.0
        %324 = vmatpush1.msra.mxu0 0.0
        %325 = vmatprep.subr.mxu0 0.0
        %326 = vmatpush1.msra.mxu0 0.0
        %327 = vmatprep.subr.mxu0 0.0
        %328 = vmatpush1.msra.mxu0 0.0
        %329 = vmatprep.subr.mxu0 0.0
        %330 = vmatpush1.msra.mxu0 0.0
        %331 = vmatprep.subr.mxu0 0.0
        %332 = vmatpush1.msra.mxu0 0.0
        %333 = vmatprep.subr.mxu0 0.0
        %334 = vmatpush1.msra.mxu0 0.0
        %335 = vmatprep.subr.mxu0 0.0
        %336 = vmatpush1.msra.mxu0 0.0
        %337 = vmatprep.subr.mxu0 0.0
        %338 = vmatpush1.msra.mxu0 0.0
        %339 = vmatprep.subr.mxu0 0.0
        %340 = vmatpush1.msra.mxu0 0.0
        %341 = vmatprep.subr.mxu0 0.0
        %342 = vmatpush1.msra.mxu0 0.0
        %343 = vmatprep.subr.mxu0 0.0
        %344 = vmatpush1.msra.mxu0 0.0
        %345 = vmatprep.subr.mxu0 0.0
        %346 = vmatpush1.msra.mxu0 0.0
        %347 = vmatprep.subr.mxu0 0.0
        %348 = vmatpush1.msra.mxu0 0.0
        %349 = vmatprep.subr.mxu0 0.0
        %350 = vmatpush1.msra.mxu0 0.0
        %351 = vmatprep.subr.mxu0 0.0
        %352 = vmatpush1.msra.mxu0 0.0
        %353 = vmatprep.subr.mxu0 0.0
        %354 = vmatpush1.msra.mxu0 0.0
        %355 = vmatprep.subr.mxu0 0.0
        %356 = vmatpush1.msra.mxu0 0.0
        %357 = vmatprep.subr.mxu0 0.0
        %358 = vmatpush1.msra.mxu0 0.0
        %359 = vmatprep.subr.mxu0 0.0
        %360 = vmatpush1.msra.mxu0 0.0
        %361 = vmatprep.subr.mxu0 0.0
        %362 = vmatpush1.msra.mxu0 0.0
        %363 = vmatprep.subr.mxu0 0.0
        %364 = vmatpush1.msra.mxu0 0.0
        %365 = vmatprep.subr.mxu0 0.0
        %366 = vmatpush1.msra.mxu0 0.0
        %367 = vmatprep.subr.mxu0 0.0
        %368 = vmatpush1.msra.mxu0 0.0
        %369 = vmatprep.subr.mxu0 0.0
        %370 = vmatpush1.msra.mxu0 0.0
        %371 = vmatprep.subr.mxu0 0.0
        %372 = vmatpush1.msra.mxu0 0.0
        %373 = vmatprep.subr.mxu0 0.0
        %374 = vmatpush1.msra.mxu0 0.0
        %375 = vmatprep.mubr.f32.mxu0 0.0
        %376 = vmatmul.mubr.f32.gmra.mrb[0].mxu0 %v309
        %v377 = vpop.f32.mrb[0].mxu0
        %v378 = vadd.f32 0.0, %v377
        %v379 = vpop.f32.mrb[0].mxu0
        %380 = vdwg.mxu0
        %vm381 = vcmask 64512
        %v383 = vsel %vm381, %v274, 0
        %v386 = vsel %vm381, %v275, 0
        %v389 = vsel %vm381, %v276, 0
        %391 = vmatprep.subr.mxu0 0.0
        %392 = vmatpush1.msra.mxu0 %v378
        %393 = vmatprep.subr.mxu0 0.0
        %394 = vmatpush1.msra.mxu0 0.0
        %395 = vmatprep.subr.mxu0 0.0
        %396 = vmatpush1.msra.mxu0 0.0
        %397 = vmatprep.subr.mxu0 0.0
        %398 = vmatpush1.msra.mxu0 0.0
        %399 = vmatprep.subr.mxu0 0.0
        %400 = vmatpush1.msra.mxu0 0.0
        %401 = vmatprep.subr.mxu0 0.0
        %402 = vmatpush1.msra.mxu0 0.0
        %403 = vmatprep.subr.mxu0 0.0
        %404 = vmatpush1.msra.mxu0 0.0
        %405 = vmatprep.subr.mxu0 0.0
        %406 = vmatpush1.msra.mxu0 0.0
        %407 = vmatprep.subr.mxu0 0.0
        %408 = vmatpush1.msra.mxu0 0.0
        %409 = vmatprep.subr.mxu0 0.0
        %410 = vmatpush1.msra.mxu0 0.0
        %411 = vmatprep.subr.mxu0 0.0
        %412 = vmatpush1.msra.mxu0 0.0
        %413 = vmatprep.subr.mxu0 0.0
        %414 = vmatpush1.msra.mxu0 0.0
        %415 = vmatprep.subr.mxu0 0.0
        %416 = vmatpush1.msra.mxu0 0.0
        %417 = vmatprep.subr.mxu0 0.0
        %418 = vmatpush1.msra.mxu0 0.0
        %419 = vmatprep.subr.mxu0 0.0
        %420 = vmatpush1.msra.mxu0 0.0
        %421 = vmatprep.subr.mxu0 0.0
        %422 = vmatpush1.msra.mxu0 0.0
        %423 = vmatprep.subr.mxu0 0.0
        %424 = vmatpush1.msra.mxu0 0.0
        %425 = vmatprep.subr.mxu0 0.0
        %426 = vmatpush1.msra.mxu0 0.0
        %427 = vmatprep.subr.mxu0 0.0
        %428 = vmatpush1.msra.mxu0 0.0
        %429 = vmatprep.subr.mxu0 0.0
        %430 = vmatpush1.msra.mxu0 0.0
        %431 = vmatprep.subr.mxu0 0.0
        %432 = vmatpush1.msra.mxu0 0.0
        %433 = vmatprep.subr.mxu0 0.0
        %434 = vmatpush1.msra.mxu0 0.0
        %435 = vmatprep.subr.mxu0 0.0
        %436 = vmatpush1.msra.mxu0 0.0
        %437 = vmatprep.subr.mxu0 0.0
        %438 = vmatpush1.msra.mxu0 0.0
        %439 = vmatprep.subr.mxu0 0.0
        %440 = vmatpush1.msra.mxu0 0.0
        %441 = vmatprep.subr.mxu0 0.0
        %442 = vmatpush1.msra.mxu0 0.0
        %443 = vmatprep.subr.mxu0 0.0
        %444 = vmatpush1.msra.mxu0 0.0
        %445 = vmatprep.subr.mxu0 0.0
        %446 = vmatpush1.msra.mxu0 0.0
        %447 = vmatprep.subr.mxu0 0.0
        %448 = vmatpush1.msra.mxu0 0.0
        %449 = vmatprep.subr.mxu0 0.0
        %450 = vmatpush1.msra.mxu0 0.0
        %451 = vmatprep.subr.mxu0 0.0
        %452 = vmatpush1.msra.mxu0 0.0
        %453 = vmatprep.subr.mxu0 0.0
        %454 = vmatpush1.msra.mxu0 0.0
        %455 = vmatprep.mubr.f32.mxu0 0.0
        %456 = vmatmul.mubr.f32.gmra.mrb[0].mxu0 %v383
        %v457 = vpop.f32.mrb[0].mxu0
        %v458 = vadd.f32 0.0, %v457
        %v459 = vpop.f32.mrb[0].mxu0
        %460 = vmatprep.mubr.f32.mxu0 0.0
        %461 = vmatmul.mubr.f32.gmra.mrb[0].mxu0 %v386
        %v462 = vpop.f32.mrb[0].mxu0
        %v463 = vadd.f32 0.0, %v462
        %v464 = vpop.f32.mrb[0].mxu0
        %465 = vmatprep.mubr.f32.mxu0 0.0
        %466 = vmatmul.mubr.f32.gmra.mrb[0].mxu0 %v389
        %v467 = vpop.f32.mrb[0].mxu0
        %v468 = vadd.f32 0.0, %v467
        %v469 = vpop.f32.mrb[0].mxu0
        %470 = vdwg.mxu0
        %vm471 = vcmask 588800
        %472 = vst.msk [vmem:[#allocation2] sm:$0xff] %vm471, %v458
        %473 = vst.msk [vmem:[#allocation2 + $0x8] sm:$0xff] %vm471, %v463
        %vm474 = vcmask 582656
        %475 = vst.msk [vmem:[#allocation2 + $0x10] sm:$0x3] %vm474, %v468
        %p476 = scmp.ge.s32.totalorder %s273, 0
        %p477 = scmp.le.s32.totalorder %s273, 7
        %p478 = pnand %p476, %p477
        %p479 = pneg %p478
        %s480 = scalar_select %p479, 0.25, 0.0
        %s481 = scalar_select %p479, 0.75, 0.0
        %v482 = vld [vmem:[%s297] sm:$0xff]
        %v483 = vstv %s480
        %v484 = vmul.f32 %v483, %v482
        %v485 = vld [vmem:[%s302] sm:$0xff]
        %v486 = vstv %s481
        %v487 = vmul.f32 %v486, %v485
        %v488 = vadd.f32 %v484, %v487
        %v490 = vsel %vm307, %v488, 0
        %492 = vmatprep.subr.mxu0 0.0
        %493 = vmatpush1.msra.mxu0 %v277
        %494 = vmatprep.subr.mxu0 0.0
        %495 = vmatpush1.msra.mxu0 %v278
        %496 = vmatprep.subr.mxu0 0.0
        %497 = vmatpush1.msra.mxu0 %v279
        %498 = vmatprep.subr.mxu0 0.0
        %499 = vmatpush1.msra.mxu0 %v280
        %500 = vmatprep.subr.mxu0 0.0
        %501 = vmatpush1.msra.mxu0 0.0
        %502 = vmatprep.subr.mxu0 0.0
        %503 = vmatpush1.msra.mxu0 0.0
        %504 = vmatprep.subr.mxu0 0.0
        %505 = vmatpush1.msra.mxu0 0.0
        %506 = vmatprep.subr.mxu0 0.0
        %507 = vmatpush1.msra.mxu0 0.0
        %508 = vmatprep.subr.mxu0 0.0
        %509 = vmatpush1.msra.mxu0 0.0
        %510 = vmatprep.subr.mxu0 0.0
        %511 = vmatpush1.msra.mxu0 0.0
        %512 = vmatprep.subr.mxu0 0.0
        %513 = vmatpush1.msra.mxu0 0.0
        %514 = vmatprep.subr.mxu0 0.0
        %515 = vmatpush1.msra.mxu0 0.0
        %516 = vmatprep.subr.mxu0 0.0
        %517 = vmatpush1.msra.mxu0 0.0
        %518 = vmatprep.subr.mxu0 0.0
        %519 = vmatpush1.msra.mxu0 0.0
        %520 = vmatprep.subr.mxu0 0.0
        %521 = vmatpush1.msra.mxu0 0.0
        %522 = vmatprep.subr.mxu0 0.0
        %523 = vmatpush1.msra.mxu0 0.0
        %524 = vmatprep.subr.mxu0 0.0
        %525 = vmatpush1.msra.mxu0 0.0
        %526 = vmatprep.subr.mxu0 0.0
        %527 = vmatpush1.msra.mxu0 0.0
        %528 = vmatprep.subr.mxu0 0.0
        %529 = vmatpush1.msra.mxu0 0.0
        %530 = vmatprep.subr.mxu0 0.0
        %531 = vmatpush1.msra.mxu0 0.0
        %532 = vmatprep.subr.mxu0 0.0
        %533 = vmatpush1.msra.mxu0 0.0
        %534 = vmatprep.subr.mxu0 0.0
        %535 = vmatpush1.msra.mxu0 0.0
        %536 = vmatprep.subr.mxu0 0.0
        %537 = vmatpush1.msra.mxu0 0.0
        %538 = vmatprep.subr.mxu0 0.0
        %539 = vmatpush1.msra.mxu0 0.0
        %540 = vmatprep.subr.mxu0 0.0
        %541 = vmatpush1.msra.mxu0 0.0
        %542 = vmatprep.subr.mxu0 0.0
        %543 = vmatpush1.msra.mxu0 0.0
        %544 = vmatprep.subr.mxu0 0.0
        %545 = vmatpush1.msra.mxu0 0.0
        %546 = vmatprep.subr.mxu0 0.0
        %547 = vmatpush1.msra.mxu0 0.0
        %548 = vmatprep.subr.mxu0 0.0
        %549 = vmatpush1.msra.mxu0 0.0
        %550 = vmatprep.subr.mxu0 0.0
        %551 = vmatpush1.msra.mxu0 0.0
        %552 = vmatprep.subr.mxu0 0.0
        %553 = vmatpush1.msra.mxu0 0.0
        %554 = vmatprep.subr.mxu0 0.0
        %555 = vmatpush1.msra.mxu0 0.0
        %556 = vmatprep.mubr.f32.mxu0 0.0
        %557 = vmatmul.mubr.f32.gmra.mrb[0].mxu0 %v490
        %v558 = vpop.f32.mrb[0].mxu0
        %v559 = vadd.f32 0.0, %v558
        %v560 = vpop.f32.mrb[0].mxu0
        %561 = vdwg.mxu0
        %562 = vmatprep.subr.mxu0 0.0
        %563 = vmatpush1.msra.mxu0 %v559
        %564 = vmatprep.subr.mxu0 0.0
        %565 = vmatpush1.msra.mxu0 0.0
        %566 = vmatprep.subr.mxu0 0.0
        %567 = vmatpush1.msra.mxu0 0.0
        %568 = vmatprep.subr.mxu0 0.0
        %569 = vmatpush1.msra.mxu0 0.0
        %570 = vmatprep.subr.mxu0 0.0
        %571 = vmatpush1.msra.mxu0 0.0
        %572 = vmatprep.subr.mxu0 0.0
        %573 = vmatpush1.msra.mxu0 0.0
        %574 = vmatprep.subr.mxu0 0.0
        %575 = vmatpush1.msra.mxu0 0.0
        %576 = vmatprep.subr.mxu0 0.0
        %577 = vmatpush1.msra.mxu0 0.0
        %578 = vmatprep.subr.mxu0 0.0
        %579 = vmatpush1.msra.mxu0 0.0
        %580 = vmatprep.subr.mxu0 0.0
        %581 = vmatpush1.msra.mxu0 0.0
        %582 = vmatprep.subr.mxu0 0.0
        %583 = vmatpush1.msra.mxu0 0.0
        %584 = vmatprep.subr.mxu0 0.0
        %585 = vmatpush1.msra.mxu0 0.0
        %586 = vmatprep.subr.mxu0 0.0
        %587 = vmatpush1.msra.mxu0 0.0
        %588 = vmatprep.subr.mxu0 0.0
        %589 = vmatpush1.msra.mxu0 0.0
        %590 = vmatprep.subr.mxu0 0.0
        %591 = vmatpush1.msra.mxu0 0.0
        %592 = vmatprep.subr.mxu0 0.0
        %593 = vmatpush1.msra.mxu0 0.0
        %594 = vmatprep.subr.mxu0 0.0
        %595 = vmatpush1.msra.mxu0 0.0
        %596 = vmatprep.subr.mxu0 0.0
        %597 = vmatpush1.msra.mxu0 0.0
        %598 = vmatprep.subr.mxu0 0.0
        %599 = vmatpush1.msra.mxu0 0.0
        %600 = vmatprep.subr.mxu0 0.0
        %601 = vmatpush1.msra.mxu0 0.0
        %602 = vmatprep.subr.mxu0 0.0
        %603 = vmatpush1.msra.mxu0 0.0
        %604 = vmatprep.subr.mxu0 0.0
        %605 = vmatpush1.msra.mxu0 0.0
        %606 = vmatprep.subr.mxu0 0.0
        %607 = vmatpush1.msra.mxu0 0.0
        %608 = vmatprep.subr.mxu0 0.0
        %609 = vmatpush1.msra.mxu0 0.0
        %610 = vmatprep.subr.mxu0 0.0
        %611 = vmatpush1.msra.mxu0 0.0
        %612 = vmatprep.subr.mxu0 0.0
        %613 = vmatpush1.msra.mxu0 0.0
        %614 = vmatprep.subr.mxu0 0.0
        %615 = vmatpush1.msra.mxu0 0.0
        %616 = vmatprep.subr.mxu0 0.0
        %617 = vmatpush1.msra.mxu0 0.0
        %618 = vmatprep.subr.mxu0 0.0
        %619 = vmatpush1.msra.mxu0 0.0
        %620 = vmatprep.subr.mxu0 0.0
        %621 = vmatpush1.msra.mxu0 0.0
        %622 = vmatprep.subr.mxu0 0.0
        %623 = vmatpush1.msra.mxu0 0.0
        %624 = vmatprep.subr.mxu0 0.0
        %625 = vmatpush1.msra.mxu0 0.0
        %626 = vmatprep.mubr.f32.mxu0 0.0
        %627 = vmatmul.mubr.f32.gmra.mrb[0].mxu0 %v383
        %v628 = vpop.f32.mrb[0].mxu0
        %v629 = vadd.f32 0.0, %v628
        %v630 = vpop.f32.mrb[0].mxu0
        %631 = vmatprep.mubr.f32.mxu0 0.0
        %632 = vmatmul.mubr.f32.gmra.mrb[0].mxu0 %v386
        %v633 = vpop.f32.mrb[0].mxu0
        %v634 = vadd.f32 0.0, %v633
        %v635 = vpop.f32.mrb[0].mxu0
        %636 = vmatprep.mubr.f32.mxu0 0.0
        %637 = vmatmul.mubr.f32.gmra.mrb[0].mxu0 %v389
        %v638 = vpop.f32.mrb[0].mxu0
        %v639 = vadd.f32 0.0, %v638
        %v640 = vpop.f32.mrb[0].mxu0
        %641 = vdwg.mxu0
        %s642 = scalar_lea.vmem [#allocation2], 24
        %643 = vst.msk [vmem:[%s642] sm:$0xff] %vm471, %v629
        %644 = vst.msk [vmem:[%s642 + $0x8] sm:$0xff] %vm471, %v634
        %645 = vst.msk [vmem:[%s642 + $0x10] sm:$0x3] %vm474, %v639
        %s646 = sadd.s32 %s273, 1
        %p647 = scmp.gt.s32.totalorder %s646, 0
        %s648 = scalar_select %p647, %s646, 0
        %p649 = scmp.lt.s32.totalorder %s648, 7
        %s650 = scalar_select %p649, %s648, 7
        %v651 = vld [vmem:[%s302] sm:$0xff]
        %v652 = vmul.f32 %v486, %v651
        %s653 = smul.u32 %s650, 8
        %s654 = scalar_lea.vmem %s241, %s653 [#allocation3]
        %v655 = vld [vmem:[%s654] sm:$0xff]
        %v656 = vmul.f32 %v483, %v655
        %v657 = vadd.f32 %v652, %v656
        %v659 = vsel %vm307, %v657, 0
        %661 = vmatprep.subr.mxu0 0.0
        %662 = vmatpush1.msra.mxu0 %v277
        %663 = vmatprep.subr.mxu0 0.0
        %664 = vmatpush1.msra.mxu0 %v278
        %665 = vmatprep.subr.mxu0 0.0
        %666 = vmatpush1.msra.mxu0 %v279
        %667 = vmatprep.subr.mxu0 0.0
        %668 = vmatpush1.msra.mxu0 %v280
        %669 = vmatprep.subr.mxu0 0.0
        %670 = vmatpush1.msra.mxu0 0.0
        %671 = vmatprep.subr.mxu0 0.0
        %672 = vmatpush1.msra.mxu0 0.0
        %673 = vmatprep.subr.mxu0 0.0
        %674 = vmatpush1.msra.mxu0 0.0
        %675 = vmatprep.subr.mxu0 0.0
        %676 = vmatpush1.msra.mxu0 0.0
        %677 = vmatprep.subr.mxu0 0.0
        %678 = vmatpush1.msra.mxu0 0.0
        %679 = vmatprep.subr.mxu0 0.0
        %680 = vmatpush1.msra.mxu0 0.0
        %681 = vmatprep.subr.mxu0 0.0
        %682 = vmatpush1.msra.mxu0 0.0
        %683 = vmatprep.subr.mxu0 0.0
        %684 = vmatpush1.msra.mxu0 0.0
        %685 = vmatprep.subr.mxu0 0.0
        %686 = vmatpush1.msra.mxu0 0.0
        %687 = vmatprep.subr.mxu0 0.0
        %688 = vmatpush1.msra.mxu0 0.0
        %689 = vmatprep.subr.mxu0 0.0
        %690 = vmatpush1.msra.mxu0 0.0
        %691 = vmatprep.subr.mxu0 0.0
        %692 = vmatpush1.msra.mxu0 0.0
        %693 = vmatprep.subr.mxu0 0.0
        %694 = vmatpush1.msra.mxu0 0.0
        %695 = vmatprep.subr.mxu0 0.0
        %696 = vmatpush1.msra.mxu0 0.0
        %697 = vmatprep.subr.mxu0 0.0
        %698 = vmatpush1.msra.mxu0 0.0
        %699 = vmatprep.subr.mxu0 0.0
        %700 = vmatpush1.msra.mxu0 0.0
        %701 = vmatprep.subr.mxu0 0.0
        %702 = vmatpush1.msra.mxu0 0.0
        %703 = vmatprep.subr.mxu0 0.0
        %704 = vmatpush1.msra.mxu0 0.0
        %705 = vmatprep.subr.mxu0 0.0
        %706 = vmatpush1.msra.mxu0 0.0
        %707 = vmatprep.subr.mxu0 0.0
        %708 = vmatpush1.msra.mxu0 0.0
        %709 = vmatprep.subr.mxu0 0.0
        %710 = vmatpush1.msra.mxu0 0.0
        %711 = vmatprep.subr.mxu0 0.0
        %712 = vmatpush1.msra.mxu0 0.0
        %713 = vmatprep.subr.mxu0 0.0
        %714 = vmatpush1.msra.mxu0 0.0
        %715 = vmatprep.subr.mxu0 0.0
        %716 = vmatpush1.msra.mxu0 0.0
        %717 = vmatprep.subr.mxu0 0.0
        %718 = vmatpush1.msra.mxu0 0.0
        %719 = vmatprep.subr.mxu0 0.0
        %720 = vmatpush1.msra.mxu0 0.0
        %721 = vmatprep.subr.mxu0 0.0
        %722 = vmatpush1.msra.mxu0 0.0
        %723 = vmatprep.subr.mxu0 0.0
        %724 = vmatpush1.msra.mxu0 0.0
        %725 = vmatprep.mubr.f32.mxu0 0.0
        %726 = vmatmul.mubr.f32.gmra.mrb[0].mxu0 %v659
        %v727 = vpop.f32.mrb[0].mxu0
        %v728 = vadd.f32 0.0, %v727
        %v729 = vpop.f32.mrb[0].mxu0
        %730 = vdwg.mxu0
        %731 = vmatprep.subr.mxu0 0.0
        %732 = vmatpush1.msra.mxu0 %v728
        %733 = vmatprep.subr.mxu0 0.0
        %734 = vmatpush1.msra.mxu0 0.0
        %735 = vmatprep.subr.mxu0 0.0
        %736 = vmatpush1.msra.mxu0 0.0
        %737 = vmatprep.subr.mxu0 0.0
        %738 = vmatpush1.msra.mxu0 0.0
        %739 = vmatprep.subr.mxu0 0.0
        %740 = vmatpush1.msra.mxu0 0.0
        %741 = vmatprep.subr.mxu0 0.0
        %742 = vmatpush1.msra.mxu0 0.0
        %743 = vmatprep.subr.mxu0 0.0
        %744 = vmatpush1.msra.mxu0 0.0
        %745 = vmatprep.subr.mxu0 0.0
        %746 = vmatpush1.msra.mxu0 0.0
        %747 = vmatprep.subr.mxu0 0.0
        %748 = vmatpush1.msra.mxu0 0.0
        %749 = vmatprep.subr.mxu0 0.0
        %750 = vmatpush1.msra.mxu0 0.0
        %751 = vmatprep.subr.mxu0 0.0
        %752 = vmatpush1.msra.mxu0 0.0
        %753 = vmatprep.subr.mxu0 0.0
        %754 = vmatpush1.msra.mxu0 0.0
        %755 = vmatprep.subr.mxu0 0.0
        %756 = vmatpush1.msra.mxu0 0.0
        %757 = vmatprep.subr.mxu0 0.0
        %758 = vmatpush1.msra.mxu0 0.0
        %759 = vmatprep.subr.mxu0 0.0
        %760 = vmatpush1.msra.mxu0 0.0
        %761 = vmatprep.subr.mxu0 0.0
        %762 = vmatpush1.msra.mxu0 0.0
        %763 = vmatprep.subr.mxu0 0.0
        %764 = vmatpush1.msra.mxu0 0.0
        %765 = vmatprep.subr.mxu0 0.0
        %766 = vmatpush1.msra.mxu0 0.0
        %767 = vmatprep.subr.mxu0 0.0
        %768 = vmatpush1.msra.mxu0 0.0
        %769 = vmatprep.subr.mxu0 0.0
        %770 = vmatpush1.msra.mxu0 0.0
        %771 = vmatprep.subr.mxu0 0.0
        %772 = vmatpush1.msra.mxu0 0.0
        %773 = vmatprep.subr.mxu0 0.0
        %774 = vmatpush1.msra.mxu0 0.0
        %775 = vmatprep.subr.mxu0 0.0
        %776 = vmatpush1.msra.mxu0 0.0
        %777 = vmatprep.subr.mxu0 0.0
        %778 = vmatpush1.msra.mxu0 0.0
        %779 = vmatprep.subr.mxu0 0.0
        %780 = vmatpush1.msra.mxu0 0.0
        %781 = vmatprep.subr.mxu0 0.0
        %782 = vmatpush1.msra.mxu0 0.0
        %783 = vmatprep.subr.mxu0 0.0
        %784 = vmatpush1.msra.mxu0 0.0
        %785 = vmatprep.subr.mxu0 0.0
        %786 = vmatpush1.msra.mxu0 0.0
        %787 = vmatprep.subr.mxu0 0.0
        %788 = vmatpush1.msra.mxu0 0.0
        %789 = vmatprep.subr.mxu0 0.0
        %790 = vmatpush1.msra.mxu0 0.0
        %791 = vmatprep.subr.mxu0 0.0
        %792 = vmatpush1.msra.mxu0 0.0
        %793 = vmatprep.subr.mxu0 0.0
        %794 = vmatpush1.msra.mxu0 0.0
        %795 = vmatprep.mubr.f32.mxu0 0.0
        %796 = vmatmul.mubr.f32.gmra.mrb[0].mxu0 %v383
        %v797 = vpop.f32.mrb[0].mxu0
        %v798 = vadd.f32 0.0, %v797
        %v799 = vpop.f32.mrb[0].mxu0
        %800 = vmatprep.mubr.f32.mxu0 0.0
        %801 = vmatmul.mubr.f32.gmra.mrb[0].mxu0 %v386
        %v802 = vpop.f32.mrb[0].mxu0
        %v803 = vadd.f32 0.0, %v802
        %v804 = vpop.f32.mrb[0].mxu0
        %805 = vmatprep.mubr.f32.mxu0 0.0
        %806 = vmatmul.mubr.f32.gmra.mrb[0].mxu0 %v389
        %v807 = vpop.f32.mrb[0].mxu0
        %v808 = vadd.f32 0.0, %v807
        %v809 = vpop.f32.mrb[0].mxu0
        %810 = vdwg.mxu0
        %s811 = scalar_lea.vmem [#allocation2], 48
        %812 = vst.msk [vmem:[%s811] sm:$0xff] %vm471, %v798
        %813 = vst.msk [vmem:[%s811 + $0x8] sm:$0xff] %vm471, %v803
        %814 = vst.msk [vmem:[%s811 + $0x10] sm:$0x3] %vm474, %v808
        %p815 = scmp.ge.s32.totalorder %s646, 0
        %p816 = scmp.le.s32.totalorder %s646, 7
        %p817 = pnand %p815, %p816
        %p818 = pneg %p817
        %s819 = scalar_select %p818, 0.25, 0.0
        %s820 = scalar_select %p818, 0.75, 0.0
        %v821 = vld [vmem:[%s302] sm:$0xff]
        %v822 = vstv %s819
        %v823 = vmul.f32 %v822, %v821
        %v824 = vld [vmem:[%s654] sm:$0xff]
        %v825 = vstv %s820
        %v826 = vmul.f32 %v825, %v824
        %v827 = vadd.f32 %v823, %v826
        %v829 = vsel %vm307, %v827, 0
        %831 = vmatprep.subr.mxu0 0.0
        %832 = vmatpush1.msra.mxu0 %v277
        %833 = vmatprep.subr.mxu0 0.0
        %834 = vmatpush1.msra.mxu0 %v278
        %835 = vmatprep.subr.mxu0 0.0
        %836 = vmatpush1.msra.mxu0 %v279
        %837 = vmatprep.subr.mxu0 0.0
        %838 = vmatpush1.msra.mxu0 %v280
        %839 = vmatprep.subr.mxu0 0.0
        %840 = vmatpush1.msra.mxu0 0.0
        %841 = vmatprep.subr.mxu0 0.0
        %842 = vmatpush1.msra.mxu0 0.0
        %843 = vmatprep.subr.mxu0 0.0
        %844 = vmatpush1.msra.mxu0 0.0
        %845 = vmatprep.subr.mxu0 0.0
        %846 = vmatpush1.msra.mxu0 0.0
        %847 = vmatprep.subr.mxu0 0.0
        %848 = vmatpush1.msra.mxu0 0.0
        %849 = vmatprep.subr.mxu0 0.0
        %850 = vmatpush1.msra.mxu0 0.0
        %851 = vmatprep.subr.mxu0 0.0
        %852 = vmatpush1.msra.mxu0 0.0
        %853 = vmatprep.subr.mxu0 0.0
        %854 = vmatpush1.msra.mxu0 0.0
        %855 = vmatprep.subr.mxu0 0.0
        %856 = vmatpush1.msra.mxu0 0.0
        %857 = vmatprep.subr.mxu0 0.0
        %858 = vmatpush1.msra.mxu0 0.0
        %859 = vmatprep.subr.mxu0 0.0
        %860 = vmatpush1.msra.mxu0 0.0
        %861 = vmatprep.subr.mxu0 0.0
        %862 = vmatpush1.msra.mxu0 0.0
        %863 = vmatprep.subr.mxu0 0.0
        %864 = vmatpush1.msra.mxu0 0.0
        %865 = vmatprep.subr.mxu0 0.0
        %866 = vmatpush1.msra.mxu0 0.0
        %867 = vmatprep.subr.mxu0 0.0
        %868 = vmatpush1.msra.mxu0 0.0
        %869 = vmatprep.subr.mxu0 0.0
        %870 = vmatpush1.msra.mxu0 0.0
        %871 = vmatprep.subr.mxu0 0.0
        %872 = vmatpush1.msra.mxu0 0.0
        %873 = vmatprep.subr.mxu0 0.0
        %874 = vmatpush1.msra.mxu0 0.0
        %875 = vmatprep.subr.mxu0 0.0
        %876 = vmatpush1.msra.mxu0 0.0
        %877 = vmatprep.subr.mxu0 0.0
        %878 = vmatpush1.msra.mxu0 0.0
        %879 = vmatprep.subr.mxu0 0.0
        %880 = vmatpush1.msra.mxu0 0.0
        %881 = vmatprep.subr.mxu0 0.0
        %882 = vmatpush1.msra.mxu0 0.0
        %883 = vmatprep.subr.mxu0 0.0
        %884 = vmatpush1.msra.mxu0 0.0
        %885 = vmatprep.subr.mxu0 0.0
        %886 = vmatpush1.msra.mxu0 0.0
        %887 = vmatprep.subr.mxu0 0.0
        %888 = vmatpush1.msra.mxu0 0.0
        %889 = vmatprep.subr.mxu0 0.0
        %890 = vmatpush1.msra.mxu0 0.0
        %891 = vmatprep.subr.mxu0 0.0
        %892 = vmatpush1.msra.mxu0 0.0
        %893 = vmatprep.subr.mxu0 0.0
        %894 = vmatpush1.msra.mxu0 0.0
        %895 = vmatprep.mubr.f32.mxu0 0.0
        %896 = vmatmul.mubr.f32.gmra.mrb[0].mxu0 %v829
        %v897 = vpop.f32.mrb[0].mxu0
        %v898 = vadd.f32 0.0, %v897
        %v899 = vpop.f32.mrb[0].mxu0
        %900 = vdwg.mxu0
        %901 = vmatprep.subr.mxu0 0.0
        %902 = vmatpush1.msra.mxu0 %v898
        %903 = vmatprep.subr.mxu0 0.0
        %904 = vmatpush1.msra.mxu0 0.0
        %905 = vmatprep.subr.mxu0 0.0
        %906 = vmatpush1.msra.mxu0 0.0
        %907 = vmatprep.subr.mxu0 0.0
        %908 = vmatpush1.msra.mxu0 0.0
        %909 = vmatprep.subr.mxu0 0.0
        %910 = vmatpush1.msra.mxu0 0.0
        %911 = vmatprep.subr.mxu0 0.0
        %912 = vmatpush1.msra.mxu0 0.0
        %913 = vmatprep.subr.mxu0 0.0
        %914 = vmatpush1.msra.mxu0 0.0
        %915 = vmatprep.subr.mxu0 0.0
        %916 = vmatpush1.msra.mxu0 0.0
        %917 = vmatprep.subr.mxu0 0.0
        %918 = vmatpush1.msra.mxu0 0.0
        %919 = vmatprep.subr.mxu0 0.0
        %920 = vmatpush1.msra.mxu0 0.0
        %921 = vmatprep.subr.mxu0 0.0
        %922 = vmatpush1.msra.mxu0 0.0
        %923 = vmatprep.subr.mxu0 0.0
        %924 = vmatpush1.msra.mxu0 0.0
        %925 = vmatprep.subr.mxu0 0.0
        %926 = vmatpush1.msra.mxu0 0.0
        %927 = vmatprep.subr.mxu0 0.0
        %928 = vmatpush1.msra.mxu0 0.0
        %929 = vmatprep.subr.mxu0 0.0
        %930 = vmatpush1.msra.mxu0 0.0
        %931 = vmatprep.subr.mxu0 0.0
        %932 = vmatpush1.msra.mxu0 0.0
        %933 = vmatprep.subr.mxu0 0.0
        %934 = vmatpush1.msra.mxu0 0.0
        %935 = vmatprep.subr.mxu0 0.0
        %936 = vmatpush1.msra.mxu0 0.0
        %937 = vmatprep.subr.mxu0 0.0
        %938 = vmatpush1.msra.mxu0 0.0
        %939 = vmatprep.subr.mxu0 0.0
        %940 = vmatpush1.msra.mxu0 0.0
        %941 = vmatprep.subr.mxu0 0.0
        %942 = vmatpush1.msra.mxu0 0.0
        %943 = vmatprep.subr.mxu0 0.0
        %944 = vmatpush1.msra.mxu0 0.0
        %945 = vmatprep.subr.mxu0 0.0
        %946 = vmatpush1.msra.mxu0 0.0
        %947 = vmatprep.subr.mxu0 0.0
        %948 = vmatpush1.msra.mxu0 0.0
        %949 = vmatprep.subr.mxu0 0.0
        %950 = vmatpush1.msra.mxu0 0.0
        %951 = vmatprep.subr.mxu0 0.0
        %952 = vmatpush1.msra.mxu0 0.0
        %953 = vmatprep.subr.mxu0 0.0
        %954 = vmatpush1.msra.mxu0 0.0
        %955 = vmatprep.subr.mxu0 0.0
        %956 = vmatpush1.msra.mxu0 0.0
        %957 = vmatprep.subr.mxu0 0.0
        %958 = vmatpush1.msra.mxu0 0.0
        %959 = vmatprep.subr.mxu0 0.0
        %960 = vmatpush1.msra.mxu0 0.0
        %961 = vmatprep.subr.mxu0 0.0
        %962 = vmatpush1.msra.mxu0 0.0
        %963 = vmatprep.subr.mxu0 0.0
        %964 = vmatpush1.msra.mxu0 0.0
        %965 = vmatprep.mubr.f32.mxu0 0.0
        %966 = vmatmul.mubr.f32.gmra.mrb[0].mxu0 %v383
        %v967 = vpop.f32.mrb[0].mxu0
        %v968 = vadd.f32 0.0, %v967
        %v969 = vpop.f32.mrb[0].mxu0
        %970 = vmatprep.mubr.f32.mxu0 0.0
        %971 = vmatmul.mubr.f32.gmra.mrb[0].mxu0 %v386
        %v972 = vpop.f32.mrb[0].mxu0
        %v973 = vadd.f32 0.0, %v972
        %v974 = vpop.f32.mrb[0].mxu0
        %975 = vmatprep.mubr.f32.mxu0 0.0
        %976 = vmatmul.mubr.f32.gmra.mrb[0].mxu0 %v389
        %v977 = vpop.f32.mrb[0].mxu0
        %v978 = vadd.f32 0.0, %v977
        %v979 = vpop.f32.mrb[0].mxu0
        %980 = vdwg.mxu0
        %s981 = scalar_lea.vmem [#allocation2], 72
        %982 = vst.msk [vmem:[%s981] sm:$0xff] %vm471, %v968
        %983 = vst.msk [vmem:[%s981 + $0x8] sm:$0xff] %vm471, %v973
        %984 = vst.msk [vmem:[%s981 + $0x10] sm:$0x3] %vm474, %v978
        %s985 = sadd.s32 %s273, 2
        %p986 = scmp.gt.s32.totalorder %s985, 0
        %s987 = scalar_select %p986, %s985, 0
        %p988 = scmp.lt.s32.totalorder %s987, 7
        %s989 = scalar_select %p988, %s987, 7
        %v990 = vld [vmem:[%s654] sm:$0xff]
        %v991 = vmul.f32 %v825, %v990
        %s992 = smul.u32 %s989, 8
        %s993 = scalar_lea.vmem %s241, %s992 [#allocation3]
        %v994 = vld [vmem:[%s993] sm:$0xff]
        %v995 = vmul.f32 %v822, %v994
        %v996 = vadd.f32 %v991, %v995
        %v998 = vsel %vm307, %v996, 0
        %1000 = vmatprep.subr.mxu0 0.0
        %1001 = vmatpush1.msra.mxu0 %v277
        %1002 = vmatprep.subr.mxu0 0.0
        %1003 = vmatpush1.msra.mxu0 %v278
        %1004 = vmatprep.subr.mxu0 0.0
        %1005 = vmatpush1.msra.mxu0 %v279
        %1006 = vmatprep.subr.mxu0 0.0
        %1007 = vmatpush1.msra.mxu0 %v280
        %1008 = vmatprep.subr.mxu0 0.0
        %1009 = vmatpush1.msra.mxu0 0.0
        %1010 = vmatprep.subr.mxu0 0.0
        %1011 = vmatpush1.msra.mxu0 0.0
        %1012 = vmatprep.subr.mxu0 0.0
        %1013 = vmatpush1.msra.mxu0 0.0
        %1014 = vmatprep.subr.mxu0 0.0
        %1015 = vmatpush1.msra.mxu0 0.0
        %1016 = vmatprep.subr.mxu0 0.0
        %1017 = vmatpush1.msra.mxu0 0.0
        %1018 = vmatprep.subr.mxu0 0.0
        %1019 = vmatpush1.msra.mxu0 0.0
        %1020 = vmatprep.subr.mxu0 0.0
        %1021 = vmatpush1.msra.mxu0 0.0
        %1022 = vmatprep.subr.mxu0 0.0
        %1023 = vmatpush1.msra.mxu0 0.0
        %1024 = vmatprep.subr.mxu0 0.0
        %1025 = vmatpush1.msra.mxu0 0.0
        %1026 = vmatprep.subr.mxu0 0.0
        %1027 = vmatpush1.msra.mxu0 0.0
        %1028 = vmatprep.subr.mxu0 0.0
        %1029 = vmatpush1.msra.mxu0 0.0
        %1030 = vmatprep.subr.mxu0 0.0
        %1031 = vmatpush1.msra.mxu0 0.0
        %1032 = vmatprep.subr.mxu0 0.0
        %1033 = vmatpush1.msra.mxu0 0.0
        %1034 = vmatprep.subr.mxu0 0.0
        %1035 = vmatpush1.msra.mxu0 0.0
        %1036 = vmatprep.subr.mxu0 0.0
        %1037 = vmatpush1.msra.mxu0 0.0
        %1038 = vmatprep.subr.mxu0 0.0
        %1039 = vmatpush1.msra.mxu0 0.0
        %1040 = vmatprep.subr.mxu0 0.0
        %1041 = vmatpush1.msra.mxu0 0.0
        %1042 = vmatprep.subr.mxu0 0.0
        %1043 = vmatpush1.msra.mxu0 0.0
        %1044 = vmatprep.subr.mxu0 0.0
        %1045 = vmatpush1.msra.mxu0 0.0
        %1046 = vmatprep.subr.mxu0 0.0
        %1047 = vmatpush1.msra.mxu0 0.0
        %1048 = vmatprep.subr.mxu0 0.0
        %1049 = vmatpush1.msra.mxu0 0.0
        %1050 = vmatprep.subr.mxu0 0.0
        %1051 = vmatpush1.msra.mxu0 0.0
        %1052 = vmatprep.subr.mxu0 0.0
        %1053 = vmatpush1.msra.mxu0 0.0
        %1054 = vmatprep.subr.mxu0 0.0
        %1055 = vmatpush1.msra.mxu0 0.0
        %1056 = vmatprep.subr.mxu0 0.0
        %1057 = vmatpush1.msra.mxu0 0.0
        %1058 = vmatprep.subr.mxu0 0.0
        %1059 = vmatpush1.msra.mxu0 0.0
        %1060 = vmatprep.subr.mxu0 0.0
        %1061 = vmatpush1.msra.mxu0 0.0
        %1062 = vmatprep.subr.mxu0 0.0
        %1063 = vmatpush1.msra.mxu0 0.0
        %1064 = vmatprep.mubr.f32.mxu0 0.0
        %1065 = vmatmul.mubr.f32.gmra.mrb[0].mxu0 %v998
        %v1066 = vpop.f32.mrb[0].mxu0
        %v1067 = vadd.f32 0.0, %v1066
        %v1068 = vpop.f32.mrb[0].mxu0
        %1069 = vdwg.mxu0
        %1070 = vmatprep.subr.mxu0 0.0
        %1071 = vmatpush1.msra.mxu0 %v1067
        %1072 = vmatprep.subr.mxu0 0.0
        %1073 = vmatpush1.msra.mxu0 0.0
        %1074 = vmatprep.subr.mxu0 0.0
        %1075 = vmatpush1.msra.mxu0 0.0
        %1076 = vmatprep.subr.mxu0 0.0
        %1077 = vmatpush1.msra.mxu0 0.0
        %1078 = vmatprep.subr.mxu0 0.0
        %1079 = vmatpush1.msra.mxu0 0.0
        %1080 = vmatprep.subr.mxu0 0.0
        %1081 = vmatpush1.msra.mxu0 0.0
        %1082 = vmatprep.subr.mxu0 0.0
        %1083 = vmatpush1.msra.mxu0 0.0
        %1084 = vmatprep.subr.mxu0 0.0
        %1085 = vmatpush1.msra.mxu0 0.0
        %1086 = vmatprep.subr.mxu0 0.0
        %1087 = vmatpush1.msra.mxu0 0.0
        %1088 = vmatprep.subr.mxu0 0.0
        %1089 = vmatpush1.msra.mxu0 0.0
        %1090 = vmatprep.subr.mxu0 0.0
        %1091 = vmatpush1.msra.mxu0 0.0
        %1092 = vmatprep.subr.mxu0 0.0
        %1093 = vmatpush1.msra.mxu0 0.0
        %1094 = vmatprep.subr.mxu0 0.0
        %1095 = vmatpush1.msra.mxu0 0.0
        %1096 = vmatprep.subr.mxu0 0.0
        %1097 = vmatpush1.msra.mxu0 0.0
        %1098 = vmatprep.subr.mxu0 0.0
        %1099 = vmatpush1.msra.mxu0 0.0
        %1100 = vmatprep.subr.mxu0 0.0
        %1101 = vmatpush1.msra.mxu0 0.0
        %1102 = vmatprep.subr.mxu0 0.0
        %1103 = vmatpush1.msra.mxu0 0.0
        %1104 = vmatprep.subr.mxu0 0.0
        %1105 = vmatpush1.msra.mxu0 0.0
        %1106 = vmatprep.subr.mxu0 0.0
        %1107 = vmatpush1.msra.mxu0 0.0
        %1108 = vmatprep.subr.mxu0 0.0
        %1109 = vmatpush1.msra.mxu0 0.0
        %1110 = vmatprep.subr.mxu0 0.0
        %1111 = vmatpush1.msra.mxu0 0.0
        %1112 = vmatprep.subr.mxu0 0.0
        %1113 = vmatpush1.msra.mxu0 0.0
        %1114 = vmatprep.subr.mxu0 0.0
        %1115 = vmatpush1.msra.mxu0 0.0
        %1116 = vmatprep.subr.mxu0 0.0
        %1117 = vmatpush1.msra.mxu0 0.0
        %1118 = vmatprep.subr.mxu0 0.0
        %1119 = vmatpush1.msra.mxu0 0.0
        %1120 = vmatprep.subr.mxu0 0.0
        %1121 = vmatpush1.msra.mxu0 0.0
        %1122 = vmatprep.subr.mxu0 0.0
        %1123 = vmatpush1.msra.mxu0 0.0
        %1124 = vmatprep.subr.mxu0 0.0
        %1125 = vmatpush1.msra.mxu0 0.0
        %1126 = vmatprep.subr.mxu0 0.0
        %1127 = vmatpush1.msra.mxu0 0.0
        %1128 = vmatprep.subr.mxu0 0.0
        %1129 = vmatpush1.msra.mxu0 0.0
        %1130 = vmatprep.subr.mxu0 0.0
        %1131 = vmatpush1.msra.mxu0 0.0
        %1132 = vmatprep.subr.mxu0 0.0
        %1133 = vmatpush1.msra.mxu0 0.0
        %1134 = vmatprep.mubr.f32.mxu0 0.0
        %1135 = vmatmul.mubr.f32.gmra.mrb[0].mxu0 %v383
        %v1136 = vpop.f32.mrb[0].mxu0
        %v1137 = vadd.f32 0.0, %v1136
        %v1138 = vpop.f32.mrb[0].mxu0
        %1139 = vmatprep.mubr.f32.mxu0 0.0
        %1140 = vmatmul.mubr.f32.gmra.mrb[0].mxu0 %v386
        %v1141 = vpop.f32.mrb[0].mxu0
        %v1142 = vadd.f32 0.0, %v1141
        %v1143 = vpop.f32.mrb[0].mxu0
        %1144 = vmatprep.mubr.f32.mxu0 0.0
        %1145 = vmatmul.mubr.f32.gmra.mrb[0].mxu0 %v389
        %v1146 = vpop.f32.mrb[0].mxu0
        %v1147 = vadd.f32 0.0, %v1146
        %v1148 = vpop.f32.mrb[0].mxu0
        %1149 = vdwg.mxu0
        %s1150 = scalar_lea.vmem [#allocation2], 96
        %1151 = vst.msk [vmem:[%s1150] sm:$0xff] %vm471, %v1137
        %1152 = vst.msk [vmem:[%s1150 + $0x8] sm:$0xff] %vm471, %v1142
        %1153 = vst.msk [vmem:[%s1150 + $0x10] sm:$0x3] %vm474, %v1147
        %p1154 = scmp.ge.s32.totalorder %s985, 0
        %p1155 = scmp.le.s32.totalorder %s985, 7
        %p1156 = pnand %p1154, %p1155
        %p1157 = pneg %p1156
        %s1158 = scalar_select %p1157, 0.25, 0.0
        %s1159 = scalar_select %p1157, 0.75, 0.0
        %v1160 = vld [vmem:[%s654] sm:$0xff]
        %v1161 = vstv %s1158
        %v1162 = vmul.f32 %v1161, %v1160
        %v1163 = vld [vmem:[%s993] sm:$0xff]
        %v1164 = vstv %s1159
        %v1165 = vmul.f32 %v1164, %v1163
        %v1166 = vadd.f32 %v1162, %v1165
        %v1168 = vsel %vm307, %v1166, 0
        %1170 = vmatprep.subr.mxu0 0.0
        %1171 = vmatpush1.msra.mxu0 %v277
        %1172 = vmatprep.subr.mxu0 0.0
        %1173 = vmatpush1.msra.mxu0 %v278
        %1174 = vmatprep.subr.mxu0 0.0
        %1175 = vmatpush1.msra.mxu0 %v279
        %1176 = vmatprep.subr.mxu0 0.0
        %1177 = vmatpush1.msra.mxu0 %v280
        %1178 = vmatprep.subr.mxu0 0.0
        %1179 = vmatpush1.msra.mxu0 0.0
        %1180 = vmatprep.subr.mxu0 0.0
        %1181 = vmatpush1.msra.mxu0 0.0
        %1182 = vmatprep.subr.mxu0 0.0
        %1183 = vmatpush1.msra.mxu0 0.0
        %1184 = vmatprep.subr.mxu0 0.0
        %1185 = vmatpush1.msra.mxu0 0.0
        %1186 = vmatprep.subr.mxu0 0.0
        %1187 = vmatpush1.msra.mxu0 0.0
        %1188 = vmatprep.subr.mxu0 0.0
        %1189 = vmatpush1.msra.mxu0 0.0
        %1190 = vmatprep.subr.mxu0 0.0
        %1191 = vmatpush1.msra.mxu0 0.0
        %1192 = vmatprep.subr.mxu0 0.0
        %1193 = vmatpush1.msra.mxu0 0.0
        %1194 = vmatprep.subr.mxu0 0.0
        %1195 = vmatpush1.msra.mxu0 0.0
        %1196 = vmatprep.subr.mxu0 0.0
        %1197 = vmatpush1.msra.mxu0 0.0
        %1198 = vmatprep.subr.mxu0 0.0
        %1199 = vmatpush1.msra.mxu0 0.0
        %1200 = vmatprep.subr.mxu0 0.0
        %1201 = vmatpush1.msra.mxu0 0.0
        %1202 = vmatprep.subr.mxu0 0.0
        %1203 = vmatpush1.msra.mxu0 0.0
        %1204 = vmatprep.subr.mxu0 0.0
        %1205 = vmatpush1.msra.mxu0 0.0
        %1206 = vmatprep.subr.mxu0 0.0
        %1207 = vmatpush1.msra.mxu0 0.0
        %1208 = vmatprep.subr.mxu0 0.0
        %1209 = vmatpush1.msra.mxu0 0.0
        %1210 = vmatprep.subr.mxu0 0.0
        %1211 = vmatpush1.msra.mxu0 0.0
        %1212 = vmatprep.subr.mxu0 0.0
        %1213 = vmatpush1.msra.mxu0 0.0
        %1214 = vmatprep.subr.mxu0 0.0
        %1215 = vmatpush1.msra.mxu0 0.0
        %1216 = vmatprep.subr.mxu0 0.0
        %1217 = vmatpush1.msra.mxu0 0.0
        %1218 = vmatprep.subr.mxu0 0.0
        %1219 = vmatpush1.msra.mxu0 0.0
        %1220 = vmatprep.subr.mxu0 0.0
        %1221 = vmatpush1.msra.mxu0 0.0
        %1222 = vmatprep.subr.mxu0 0.0
        %1223 = vmatpush1.msra.mxu0 0.0
        %1224 = vmatprep.subr.mxu0 0.0
        %1225 = vmatpush1.msra.mxu0 0.0
        %1226 = vmatprep.subr.mxu0 0.0
        %1227 = vmatpush1.msra.mxu0 0.0
        %1228 = vmatprep.subr.mxu0 0.0
        %1229 = vmatpush1.msra.mxu0 0.0
        %1230 = vmatprep.subr.mxu0 0.0
        %1231 = vmatpush1.msra.mxu0 0.0
        %1232 = vmatprep.subr.mxu0 0.0
        %1233 = vmatpush1.msra.mxu0 0.0
        %1234 = vmatprep.mubr.f32.mxu0 0.0
        %1235 = vmatmul.mubr.f32.gmra.mrb[0].mxu0 %v1168
        %v1236 = vpop.f32.mrb[0].mxu0
        %v1237 = vadd.f32 0.0, %v1236
        %v1238 = vpop.f32.mrb[0].mxu0
        %1239 = vdwg.mxu0
        %1240 = vmatprep.subr.mxu0 0.0
        %1241 = vmatpush1.msra.mxu0 %v1237
        %1242 = vmatprep.subr.mxu0 0.0
        %1243 = vmatpush1.msra.mxu0 0.0
        %1244 = vmatprep.subr.mxu0 0.0
        %1245 = vmatpush1.msra.mxu0 0.0
        %1246 = vmatprep.subr.mxu0 0.0
        %1247 = vmatpush1.msra.mxu0 0.0
        %1248 = vmatprep.subr.mxu0 0.0
        %1249 = vmatpush1.msra.mxu0 0.0
        %1250 = vmatprep.subr.mxu0 0.0
        %1251 = vmatpush1.msra.mxu0 0.0
        %1252 = vmatprep.subr.mxu0 0.0
        %1253 = vmatpush1.msra.mxu0 0.0
        %1254 = vmatprep.subr.mxu0 0.0
        %1255 = vmatpush1.msra.mxu0 0.0
        %1256 = vmatprep.subr.mxu0 0.0
        %1257 = vmatpush1.msra.mxu0 0.0
        %1258 = vmatprep.subr.mxu0 0.0
        %1259 = vmatpush1.msra.mxu0 0.0
        %1260 = vmatprep.subr.mxu0 0.0
        %1261 = vmatpush1.msra.mxu0 0.0
        %1262 = vmatprep.subr.mxu0 0.0
        %1263 = vmatpush1.msra.mxu0 0.0
        %1264 = vmatprep.subr.mxu0 0.0
        %1265 = vmatpush1.msra.mxu0 0.0
        %1266 = vmatprep.subr.mxu0 0.0
        %1267 = vmatpush1.msra.mxu0 0.0
        %1268 = vmatprep.subr.mxu0 0.0
        %1269 = vmatpush1.msra.mxu0 0.0
        %1270 = vmatprep.subr.mxu0 0.0
        %1271 = vmatpush1.msra.mxu0 0.0
        %1272 = vmatprep.subr.mxu0 0.0
        %1273 = vmatpush1.msra.mxu0 0.0
        %1274 = vmatprep.subr.mxu0 0.0
        %1275 = vmatpush1.msra.mxu0 0.0
        %1276 = vmatprep.subr.mxu0 0.0
        %1277 = vmatpush1.msra.mxu0 0.0
        %1278 = vmatprep.subr.mxu0 0.0
        %1279 = vmatpush1.msra.mxu0 0.0
        %1280 = vmatprep.subr.mxu0 0.0
        %1281 = vmatpush1.msra.mxu0 0.0
        %1282 = vmatprep.subr.mxu0 0.0
        %1283 = vmatpush1.msra.mxu0 0.0
        %1284 = vmatprep.subr.mxu0 0.0
        %1285 = vmatpush1.msra.mxu0 0.0
        %1286 = vmatprep.subr.mxu0 0.0
        %1287 = vmatpush1.msra.mxu0 0.0
        %1288 = vmatprep.subr.mxu0 0.0
        %1289 = vmatpush1.msra.mxu0 0.0
        %1290 = vmatprep.subr.mxu0 0.0
        %1291 = vmatpush1.msra.mxu0 0.0
        %1292 = vmatprep.subr.mxu0 0.0
        %1293 = vmatpush1.msra.mxu0 0.0
        %1294 = vmatprep.subr.mxu0 0.0
        %1295 = vmatpush1.msra.mxu0 0.0
        %1296 = vmatprep.subr.mxu0 0.0
        %1297 = vmatpush1.msra.mxu0 0.0
        %1298 = vmatprep.subr.mxu0 0.0
        %1299 = vmatpush1.msra.mxu0 0.0
        %1300 = vmatprep.subr.mxu0 0.0
        %1301 = vmatpush1.msra.mxu0 0.0
        %1302 = vmatprep.subr.mxu0 0.0
        %1303 = vmatpush1.msra.mxu0 0.0
        %1304 = vmatprep.mubr.f32.mxu0 0.0
        %1305 = vmatmul.mubr.f32.gmra.mrb[0].mxu0 %v383
        %v1306 = vpop.f32.mrb[0].mxu0
        %v1307 = vadd.f32 0.0, %v1306
        %v1308 = vpop.f32.mrb[0].mxu0
        %1309 = vmatprep.mubr.f32.mxu0 0.0
        %1310 = vmatmul.mubr.f32.gmra.mrb[0].mxu0 %v386
        %v1311 = vpop.f32.mrb[0].mxu0
        %v1312 = vadd.f32 0.0, %v1311
        %v1313 = vpop.f32.mrb[0].mxu0
        %1314 = vmatprep.mubr.f32.mxu0 0.0
        %1315 = vmatmul.mubr.f32.gmra.mrb[0].mxu0 %v389
        %v1316 = vpop.f32.mrb[0].mxu0
        %v1317 = vadd.f32 0.0, %v1316
        %v1318 = vpop.f32.mrb[0].mxu0
        %1319 = vdwg.mxu0
        %s1320 = scalar_lea.vmem [#allocation2], 120
        %1321 = vst.msk [vmem:[%s1320] sm:$0xff] %vm471, %v1307
        %1322 = vst.msk [vmem:[%s1320 + $0x8] sm:$0xff] %vm471, %v1312
        %1323 = vst.msk [vmem:[%s1320 + $0x10] sm:$0x3] %vm474, %v1317
        %s1324 = sadd.s32 %s273, 3
        %p1325 = scmp.gt.s32.totalorder %s1324, 0
        %s1326 = scalar_select %p1325, %s1324, 0
        %p1327 = scmp.lt.s32.totalorder %s1326, 7
        %s1328 = scalar_select %p1327, %s1326, 7
        %v1329 = vld [vmem:[%s993] sm:$0xff]
        %v1330 = vmul.f32 %v1164, %v1329
        %s1331 = smul.u32 %s1328, 8
        %s1332 = scalar_lea.vmem %s241, %s1331 [#allocation3]
        %v1333 = vld [vmem:[%s1332] sm:$0xff]
        %v1334 = vmul.f32 %v1161, %v1333
        %v1335 = vadd.f32 %v1330, %v1334
        %v1337 = vsel %vm307, %v1335, 0
        %1339 = vmatprep.subr.mxu0 0.0
        %1340 = vmatpush1.msra.mxu0 %v277
        %1341 = vmatprep.subr.mxu0 0.0
        %1342 = vmatpush1.msra.mxu0 %v278
        %1343 = vmatprep.subr.mxu0 0.0
        %1344 = vmatpush1.msra.mxu0 %v279
        %1345 = vmatprep.subr.mxu0 0.0
        %1346 = vmatpush1.msra.mxu0 %v280
        %1347 = vmatprep.subr.mxu0 0.0
        %1348 = vmatpush1.msra.mxu0 0.0
        %1349 = vmatprep.subr.mxu0 0.0
        %1350 = vmatpush1.msra.mxu0 0.0
        %1351 = vmatprep.subr.mxu0 0.0
        %1352 = vmatpush1.msra.mxu0 0.0
        %1353 = vmatprep.subr.mxu0 0.0
        %1354 = vmatpush1.msra.mxu0 0.0
        %1355 = vmatprep.subr.mxu0 0.0
        %1356 = vmatpush1.msra.mxu0 0.0
        %1357 = vmatprep.subr.mxu0 0.0
        %1358 = vmatpush1.msra.mxu0 0.0
        %1359 = vmatprep.subr.mxu0 0.0
        %1360 = vmatpush1.msra.mxu0 0.0
        %1361 = vmatprep.subr.mxu0 0.0
        %1362 = vmatpush1.msra.mxu0 0.0
        %1363 = vmatprep.subr.mxu0 0.0
        %1364 = vmatpush1.msra.mxu0 0.0
        %1365 = vmatprep.subr.mxu0 0.0
        %1366 = vmatpush1.msra.mxu0 0.0
        %1367 = vmatprep.subr.mxu0 0.0
        %1368 = vmatpush1.msra.mxu0 0.0
        %1369 = vmatprep.subr.mxu0 0.0
        %1370 = vmatpush1.msra.mxu0 0.0
        %1371 = vmatprep.subr.mxu0 0.0
        %1372 = vmatpush1.msra.mxu0 0.0
        %1373 = vmatprep.subr.mxu0 0.0
        %1374 = vmatpush1.msra.mxu0 0.0
        %1375 = vmatprep.subr.mxu0 0.0
        %1376 = vmatpush1.msra.mxu0 0.0
        %1377 = vmatprep.subr.mxu0 0.0
        %1378 = vmatpush1.msra.mxu0 0.0
        %1379 = vmatprep.subr.mxu0 0.0
        %1380 = vmatpush1.msra.mxu0 0.0
        %1381 = vmatprep.subr.mxu0 0.0
        %1382 = vmatpush1.msra.mxu0 0.0
        %1383 = vmatprep.subr.mxu0 0.0
        %1384 = vmatpush1.msra.mxu0 0.0
        %1385 = vmatprep.subr.mxu0 0.0
        %1386 = vmatpush1.msra.mxu0 0.0
        %1387 = vmatprep.subr.mxu0 0.0
        %1388 = vmatpush1.msra.mxu0 0.0
        %1389 = vmatprep.subr.mxu0 0.0
        %1390 = vmatpush1.msra.mxu0 0.0
        %1391 = vmatprep.subr.mxu0 0.0
        %1392 = vmatpush1.msra.mxu0 0.0
        %1393 = vmatprep.subr.mxu0 0.0
        %1394 = vmatpush1.msra.mxu0 0.0
        %1395 = vmatprep.subr.mxu0 0.0
        %1396 = vmatpush1.msra.mxu0 0.0
        %1397 = vmatprep.subr.mxu0 0.0
        %1398 = vmatpush1.msra.mxu0 0.0
        %1399 = vmatprep.subr.mxu0 0.0
        %1400 = vmatpush1.msra.mxu0 0.0
        %1401 = vmatprep.subr.mxu0 0.0
        %1402 = vmatpush1.msra.mxu0 0.0
        %1403 = vmatprep.mubr.f32.mxu0 0.0
        %1404 = vmatmul.mubr.f32.gmra.mrb[0].mxu0 %v1337
        %v1405 = vpop.f32.mrb[0].mxu0
        %v1406 = vadd.f32 0.0, %v1405
        %v1407 = vpop.f32.mrb[0].mxu0
        %1408 = vdwg.mxu0
        %1409 = vmatprep.subr.mxu0 0.0
        %1410 = vmatpush1.msra.mxu0 %v1406
        %1411 = vmatprep.subr.mxu0 0.0
        %1412 = vmatpush1.msra.mxu0 0.0
        %1413 = vmatprep.subr.mxu0 0.0
        %1414 = vmatpush1.msra.mxu0 0.0
        %1415 = vmatprep.subr.mxu0 0.0
        %1416 = vmatpush1.msra.mxu0 0.0
        %1417 = vmatprep.subr.mxu0 0.0
        %1418 = vmatpush1.msra.mxu0 0.0
        %1419 = vmatprep.subr.mxu0 0.0
        %1420 = vmatpush1.msra.mxu0 0.0
        %1421 = vmatprep.subr.mxu0 0.0
        %1422 = vmatpush1.msra.mxu0 0.0
        %1423 = vmatprep.subr.mxu0 0.0
        %1424 = vmatpush1.msra.mxu0 0.0
        %1425 = vmatprep.subr.mxu0 0.0
        %1426 = vmatpush1.msra.mxu0 0.0
        %1427 = vmatprep.subr.mxu0 0.0
        %1428 = vmatpush1.msra.mxu0 0.0
        %1429 = vmatprep.subr.mxu0 0.0
        %1430 = vmatpush1.msra.mxu0 0.0
        %1431 = vmatprep.subr.mxu0 0.0
        %1432 = vmatpush1.msra.mxu0 0.0
        %1433 = vmatprep.subr.mxu0 0.0
        %1434 = vmatpush1.msra.mxu0 0.0
        %1435 = vmatprep.subr.mxu0 0.0
        %1436 = vmatpush1.msra.mxu0 0.0
        %1437 = vmatprep.subr.mxu0 0.0
        %1438 = vmatpush1.msra.mxu0 0.0
        %1439 = vmatprep.subr.mxu0 0.0
        %1440 = vmatpush1.msra.mxu0 0.0
        %1441 = vmatprep.subr.mxu0 0.0
        %1442 = vmatpush1.msra.mxu0 0.0
        %1443 = vmatprep.subr.mxu0 0.0
        %1444 = vmatpush1.msra.mxu0 0.0
        %1445 = vmatprep.subr.mxu0 0.0
        %1446 = vmatpush1.msra.mxu0 0.0
        %1447 = vmatprep.subr.mxu0 0.0
        %1448 = vmatpush1.msra.mxu0 0.0
        %1449 = vmatprep.subr.mxu0 0.0
        %1450 = vmatpush1.msra.mxu0 0.0
        %1451 = vmatprep.subr.mxu0 0.0
        %1452 = vmatpush1.msra.mxu0 0.0
        %1453 = vmatprep.subr.mxu0 0.0
        %1454 = vmatpush1.msra.mxu0 0.0
        %1455 = vmatprep.subr.mxu0 0.0
        %1456 = vmatpush1.msra.mxu0 0.0
        %1457 = vmatprep.subr.mxu0 0.0
        %1458 = vmatpush1.msra.mxu0 0.0
        %1459 = vmatprep.subr.mxu0 0.0
        %1460 = vmatpush1.msra.mxu0 0.0
        %1461 = vmatprep.subr.mxu0 0.0
        %1462 = vmatpush1.msra.mxu0 0.0
        %1463 = vmatprep.subr.mxu0 0.0
        %1464 = vmatpush1.msra.mxu0 0.0
        %1465 = vmatprep.subr.mxu0 0.0
        %1466 = vmatpush1.msra.mxu0 0.0
        %1467 = vmatprep.subr.mxu0 0.0
        %1468 = vmatpush1.msra.mxu0 0.0
        %1469 = vmatprep.subr.mxu0 0.0
        %1470 = vmatpush1.msra.mxu0 0.0
        %1471 = vmatprep.subr.mxu0 0.0
        %1472 = vmatpush1.msra.mxu0 0.0
        %1473 = vmatprep.mubr.f32.mxu0 0.0
        %1474 = vmatmul.mubr.f32.gmra.mrb[0].mxu0 %v383
        %v1475 = vpop.f32.mrb[0].mxu0
        %v1476 = vadd.f32 0.0, %v1475
        %v1477 = vpop.f32.mrb[0].mxu0
        %1478 = vmatprep.mubr.f32.mxu0 0.0
        %1479 = vmatmul.mubr.f32.gmra.mrb[0].mxu0 %v386
        %v1480 = vpop.f32.mrb[0].mxu0
        %v1481 = vadd.f32 0.0, %v1480
        %v1482 = vpop.f32.mrb[0].mxu0
        %1483 = vmatprep.mubr.f32.mxu0 0.0
        %1484 = vmatmul.mubr.f32.gmra.mrb[0].mxu0 %v389
        %v1485 = vpop.f32.mrb[0].mxu0
        %v1486 = vadd.f32 0.0, %v1485
        %v1487 = vpop.f32.mrb[0].mxu0
        %1488 = vdwg.mxu0
        %s1489 = scalar_lea.vmem [#allocation2], 144
        %1490 = vst.msk [vmem:[%s1489] sm:$0xff] %vm471, %v1476
        %1491 = vst.msk [vmem:[%s1489 + $0x8] sm:$0xff] %vm471, %v1481
        %1492 = vst.msk [vmem:[%s1489 + $0x10] sm:$0x3] %vm474, %v1486
        %p1493 = scmp.ge.s32.totalorder %s1324, 0
        %p1494 = scmp.le.s32.totalorder %s1324, 7
        %p1495 = pnand %p1493, %p1494
        %p1496 = pneg %p1495
        %s1497 = scalar_select %p1496, 0.25, 0.0
        %s1498 = scalar_select %p1496, 0.75, 0.0
        %v1499 = vld [vmem:[%s993] sm:$0xff]
        %v1500 = vstv %s1497
        %v1501 = vmul.f32 %v1500, %v1499
        %v1502 = vld [vmem:[%s1332] sm:$0xff]
        %v1503 = vstv %s1498
        %v1504 = vmul.f32 %v1503, %v1502
        %v1505 = vadd.f32 %v1501, %v1504
        %v1507 = vsel %vm307, %v1505, 0
        %1509 = vmatprep.subr.mxu0 0.0
        %1510 = vmatpush1.msra.mxu0 %v277
        %1511 = vmatprep.subr.mxu0 0.0
        %1512 = vmatpush1.msra.mxu0 %v278
        %1513 = vmatprep.subr.mxu0 0.0
        %1514 = vmatpush1.msra.mxu0 %v279
        %1515 = vmatprep.subr.mxu0 0.0
        %1516 = vmatpush1.msra.mxu0 %v280
        %1517 = vmatprep.subr.mxu0 0.0
        %1518 = vmatpush1.msra.mxu0 0.0
        %1519 = vmatprep.subr.mxu0 0.0
        %1520 = vmatpush1.msra.mxu0 0.0
        %1521 = vmatprep.subr.mxu0 0.0
        %1522 = vmatpush1.msra.mxu0 0.0
        %1523 = vmatprep.subr.mxu0 0.0
        %1524 = vmatpush1.msra.mxu0 0.0
        %1525 = vmatprep.subr.mxu0 0.0
        %1526 = vmatpush1.msra.mxu0 0.0
        %1527 = vmatprep.subr.mxu0 0.0
        %1528 = vmatpush1.msra.mxu0 0.0
        %1529 = vmatprep.subr.mxu0 0.0
        %1530 = vmatpush1.msra.mxu0 0.0
        %1531 = vmatprep.subr.mxu0 0.0
        %1532 = vmatpush1.msra.mxu0 0.0
        %1533 = vmatprep.subr.mxu0 0.0
        %1534 = vmatpush1.msra.mxu0 0.0
        %1535 = vmatprep.subr.mxu0 0.0
        %1536 = vmatpush1.msra.mxu0 0.0
        %1537 = vmatprep.subr.mxu0 0.0
        %1538 = vmatpush1.msra.mxu0 0.0
        %1539 = vmatprep.subr.mxu0 0.0
        %1540 = vmatpush1.msra.mxu0 0.0
        %1541 = vmatprep.subr.mxu0 0.0
        %1542 = vmatpush1.msra.mxu0 0.0
        %1543 = vmatprep.subr.mxu0 0.0
        %1544 = vmatpush1.msra.mxu0 0.0
        %1545 = vmatprep.subr.mxu0 0.0
        %1546 = vmatpush1.msra.mxu0 0.0
        %1547 = vmatprep.subr.mxu0 0.0
        %1548 = vmatpush1.msra.mxu0 0.0
        %1549 = vmatprep.subr.mxu0 0.0
        %1550 = vmatpush1.msra.mxu0 0.0
        %1551 = vmatprep.subr.mxu0 0.0
        %1552 = vmatpush1.msra.mxu0 0.0
        %1553 = vmatprep.subr.mxu0 0.0
        %1554 = vmatpush1.msra.mxu0 0.0
        %1555 = vmatprep.subr.mxu0 0.0
        %1556 = vmatpush1.msra.mxu0 0.0
        %1557 = vmatprep.subr.mxu0 0.0
        %1558 = vmatpush1.msra.mxu0 0.0
        %1559 = vmatprep.subr.mxu0 0.0
        %1560 = vmatpush1.msra.mxu0 0.0
        %1561 = vmatprep.subr.mxu0 0.0
        %1562 = vmatpush1.msra.mxu0 0.0
        %1563 = vmatprep.subr.mxu0 0.0
        %1564 = vmatpush1.msra.mxu0 0.0
        %1565 = vmatprep.subr.mxu0 0.0
        %1566 = vmatpush1.msra.mxu0 0.0
        %1567 = vmatprep.subr.mxu0 0.0
        %1568 = vmatpush1.msra.mxu0 0.0
        %1569 = vmatprep.subr.mxu0 0.0
        %1570 = vmatpush1.msra.mxu0 0.0
        %1571 = vmatprep.subr.mxu0 0.0
        %1572 = vmatpush1.msra.mxu0 0.0
        %1573 = vmatprep.mubr.f32.mxu0 0.0
        %1574 = vmatmul.mubr.f32.gmra.mrb[0].mxu0 %v1507
        %v1575 = vpop.f32.mrb[0].mxu0
        %v1576 = vadd.f32 0.0, %v1575
        %v1577 = vpop.f32.mrb[0].mxu0
        %1578 = vdwg.mxu0
        %1579 = vmatprep.subr.mxu0 0.0
        %1580 = vmatpush1.msra.mxu0 %v1576
        %1581 = vmatprep.subr.mxu0 0.0
        %1582 = vmatpush1.msra.mxu0 0.0
        %1583 = vmatprep.subr.mxu0 0.0
        %1584 = vmatpush1.msra.mxu0 0.0
        %1585 = vmatprep.subr.mxu0 0.0
        %1586 = vmatpush1.msra.mxu0 0.0
        %1587 = vmatprep.subr.mxu0 0.0
        %1588 = vmatpush1.msra.mxu0 0.0
        %1589 = vmatprep.subr.mxu0 0.0
        %1590 = vmatpush1.msra.mxu0 0.0
        %1591 = vmatprep.subr.mxu0 0.0
        %1592 = vmatpush1.msra.mxu0 0.0
        %1593 = vmatprep.subr.mxu0 0.0
        %1594 = vmatpush1.msra.mxu0 0.0
        %1595 = vmatprep.subr.mxu0 0.0
        %1596 = vmatpush1.msra.mxu0 0.0
        %1597 = vmatprep.subr.mxu0 0.0
        %1598 = vmatpush1.msra.mxu0 0.0
        %1599 = vmatprep.subr.mxu0 0.0
        %1600 = vmatpush1.msra.mxu0 0.0
        %1601 = vmatprep.subr.mxu0 0.0
        %1602 = vmatpush1.msra.mxu0 0.0
        %1603 = vmatprep.subr.mxu0 0.0
        %1604 = vmatpush1.msra.mxu0 0.0
        %1605 = vmatprep.subr.mxu0 0.0
        %1606 = vmatpush1.msra.mxu0 0.0
        %1607 = vmatprep.subr.mxu0 0.0
        %1608 = vmatpush1.msra.mxu0 0.0
        %1609 = vmatprep.subr.mxu0 0.0
        %1610 = vmatpush1.msra.mxu0 0.0
        %1611 = vmatprep.subr.mxu0 0.0
        %1612 = vmatpush1.msra.mxu0 0.0
        %1613 = vmatprep.subr.mxu0 0.0
        %1614 = vmatpush1.msra.mxu0 0.0
        %1615 = vmatprep.subr.mxu0 0.0
        %1616 = vmatpush1.msra.mxu0 0.0
        %1617 = vmatprep.subr.mxu0 0.0
        %1618 = vmatpush1.msra.mxu0 0.0
        %1619 = vmatprep.subr.mxu0 0.0
        %1620 = vmatpush1.msra.mxu0 0.0
        %1621 = vmatprep.subr.mxu0 0.0
        %1622 = vmatpush1.msra.mxu0 0.0
        %1623 = vmatprep.subr.mxu0 0.0
        %1624 = vmatpush1.msra.mxu0 0.0
        %1625 = vmatprep.subr.mxu0 0.0
        %1626 = vmatpush1.msra.mxu0 0.0
        %1627 = vmatprep.subr.mxu0 0.0
        %1628 = vmatpush1.msra.mxu0 0.0
        %1629 = vmatprep.subr.mxu0 0.0
        %1630 = vmatpush1.msra.mxu0 0.0
        %1631 = vmatprep.subr.mxu0 0.0
        %1632 = vmatpush1.msra.mxu0 0.0
        %1633 = vmatprep.subr.mxu0 0.0
        %1634 = vmatpush1.msra.mxu0 0.0
        %1635 = vmatprep.subr.mxu0 0.0
        %1636 = vmatpush1.msra.mxu0 0.0
        %1637 = vmatprep.subr.mxu0 0.0
        %1638 = vmatpush1.msra.mxu0 0.0
        %1639 = vmatprep.subr.mxu0 0.0
        %1640 = vmatpush1.msra.mxu0 0.0
        %1641 = vmatprep.subr.mxu0 0.0
        %1642 = vmatpush1.msra.mxu0 0.0
        %1643 = vmatprep.mubr.f32.mxu0 0.0
        %1644 = vmatmul.mubr.f32.gmra.mrb[0].mxu0 %v383
        %v1645 = vpop.f32.mrb[0].mxu0
        %v1646 = vadd.f32 0.0, %v1645
        %v1647 = vpop.f32.mrb[0].mxu0
        %1648 = vmatprep.mubr.f32.mxu0 0.0
        %1649 = vmatmul.mubr.f32.gmra.mrb[0].mxu0 %v386
        %v1650 = vpop.f32.mrb[0].mxu0
        %v1651 = vadd.f32 0.0, %v1650
        %v1652 = vpop.f32.mrb[0].mxu0
        %1653 = vmatprep.mubr.f32.mxu0 0.0
        %1654 = vmatmul.mubr.f32.gmra.mrb[0].mxu0 %v389
        %v1655 = vpop.f32.mrb[0].mxu0
        %v1656 = vadd.f32 0.0, %v1655
        %v1657 = vpop.f32.mrb[0].mxu0
        %1658 = vdwg.mxu0
        %s1659 = scalar_lea.vmem [#allocation2], 168
        %1660 = vst.msk [vmem:[%s1659] sm:$0xff] %vm471, %v1646
        %1661 = vst.msk [vmem:[%s1659 + $0x8] sm:$0xff] %vm471, %v1651
        %1662 = vst.msk [vmem:[%s1659 + $0x10] sm:$0x3] %vm474, %v1656
        %s1663 = sadd.s32 %s273, 4
        %p1664 = scmp.gt.s32.totalorder %s1663, 0
        %s1665 = scalar_select %p1664, %s1663, 0
        %p1666 = scmp.lt.s32.totalorder %s1665, 7
        %s1667 = scalar_select %p1666, %s1665, 7
        %v1668 = vld [vmem:[%s1332] sm:$0xff]
        %v1669 = vmul.f32 %v1503, %v1668
        %s1670 = smul.u32 %s1667, 8
        %s1671 = scalar_lea.vmem %s241, %s1670 [#allocation3]
        %v1672 = vld [vmem:[%s1671] sm:$0xff]
        %v1673 = vmul.f32 %v1500, %v1672
        %v1674 = vadd.f32 %v1669, %v1673
        %v1676 = vsel %vm307, %v1674, 0
        %1678 = vmatprep.subr.mxu0 0.0
        %1679 = vmatpush1.msra.mxu0 %v277
        %1680 = vmatprep.subr.mxu0 0.0
        %1681 = vmatpush1.msra.mxu0 %v278
        %1682 = vmatprep.subr.mxu0 0.0
        %1683 = vmatpush1.msra.mxu0 %v279
        %1684 = vmatprep.subr.mxu0 0.0
        %1685 = vmatpush1.msra.mxu0 %v280
        %1686 = vmatprep.subr.mxu0 0.0
        %1687 = vmatpush1.msra.mxu0 0.0
        %1688 = vmatprep.subr.mxu0 0.0
        %1689 = vmatpush1.msra.mxu0 0.0
        %1690 = vmatprep.subr.mxu0 0.0
        %1691 = vmatpush1.msra.mxu0 0.0
        %1692 = vmatprep.subr.mxu0 0.0
        %1693 = vmatpush1.msra.mxu0 0.0
        %1694 = vmatprep.subr.mxu0 0.0
        %1695 = vmatpush1.msra.mxu0 0.0
        %1696 = vmatprep.subr.mxu0 0.0
        %1697 = vmatpush1.msra.mxu0 0.0
        %1698 = vmatprep.subr.mxu0 0.0
        %1699 = vmatpush1.msra.mxu0 0.0
        %1700 = vmatprep.subr.mxu0 0.0
        %1701 = vmatpush1.msra.mxu0 0.0
        %1702 = vmatprep.subr.mxu0 0.0
        %1703 = vmatpush1.msra.mxu0 0.0
        %1704 = vmatprep.subr.mxu0 0.0
        %1705 = vmatpush1.msra.mxu0 0.0
        %1706 = vmatprep.subr.mxu0 0.0
        %1707 = vmatpush1.msra.mxu0 0.0
        %1708 = vmatprep.subr.mxu0 0.0
        %1709 = vmatpush1.msra.mxu0 0.0
        %1710 = vmatprep.subr.mxu0 0.0
        %1711 = vmatpush1.msra.mxu0 0.0
        %1712 = vmatprep.subr.mxu0 0.0
        %1713 = vmatpush1.msra.mxu0 0.0
        %1714 = vmatprep.subr.mxu0 0.0
        %1715 = vmatpush1.msra.mxu0 0.0
        %1716 = vmatprep.subr.mxu0 0.0
        %1717 = vmatpush1.msra.mxu0 0.0
        %1718 = vmatprep.subr.mxu0 0.0
        %1719 = vmatpush1.msra.mxu0 0.0
        %1720 = vmatprep.subr.mxu0 0.0
        %1721 = vmatpush1.msra.mxu0 0.0
        %1722 = vmatprep.subr.mxu0 0.0
        %1723 = vmatpush1.msra.mxu0 0.0
        %1724 = vmatprep.subr.mxu0 0.0
        %1725 = vmatpush1.msra.mxu0 0.0
        %1726 = vmatprep.subr.mxu0 0.0
        %1727 = vmatpush1.msra.mxu0 0.0
        %1728 = vmatprep.subr.mxu0 0.0
        %1729 = vmatpush1.msra.mxu0 0.0
        %1730 = vmatprep.subr.mxu0 0.0
        %1731 = vmatpush1.msra.mxu0 0.0
        %1732 = vmatprep.subr.mxu0 0.0
        %1733 = vmatpush1.msra.mxu0 0.0
        %1734 = vmatprep.subr.mxu0 0.0
        %1735 = vmatpush1.msra.mxu0 0.0
        %1736 = vmatprep.subr.mxu0 0.0
        %1737 = vmatpush1.msra.mxu0 0.0
        %1738 = vmatprep.subr.mxu0 0.0
        %1739 = vmatpush1.msra.mxu0 0.0
        %1740 = vmatprep.subr.mxu0 0.0
        %1741 = vmatpush1.msra.mxu0 0.0
        %1742 = vmatprep.mubr.f32.mxu0 0.0
        %1743 = vmatmul.mubr.f32.gmra.mrb[0].mxu0 %v1676
        %v1744 = vpop.f32.mrb[0].mxu0
        %v1745 = vadd.f32 0.0, %v1744
        %v1746 = vpop.f32.mrb[0].mxu0
        %1747 = vdwg.mxu0
        %1748 = vmatprep.subr.mxu0 0.0
        %1749 = vmatpush1.msra.mxu0 %v1745
        %1750 = vmatprep.subr.mxu0 0.0
        %1751 = vmatpush1.msra.mxu0 0.0
        %1752 = vmatprep.subr.mxu0 0.0
        %1753 = vmatpush1.msra.mxu0 0.0
        %1754 = vmatprep.subr.mxu0 0.0
        %1755 = vmatpush1.msra.mxu0 0.0
        %1756 = vmatprep.subr.mxu0 0.0
        %1757 = vmatpush1.msra.mxu0 0.0
        %1758 = vmatprep.subr.mxu0 0.0
        %1759 = vmatpush1.msra.mxu0 0.0
        %1760 = vmatprep.subr.mxu0 0.0
        %1761 = vmatpush1.msra.mxu0 0.0
        %1762 = vmatprep.subr.mxu0 0.0
        %1763 = vmatpush1.msra.mxu0 0.0
        %1764 = vmatprep.subr.mxu0 0.0
        %1765 = vmatpush1.msra.mxu0 0.0
        %1766 = vmatprep.subr.mxu0 0.0
        %1767 = vmatpush1.msra.mxu0 0.0
        %1768 = vmatprep.subr.mxu0 0.0
        %1769 = vmatpush1.msra.mxu0 0.0
        %1770 = vmatprep.subr.mxu0 0.0
        %1771 = vmatpush1.msra.mxu0 0.0
        %1772 = vmatprep.subr.mxu0 0.0
        %1773 = vmatpush1.msra.mxu0 0.0
        %1774 = vmatprep.subr.mxu0 0.0
        %1775 = vmatpush1.msra.mxu0 0.0
        %1776 = vmatprep.subr.mxu0 0.0
        %1777 = vmatpush1.msra.mxu0 0.0
        %1778 = vmatprep.subr.mxu0 0.0
        %1779 = vmatpush1.msra.mxu0 0.0
        %1780 = vmatprep.subr.mxu0 0.0
        %1781 = vmatpush1.msra.mxu0 0.0
        %1782 = vmatprep.subr.mxu0 0.0
        %1783 = vmatpush1.msra.mxu0 0.0
        %1784 = vmatprep.subr.mxu0 0.0
        %1785 = vmatpush1.msra.mxu0 0.0
        %1786 = vmatprep.subr.mxu0 0.0
        %1787 = vmatpush1.msra.mxu0 0.0
        %1788 = vmatprep.subr.mxu0 0.0
        %1789 = vmatpush1.msra.mxu0 0.0
        %1790 = vmatprep.subr.mxu0 0.0
        %1791 = vmatpush1.msra.mxu0 0.0
        %1792 = vmatprep.subr.mxu0 0.0
        %1793 = vmatpush1.msra.mxu0 0.0
        %1794 = vmatprep.subr.mxu0 0.0
        %1795 = vmatpush1.msra.mxu0 0.0
        %1796 = vmatprep.subr.mxu0 0.0
        %1797 = vmatpush1.msra.mxu0 0.0
        %1798 = vmatprep.subr.mxu0 0.0
        %1799 = vmatpush1.msra.mxu0 0.0
        %1800 = vmatprep.subr.mxu0 0.0
        %1801 = vmatpush1.msra.mxu0 0.0
        %1802 = vmatprep.subr.mxu0 0.0
        %1803 = vmatpush1.msra.mxu0 0.0
        %1804 = vmatprep.subr.mxu0 0.0
        %1805 = vmatpush1.msra.mxu0 0.0
        %1806 = vmatprep.subr.mxu0 0.0
        %1807 = vmatpush1.msra.mxu0 0.0
        %1808 = vmatprep.subr.mxu0 0.0
        %1809 = vmatpush1.msra.mxu0 0.0
        %1810 = vmatprep.subr.mxu0 0.0
        %1811 = vmatpush1.msra.mxu0 0.0
        %1812 = vmatprep.mubr.f32.mxu0 0.0
        %1813 = vmatmul.mubr.f32.gmra.mrb[0].mxu0 %v383
        %v1814 = vpop.f32.mrb[0].mxu0
        %v1815 = vadd.f32 0.0, %v1814
        %v1816 = vpop.f32.mrb[0].mxu0
        %1817 = vmatprep.mubr.f32.mxu0 0.0
        %1818 = vmatmul.mubr.f32.gmra.mrb[0].mxu0 %v386
        %v1819 = vpop.f32.mrb[0].mxu0
        %v1820 = vadd.f32 0.0, %v1819
        %v1821 = vpop.f32.mrb[0].mxu0
        %1822 = vmatprep.mubr.f32.mxu0 0.0
        %1823 = vmatmul.mubr.f32.gmra.mrb[0].mxu0 %v389
        %v1824 = vpop.f32.mrb[0].mxu0
        %v1825 = vadd.f32 0.0, %v1824
        %v1826 = vpop.f32.mrb[0].mxu0
        %1827 = vdwg.mxu0
        %s1828 = scalar_lea.vmem [#allocation2], 192
        %1829 = vst.msk [vmem:[%s1828] sm:$0xff] %vm471, %v1815
        %1830 = vst.msk [vmem:[%s1828 + $0x8] sm:$0xff] %vm471, %v1820
        %1831 = vst.msk [vmem:[%s1828 + $0x10] sm:$0x3] %vm474, %v1825
        %p1832 = scmp.ge.s32.totalorder %s1663, 0
        %p1833 = scmp.le.s32.totalorder %s1663, 7
        %p1834 = pnand %p1832, %p1833
        %p1835 = pneg %p1834
        %s1836 = scalar_select %p1835, 0.25, 0.0
        %s1837 = scalar_select %p1835, 0.75, 0.0
        %v1838 = vld [vmem:[%s1332] sm:$0xff]
        %v1839 = vstv %s1836
        %v1840 = vmul.f32 %v1839, %v1838
        %v1841 = vld [vmem:[%s1671] sm:$0xff]
        %v1842 = vstv %s1837
        %v1843 = vmul.f32 %v1842, %v1841
        %v1844 = vadd.f32 %v1840, %v1843
        %v1846 = vsel %vm307, %v1844, 0
        %1848 = vmatprep.subr.mxu0 0.0
        %1849 = vmatpush1.msra.mxu0 %v277
        %1850 = vmatprep.subr.mxu0 0.0
        %1851 = vmatpush1.msra.mxu0 %v278
        %1852 = vmatprep.subr.mxu0 0.0
        %1853 = vmatpush1.msra.mxu0 %v279
        %1854 = vmatprep.subr.mxu0 0.0
        %1855 = vmatpush1.msra.mxu0 %v280
        %1856 = vmatprep.subr.mxu0 0.0
        %1857 = vmatpush1.msra.mxu0 0.0
        %1858 = vmatprep.subr.mxu0 0.0
        %1859 = vmatpush1.msra.mxu0 0.0
        %1860 = vmatprep.subr.mxu0 0.0
        %1861 = vmatpush1.msra.mxu0 0.0
        %1862 = vmatprep.subr.mxu0 0.0
        %1863 = vmatpush1.msra.mxu0 0.0
        %1864 = vmatprep.subr.mxu0 0.0
        %1865 = vmatpush1.msra.mxu0 0.0
        %1866 = vmatprep.subr.mxu0 0.0
        %1867 = vmatpush1.msra.mxu0 0.0
        %1868 = vmatprep.subr.mxu0 0.0
        %1869 = vmatpush1.msra.mxu0 0.0
        %1870 = vmatprep.subr.mxu0 0.0
        %1871 = vmatpush1.msra.mxu0 0.0
        %1872 = vmatprep.subr.mxu0 0.0
        %1873 = vmatpush1.msra.mxu0 0.0
        %1874 = vmatprep.subr.mxu0 0.0
        %1875 = vmatpush1.msra.mxu0 0.0
        %1876 = vmatprep.subr.mxu0 0.0
        %1877 = vmatpush1.msra.mxu0 0.0
        %1878 = vmatprep.subr.mxu0 0.0
        %1879 = vmatpush1.msra.mxu0 0.0
        %1880 = vmatprep.subr.mxu0 0.0
        %1881 = vmatpush1.msra.mxu0 0.0
        %1882 = vmatprep.subr.mxu0 0.0
        %1883 = vmatpush1.msra.mxu0 0.0
        %1884 = vmatprep.subr.mxu0 0.0
        %1885 = vmatpush1.msra.mxu0 0.0
        %1886 = vmatprep.subr.mxu0 0.0
        %1887 = vmatpush1.msra.mxu0 0.0
        %1888 = vmatprep.subr.mxu0 0.0
        %1889 = vmatpush1.msra.mxu0 0.0
        %1890 = vmatprep.subr.mxu0 0.0
        %1891 = vmatpush1.msra.mxu0 0.0
        %1892 = vmatprep.subr.mxu0 0.0
        %1893 = vmatpush1.msra.mxu0 0.0
        %1894 = vmatprep.subr.mxu0 0.0
        %1895 = vmatpush1.msra.mxu0 0.0
        %1896 = vmatprep.subr.mxu0 0.0
        %1897 = vmatpush1.msra.mxu0 0.0
        %1898 = vmatprep.subr.mxu0 0.0
        %1899 = vmatpush1.msra.mxu0 0.0
        %1900 = vmatprep.subr.mxu0 0.0
        %1901 = vmatpush1.msra.mxu0 0.0
        %1902 = vmatprep.subr.mxu0 0.0
        %1903 = vmatpush1.msra.mxu0 0.0
        %1904 = vmatprep.subr.mxu0 0.0
        %1905 = vmatpush1.msra.mxu0 0.0
        %1906 = vmatprep.subr.mxu0 0.0
        %1907 = vmatpush1.msra.mxu0 0.0
        %1908 = vmatprep.subr.mxu0 0.0
        %1909 = vmatpush1.msra.mxu0 0.0
        %1910 = vmatprep.subr.mxu0 0.0
        %1911 = vmatpush1.msra.mxu0 0.0
        %1912 = vmatprep.mubr.f32.mxu0 0.0
        %1913 = vmatmul.mubr.f32.gmra.mrb[0].mxu0 %v1846
        %v1914 = vpop.f32.mrb[0].mxu0
        %v1915 = vadd.f32 0.0, %v1914
        %v1916 = vpop.f32.mrb[0].mxu0
        %1917 = vdwg.mxu0
        %1918 = vmatprep.subr.mxu0 0.0
        %1919 = vmatpush1.msra.mxu0 %v1915
        %1920 = vmatprep.subr.mxu0 0.0
        %1921 = vmatpush1.msra.mxu0 0.0
        %1922 = vmatprep.subr.mxu0 0.0
        %1923 = vmatpush1.msra.mxu0 0.0
        %1924 = vmatprep.subr.mxu0 0.0
        %1925 = vmatpush1.msra.mxu0 0.0
        %1926 = vmatprep.subr.mxu0 0.0
        %1927 = vmatpush1.msra.mxu0 0.0
        %1928 = vmatprep.subr.mxu0 0.0
        %1929 = vmatpush1.msra.mxu0 0.0
        %1930 = vmatprep.subr.mxu0 0.0
        %1931 = vmatpush1.msra.mxu0 0.0
        %1932 = vmatprep.subr.mxu0 0.0
        %1933 = vmatpush1.msra.mxu0 0.0
        %1934 = vmatprep.subr.mxu0 0.0
        %1935 = vmatpush1.msra.mxu0 0.0
        %1936 = vmatprep.subr.mxu0 0.0
        %1937 = vmatpush1.msra.mxu0 0.0
        %1938 = vmatprep.subr.mxu0 0.0
        %1939 = vmatpush1.msra.mxu0 0.0
        %1940 = vmatprep.subr.mxu0 0.0
        %1941 = vmatpush1.msra.mxu0 0.0
        %1942 = vmatprep.subr.mxu0 0.0
        %1943 = vmatpush1.msra.mxu0 0.0
        %1944 = vmatprep.subr.mxu0 0.0
        %1945 = vmatpush1.msra.mxu0 0.0
        %1946 = vmatprep.subr.mxu0 0.0
        %1947 = vmatpush1.msra.mxu0 0.0
        %1948 = vmatprep.subr.mxu0 0.0
        %1949 = vmatpush1.msra.mxu0 0.0
        %1950 = vmatprep.subr.mxu0 0.0
        %1951 = vmatpush1.msra.mxu0 0.0
        %1952 = vmatprep.subr.mxu0 0.0
        %1953 = vmatpush1.msra.mxu0 0.0
        %1954 = vmatprep.subr.mxu0 0.0
        %1955 = vmatpush1.msra.mxu0 0.0
        %1956 = vmatprep.subr.mxu0 0.0
        %1957 = vmatpush1.msra.mxu0 0.0
        %1958 = vmatprep.subr.mxu0 0.0
        %1959 = vmatpush1.msra.mxu0 0.0
        %1960 = vmatprep.subr.mxu0 0.0
        %1961 = vmatpush1.msra.mxu0 0.0
        %1962 = vmatprep.subr.mxu0 0.0
        %1963 = vmatpush1.msra.mxu0 0.0
        %1964 = vmatprep.subr.mxu0 0.0
        %1965 = vmatpush1.msra.mxu0 0.0
        %1966 = vmatprep.subr.mxu0 0.0
        %1967 = vmatpush1.msra.mxu0 0.0
        %1968 = vmatprep.subr.mxu0 0.0
        %1969 = vmatpush1.msra.mxu0 0.0
        %1970 = vmatprep.subr.mxu0 0.0
        %1971 = vmatpush1.msra.mxu0 0.0
        %1972 = vmatprep.subr.mxu0 0.0
        %1973 = vmatpush1.msra.mxu0 0.0
        %1974 = vmatprep.subr.mxu0 0.0
        %1975 = vmatpush1.msra.mxu0 0.0
        %1976 = vmatprep.subr.mxu0 0.0
        %1977 = vmatpush1.msra.mxu0 0.0
        %1978 = vmatprep.subr.mxu0 0.0
        %1979 = vmatpush1.msra.mxu0 0.0
        %1980 = vmatprep.subr.mxu0 0.0
        %1981 = vmatpush1.msra.mxu0 0.0
        %1982 = vmatprep.mubr.f32.mxu0 0.0
        %1983 = vmatmul.mubr.f32.gmra.mrb[0].mxu0 %v383
        %v1984 = vpop.f32.mrb[0].mxu0
        %v1985 = vadd.f32 0.0, %v1984
        %v1986 = vpop.f32.mrb[0].mxu0
        %1987 = vmatprep.mubr.f32.mxu0 0.0
        %1988 = vmatmul.mubr.f32.gmra.mrb[0].mxu0 %v386
        %v1989 = vpop.f32.mrb[0].mxu0
        %v1990 = vadd.f32 0.0, %v1989
        %v1991 = vpop.f32.mrb[0].mxu0
        %1992 = vmatprep.mubr.f32.mxu0 0.0
        %1993 = vmatmul.mubr.f32.gmra.mrb[0].mxu0 %v389
        %v1994 = vpop.f32.mrb[0].mxu0
        %v1995 = vadd.f32 0.0, %v1994
        %v1996 = vpop.f32.mrb[0].mxu0
        %1997 = vdwg.mxu0
        %s1998 = scalar_lea.vmem [#allocation2], 216
        %1999 = vst.msk [vmem:[%s1998] sm:$0xff] %vm471, %v1985
        %2000 = vst.msk [vmem:[%s1998 + $0x8] sm:$0xff] %vm471, %v1990
        %2001 = vst.msk [vmem:[%s1998 + $0x10] sm:$0x3] %vm474, %v1995
        %v2002 = vld [vmem:[%s4] sm:$0x1]
        %v2004 = vlaneseq
        %v2005 = vshrl.u32 %v2004, 7
        %v2006 = vsub.s32 0, %v2005
        %v2007 = vrot.slane %v2002, %v2006
        %v2009 = vld [vmem:[#allocation2] sm:$0xff]
        %v2010 = vld [vmem:[#allocation2 + $0x8] sm:$0xff]
        %v2011 = vld [vmem:[#allocation2 + $0x18] sm:$0xff]
        %v2012 = vld [vmem:[#allocation2 + $0x20] sm:$0xff]
        %v2013 = vld [vmem:[#allocation2 + $0x30] sm:$0xff]
        %v2014 = vld [vmem:[#allocation2 + $0x38] sm:$0xff]
        %v2015 = vld [vmem:[#allocation2 + $0x48] sm:$0xff]
        %v2016 = vld [vmem:[#allocation2 + $0x50] sm:$0xff]
        %v2017 = vld [vmem:[#allocation2 + $0x60] sm:$0xff]
        %v2018 = vld [vmem:[#allocation2 + $0x68] sm:$0xff]
        %v2019 = vld [vmem:[#allocation2 + $0x78] sm:$0xff]
        %v2020 = vld [vmem:[#allocation2 + $0x80] sm:$0xff]
        %v2021 = vld [vmem:[#allocation2 + $0x90] sm:$0xff]
        %v2022 = vld [vmem:[#allocation2 + $0x98] sm:$0xff]
        %v2023 = vld [vmem:[#allocation2 + $0xa8] sm:$0xff]
        %v2024 = vld [vmem:[#allocation2 + $0xb0] sm:$0xff]
        %v2025 = vld [vmem:[#allocation2 + $0xc0] sm:$0xff]
        %v2026 = vld [vmem:[#allocation2 + $0xc8] sm:$0xff]
        %v2027 = vld [vmem:[#allocation2 + $0xd8] sm:$0xff]
        %v2028 = vld [vmem:[#allocation2 + $0xe0] sm:$0xff]
        %v2029 = vld [vmem:[#allocation6] sm:$0xff]
        %v2030 = vld [vmem:[#allocation6 + $0x8] sm:$0xff]
        %v2031 = vld [vmem:[#allocation6 + $0x10] sm:$0xff]
        %v2032 = vld [vmem:[#allocation6 + $0x18] sm:$0xff]
        %v2033 = vld [vmem:[#allocation6 + $0x20] sm:$0xff]
        %v2034 = vld [vmem:[#allocation6 + $0x28] sm:$0xff]
        %v2035 = vld [vmem:[#allocation6 + $0x30] sm:$0xff]
        %v2036 = vld [vmem:[#allocation6 + $0x38] sm:$0xff]
        %v2037 = vld [vmem:[#allocation6 + $0x40] sm:$0xff]
        %v2039 = vsel %vm471, %v2009, 0
        %v2042 = vsel %vm471, %v2010, 0
        %v2045 = vsel %vm471, %v2011, 0
        %v2048 = vsel %vm471, %v2012, 0
        %v2051 = vsel %vm471, %v2013, 0
        %v2054 = vsel %vm471, %v2014, 0
        %v2057 = vsel %vm471, %v2015, 0
        %v2060 = vsel %vm471, %v2016, 0
        %v2063 = vsel %vm471, %v2017, 0
        %v2066 = vsel %vm471, %v2018, 0
        %v2069 = vsel %vm471, %v2019, 0
        %v2072 = vsel %vm471, %v2020, 0
        %v2075 = vsel %vm471, %v2021, 0
        %v2078 = vsel %vm471, %v2022, 0
        %v2081 = vsel %vm471, %v2023, 0
        %v2084 = vsel %vm471, %v2024, 0
        %v2087 = vsel %vm471, %v2025, 0
        %v2090 = vsel %vm471, %v2026, 0
        %v2093 = vsel %vm471, %v2027, 0
        %v2096 = vsel %vm471, %v2028, 0
        %2098 = vmatprep.subr.mxu0 0.0
        %2099 = vmatpush1.msra.mxu0 %v2029
        %2100 = vmatprep.subr.mxu0 0.0
        %2101 = vmatpush1.msra.mxu0 %v2030
        %2102 = vmatprep.subr.mxu0 0.0
        %2103 = vmatpush1.msra.mxu0 %v2031
        %2104 = vmatprep.subr.mxu0 0.0
        %2105 = vmatpush1.msra.mxu0 %v2032
        %2106 = vmatprep.subr.mxu0 0.0
        %2107 = vmatpush1.msra.mxu0 %v2033
        %2108 = vmatprep.subr.mxu0 0.0
        %2109 = vmatpush1.msra.mxu0 %v2034
        %2110 = vmatprep.subr.mxu0 0.0
        %2111 = vmatpush1.msra.mxu0 %v2035
        %2112 = vmatprep.subr.mxu0 0.0
        %2113 = vmatpush1.msra.mxu0 %v2036
        %2114 = vmatprep.subr.mxu0 0.0
        %2115 = vmatpush1.msra.mxu0 %v2037
        %2116 = vmatprep.subr.mxu0 0.0
        %2117 = vmatpush1.msra.mxu0 0.0
        %2118 = vmatprep.subr.mxu0 0.0
        %2119 = vmatpush1.msra.mxu0 0.0
        %2120 = vmatprep.subr.mxu0 0.0
        %2121 = vmatpush1.msra.mxu0 0.0
        %2122 = vmatprep.subr.mxu0 0.0
        %2123 = vmatpush1.msra.mxu0 0.0
        %2124 = vmatprep.subr.mxu0 0.0
        %2125 = vmatpush1.msra.mxu0 0.0
        %2126 = vmatprep.subr.mxu0 0.0
        %2127 = vmatpush1.msra.mxu0 0.0
        %2128 = vmatprep.subr.mxu0 0.0
        %2129 = vmatpush1.msra.mxu0 0.0
        %2130 = vmatprep.subr.mxu0 0.0
        %2131 = vmatpush1.msra.mxu0 0.0
        %2132 = vmatprep.subr.mxu0 0.0
        %2133 = vmatpush1.msra.mxu0 0.0
        %2134 = vmatprep.subr.mxu0 0.0
        %2135 = vmatpush1.msra.mxu0 0.0
        %2136 = vmatprep.subr.mxu0 0.0
        %2137 = vmatpush1.msra.mxu0 0.0
        %2138 = vmatprep.subr.mxu0 0.0
        %2139 = vmatpush1.msra.mxu0 0.0
        %2140 = vmatprep.subr.mxu0 0.0
        %2141 = vmatpush1.msra.mxu0 0.0
        %2142 = vmatprep.subr.mxu0 0.0
        %2143 = vmatpush1.msra.mxu0 0.0
        %2144 = vmatprep.subr.mxu0 0.0
        %2145 = vmatpush1.msra.mxu0 0.0
        %2146 = vmatprep.subr.mxu0 0.0
        %2147 = vmatpush1.msra.mxu0 0.0
        %2148 = vmatprep.subr.mxu0 0.0
        %2149 = vmatpush1.msra.mxu0 0.0
        %2150 = vmatprep.subr.mxu0 0.0
        %2151 = vmatpush1.msra.mxu0 0.0
        %2152 = vmatprep.subr.mxu0 0.0
        %2153 = vmatpush1.msra.mxu0 0.0
        %2154 = vmatprep.subr.mxu0 0.0
        %2155 = vmatpush1.msra.mxu0 0.0
        %2156 = vmatprep.subr.mxu0 0.0
        %2157 = vmatpush1.msra.mxu0 0.0
        %2158 = vmatprep.subr.mxu0 0.0
        %2159 = vmatpush1.msra.mxu0 0.0
        %2160 = vmatprep.subr.mxu0 0.0
        %2161 = vmatpush1.msra.mxu0 0.0
        %2162 = vmatprep.mubr.f32.mxu0 0.0
        %2163 = vmatmul.mubr.f32.gmra.mrb[0].mxu0 %v2039
        %v2164 = vpop.f32.mrb[0].mxu0
        %v2165 = vadd.f32 0.0, %v2164
        %v2166 = vpop.f32.mrb[0].mxu0
        %2167 = vmatprep.mubr.f32.mxu0 0.0
        %2168 = vmatmul.mubr.f32.gmra.mrb[0].mxu0 %v2042
        %v2169 = vpop.f32.mrb[0].mxu0
        %v2170 = vadd.f32 0.0, %v2169
        %v2171 = vpop.f32.mrb[0].mxu0
        %2172 = vmatprep.mubr.f32.mxu0 0.0
        %2173 = vmatmul.mubr.f32.gmra.mrb[0].mxu0 %v2045
        %v2174 = vpop.f32.mrb[0].mxu0
        %v2175 = vadd.f32 0.0, %v2174
        %v2176 = vpop.f32.mrb[0].mxu0
        %2177 = vmatprep.mubr.f32.mxu0 0.0
        %2178 = vmatmul.mubr.f32.gmra.mrb[0].mxu0 %v2048
        %v2179 = vpop.f32.mrb[0].mxu0
        %v2180 = vadd.f32 0.0, %v2179
        %v2181 = vpop.f32.mrb[0].mxu0
        %2182 = vmatprep.mubr.f32.mxu0 0.0
        %2183 = vmatmul.mubr.f32.gmra.mrb[0].mxu0 %v2051
        %v2184 = vpop.f32.mrb[0].mxu0
        %v2185 = vadd.f32 0.0, %v2184
        %v2186 = vpop.f32.mrb[0].mxu0
        %2187 = vmatprep.mubr.f32.mxu0 0.0
        %2188 = vmatmul.mubr.f32.gmra.mrb[0].mxu0 %v2054
        %v2189 = vpop.f32.mrb[0].mxu0
        %v2190 = vadd.f32 0.0, %v2189
        %v2191 = vpop.f32.mrb[0].mxu0
        %2192 = vmatprep.mubr.f32.mxu0 0.0
        %2193 = vmatmul.mubr.f32.gmra.mrb[0].mxu0 %v2057
        %v2194 = vpop.f32.mrb[0].mxu0
        %v2195 = vadd.f32 0.0, %v2194
        %v2196 = vpop.f32.mrb[0].mxu0
        %2197 = vmatprep.mubr.f32.mxu0 0.0
        %2198 = vmatmul.mubr.f32.gmra.mrb[0].mxu0 %v2060
        %v2199 = vpop.f32.mrb[0].mxu0
        %v2200 = vadd.f32 0.0, %v2199
        %v2201 = vpop.f32.mrb[0].mxu0
        %2202 = vmatprep.mubr.f32.mxu0 0.0
        %2203 = vmatmul.mubr.f32.gmra.mrb[0].mxu0 %v2063
        %v2204 = vpop.f32.mrb[0].mxu0
        %v2205 = vadd.f32 0.0, %v2204
        %v2206 = vpop.f32.mrb[0].mxu0
        %2207 = vmatprep.mubr.f32.mxu0 0.0
        %2208 = vmatmul.mubr.f32.gmra.mrb[0].mxu0 %v2066
        %v2209 = vpop.f32.mrb[0].mxu0
        %v2210 = vadd.f32 0.0, %v2209
        %v2211 = vpop.f32.mrb[0].mxu0
        %2212 = vmatprep.mubr.f32.mxu0 0.0
        %2213 = vmatmul.mubr.f32.gmra.mrb[0].mxu0 %v2069
        %v2214 = vpop.f32.mrb[0].mxu0
        %v2215 = vadd.f32 0.0, %v2214
        %v2216 = vpop.f32.mrb[0].mxu0
        %2217 = vmatprep.mubr.f32.mxu0 0.0
        %2218 = vmatmul.mubr.f32.gmra.mrb[0].mxu0 %v2072
        %v2219 = vpop.f32.mrb[0].mxu0
        %v2220 = vadd.f32 0.0, %v2219
        %v2221 = vpop.f32.mrb[0].mxu0
        %2222 = vmatprep.mubr.f32.mxu0 0.0
        %2223 = vmatmul.mubr.f32.gmra.mrb[0].mxu0 %v2075
        %v2224 = vpop.f32.mrb[0].mxu0
        %v2225 = vadd.f32 0.0, %v2224
        %v2226 = vpop.f32.mrb[0].mxu0
        %2227 = vmatprep.mubr.f32.mxu0 0.0
        %2228 = vmatmul.mubr.f32.gmra.mrb[0].mxu0 %v2078
        %v2229 = vpop.f32.mrb[0].mxu0
        %v2230 = vadd.f32 0.0, %v2229
        %v2231 = vpop.f32.mrb[0].mxu0
        %2232 = vmatprep.mubr.f32.mxu0 0.0
        %2233 = vmatmul.mubr.f32.gmra.mrb[0].mxu0 %v2081
        %v2234 = vpop.f32.mrb[0].mxu0
        %v2235 = vadd.f32 0.0, %v2234
        %v2236 = vpop.f32.mrb[0].mxu0
        %2237 = vmatprep.mubr.f32.mxu0 0.0
        %2238 = vmatmul.mubr.f32.gmra.mrb[0].mxu0 %v2084
        %v2239 = vpop.f32.mrb[0].mxu0
        %v2240 = vadd.f32 0.0, %v2239
        %v2241 = vpop.f32.mrb[0].mxu0
        %2242 = vmatprep.mubr.f32.mxu0 0.0
        %2243 = vmatmul.mubr.f32.gmra.mrb[0].mxu0 %v2087
        %v2244 = vpop.f32.mrb[0].mxu0
        %v2245 = vpop.f32.mrb[0].mxu0
        %2246 = vmatprep.mubr.f32.mxu0 0.0
        %2247 = vmatmul.mubr.f32.gmra.mrb[0].mxu0 %v2090
        %v2248 = vpop.f32.mrb[0].mxu0
        %v2249 = vpop.f32.mrb[0].mxu0
        %2250 = vmatprep.mubr.f32.mxu0 0.0
        %2251 = vmatmul.mubr.f32.gmra.mrb[0].mxu0 %v2093
        %v2252 = vpop.f32.mrb[0].mxu0
        %v2253 = vpop.f32.mrb[0].mxu0
        %2254 = vmatprep.mubr.f32.mxu0 0.0
        %2255 = vmatmul.mubr.f32.gmra.mrb[0].mxu0 %v2096
        %v2256 = vpop.f32.mrb[0].mxu0
        %v2257 = vpop.f32.mrb[0].mxu0
        %2258 = vdwg.mxu0
        %v2259 = vadd.f32 %v2007, %v2165
        %v2260 = vadd.f32 %v2007, %v2170
        %v2261 = vadd.f32 %v2007, %v2175
        %v2262 = vadd.f32 %v2007, %v2180
        %v2263 = vadd.f32 %v2007, %v2185
        %v2264 = vadd.f32 %v2007, %v2190
        %v2265 = vadd.f32 %v2007, %v2195
        %v2266 = vadd.f32 %v2007, %v2200
        %v2267 = vadd.f32 %v2007, %v2205
        %v2268 = vadd.f32 %v2007, %v2210
        %v2269 = vadd.f32 %v2007, %v2215
        %v2270 = vadd.f32 %v2007, %v2220
        %v2271 = vadd.f32 %v2007, %v2225
        %v2272 = vadd.f32 %v2007, %v2230
        %v2273 = vadd.f32 %v2007, %v2235
        %v2274 = vadd.f32 %v2007, %v2240
        %s2275 = scalar_lea.vmem [#allocation6], 216
        %v2276 = vld [vmem:[%s2275] sm:$0xff]
        %v2277 = vld [vmem:[%s2275 + $0x8] sm:$0xff]
        %v2278 = vld [vmem:[%s2275 + $0x10] sm:$0xff]
        %v2279 = vld [vmem:[%s2275 + $0x18] sm:$0xff]
        %v2280 = vld [vmem:[%s2275 + $0x20] sm:$0xff]
        %v2281 = vld [vmem:[%s2275 + $0x28] sm:$0xff]
        %v2282 = vld [vmem:[%s2275 + $0x30] sm:$0xff]
        %v2283 = vld [vmem:[%s2275 + $0x38] sm:$0xff]
        %v2284 = vld [vmem:[%s2275 + $0x40] sm:$0xff]
        %2285 = vmatprep.subr.mxu0 0.0
        %2286 = vmatpush1.msra.mxu0 %v2276
        %2287 = vmatprep.subr.mxu0 0.0
        %2288 = vmatpush1.msra.mxu0 %v2277
        %2289 = vmatprep.subr.mxu0 0.0
        %2290 = vmatpush1.msra.mxu0 %v2278
        %2291 = vmatprep.subr.mxu0 0.0
        %2292 = vmatpush1.msra.mxu0 %v2279
        %2293 = vmatprep.subr.mxu0 0.0
        %2294 = vmatpush1.msra.mxu0 %v2280
        %2295 = vmatprep.subr.mxu0 0.0
        %2296 = vmatpush1.msra.mxu0 %v2281
        %2297 = vmatprep.subr.mxu0 0.0
        %2298 = vmatpush1.msra.mxu0 %v2282
        %2299 = vmatprep.subr.mxu0 0.0
        %2300 = vmatpush1.msra.mxu0 %v2283
        %2301 = vmatprep.subr.mxu0 0.0
        %2302 = vmatpush1.msra.mxu0 %v2284
        %2303 = vmatprep.subr.mxu0 0.0
        %2304 = vmatpush1.msra.mxu0 0.0
        %2305 = vmatprep.subr.mxu0 0.0
        %2306 = vmatpush1.msra.mxu0 0.0
        %2307 = vmatprep.subr.mxu0 0.0
        %2308 = vmatpush1.msra.mxu0 0.0
        %2309 = vmatprep.subr.mxu0 0.0
        %2310 = vmatpush1.msra.mxu0 0.0
        %2311 = vmatprep.subr.mxu0 0.0
        %2312 = vmatpush1.msra.mxu0 0.0
        %2313 = vmatprep.subr.mxu0 0.0
        %2314 = vmatpush1.msra.mxu0 0.0
        %2315 = vmatprep.subr.mxu0 0.0
        %2316 = vmatpush1.msra.mxu0 0.0
        %2317 = vmatprep.subr.mxu0 0.0
        %2318 = vmatpush1.msra.mxu0 0.0
        %2319 = vmatprep.subr.mxu0 0.0
        %2320 = vmatpush1.msra.mxu0 0.0
        %2321 = vmatprep.subr.mxu0 0.0
        %2322 = vmatpush1.msra.mxu0 0.0
        %2323 = vmatprep.subr.mxu0 0.0
        %2324 = vmatpush1.msra.mxu0 0.0
        %2325 = vmatprep.subr.mxu0 0.0
        %2326 = vmatpush1.msra.mxu0 0.0
        %2327 = vmatprep.subr.mxu0 0.0
        %2328 = vmatpush1.msra.mxu0 0.0
        %2329 = vmatprep.subr.mxu0 0.0
        %2330 = vmatpush1.msra.mxu0 0.0
        %2331 = vmatprep.subr.mxu0 0.0
        %2332 = vmatpush1.msra.mxu0 0.0
        %2333 = vmatprep.subr.mxu0 0.0
        %2334 = vmatpush1.msra.mxu0 0.0
        %2335 = vmatprep.subr.mxu0 0.0
        %2336 = vmatpush1.msra.mxu0 0.0
        %2337 = vmatprep.subr.mxu0 0.0
        %2338 = vmatpush1.msra.mxu0 0.0
        %2339 = vmatprep.subr.mxu0 0.0
        %2340 = vmatpush1.msra.mxu0 0.0
        %2341 = vmatprep.subr.mxu0 0.0
        %2342 = vmatpush1.msra.mxu0 0.0
        %2343 = vmatprep.subr.mxu0 0.0
        %2344 = vmatpush1.msra.mxu0 0.0
        %2345 = vmatprep.subr.mxu0 0.0
        %2346 = vmatpush1.msra.mxu0 0.0
        %2347 = vmatprep.subr.mxu0 0.0
        %2348 = vmatpush1.msra.mxu0 0.0
        %2349 = vmatprep.mubr.f32.mxu0 0.0
        %2350 = vmatmul.mubr.f32.gmra.mrb[0].mxu0 %v2039
        %v2351 = vpop.f32.mrb[0].mxu0
        %v2352 = vpop.f32.mrb[0].mxu0
        %2353 = vmatprep.mubr.f32.mxu0 0.0
        %2354 = vmatmul.mubr.f32.gmra.mrb[0].mxu0 %v2042
        %v2355 = vpop.f32.mrb[0].mxu0
        %v2356 = vpop.f32.mrb[0].mxu0
        %2357 = vmatprep.mubr.f32.mxu0 0.0
        %2358 = vmatmul.mubr.f32.gmra.mrb[0].mxu0 %v2045
        %v2359 = vpop.f32.mrb[0].mxu0
        %v2360 = vadd.f32 0.0, %v2359
        %v2361 = vpop.f32.mrb[0].mxu0
        %2362 = vmatprep.mubr.f32.mxu0 0.0
        %2363 = vmatmul.mubr.f32.gmra.mrb[0].mxu0 %v2048
        %v2364 = vpop.f32.mrb[0].mxu0
        %v2365 = vadd.f32 0.0, %v2364
        %v2366 = vpop.f32.mrb[0].mxu0
        %2367 = vmatprep.mubr.f32.mxu0 0.0
        %2368 = vmatmul.mubr.f32.gmra.mrb[0].mxu0 %v2051
        %v2369 = vpop.f32.mrb[0].mxu0
        %v2370 = vadd.f32 0.0, %v2369
        %v2371 = vpop.f32.mrb[0].mxu0
        %2372 = vmatprep.mubr.f32.mxu0 0.0
        %2373 = vmatmul.mubr.f32.gmra.mrb[0].mxu0 %v2054
        %v2374 = vpop.f32.mrb[0].mxu0
        %v2375 = vadd.f32 0.0, %v2374
        %v2376 = vpop.f32.mrb[0].mxu0
        %2377 = vmatprep.mubr.f32.mxu0 0.0
        %2378 = vmatmul.mubr.f32.gmra.mrb[0].mxu0 %v2057
        %v2379 = vpop.f32.mrb[0].mxu0
        %v2380 = vadd.f32 0.0, %v2379
        %v2381 = vpop.f32.mrb[0].mxu0
        %2382 = vmatprep.mubr.f32.mxu0 0.0
        %2383 = vmatmul.mubr.f32.gmra.mrb[0].mxu0 %v2060
        %v2384 = vpop.f32.mrb[0].mxu0
        %v2385 = vadd.f32 0.0, %v2384
        %v2386 = vpop.f32.mrb[0].mxu0
        %2387 = vmatprep.mubr.f32.mxu0 0.0
        %2388 = vmatmul.mubr.f32.gmra.mrb[0].mxu0 %v2063
        %v2389 = vpop.f32.mrb[0].mxu0
        %v2390 = vadd.f32 0.0, %v2389
        %v2391 = vpop.f32.mrb[0].mxu0
        %2392 = vmatprep.mubr.f32.mxu0 0.0
        %2393 = vmatmul.mubr.f32.gmra.mrb[0].mxu0 %v2066
        %v2394 = vpop.f32.mrb[0].mxu0
        %v2395 = vadd.f32 0.0, %v2394
        %v2396 = vpop.f32.mrb[0].mxu0
        %2397 = vmatprep.mubr.f32.mxu0 0.0
        %2398 = vmatmul.mubr.f32.gmra.mrb[0].mxu0 %v2069
        %v2399 = vpop.f32.mrb[0].mxu0
        %v2400 = vadd.f32 0.0, %v2399
        %v2401 = vpop.f32.mrb[0].mxu0
        %2402 = vmatprep.mubr.f32.mxu0 0.0
        %2403 = vmatmul.mubr.f32.gmra.mrb[0].mxu0 %v2072
        %v2404 = vpop.f32.mrb[0].mxu0
        %v2405 = vadd.f32 0.0, %v2404
        %v2406 = vpop.f32.mrb[0].mxu0
        %2407 = vmatprep.mubr.f32.mxu0 0.0
        %2408 = vmatmul.mubr.f32.gmra.mrb[0].mxu0 %v2075
        %v2409 = vpop.f32.mrb[0].mxu0
        %v2410 = vadd.f32 0.0, %v2409
        %v2411 = vpop.f32.mrb[0].mxu0
        %2412 = vmatprep.mubr.f32.mxu0 0.0
        %2413 = vmatmul.mubr.f32.gmra.mrb[0].mxu0 %v2078
        %v2414 = vpop.f32.mrb[0].mxu0
        %v2415 = vadd.f32 0.0, %v2414
        %v2416 = vpop.f32.mrb[0].mxu0
        %2417 = vmatprep.mubr.f32.mxu0 0.0
        %2418 = vmatmul.mubr.f32.gmra.mrb[0].mxu0 %v2081
        %v2419 = vpop.f32.mrb[0].mxu0
        %v2420 = vadd.f32 0.0, %v2419
        %v2421 = vpop.f32.mrb[0].mxu0
        %2422 = vmatprep.mubr.f32.mxu0 0.0
        %2423 = vmatmul.mubr.f32.gmra.mrb[0].mxu0 %v2084
        %v2424 = vpop.f32.mrb[0].mxu0
        %v2425 = vadd.f32 0.0, %v2424
        %v2426 = vpop.f32.mrb[0].mxu0
        %2427 = vmatprep.mubr.f32.mxu0 0.0
        %2428 = vmatmul.mubr.f32.gmra.mrb[0].mxu0 %v2087
        %v2429 = vpop.f32.mrb[0].mxu0
        %v2430 = vadd.f32 0.0, %v2429
        %v2431 = vpop.f32.mrb[0].mxu0
        %2432 = vmatprep.mubr.f32.mxu0 0.0
        %2433 = vmatmul.mubr.f32.gmra.mrb[0].mxu0 %v2090
        %v2434 = vpop.f32.mrb[0].mxu0
        %v2435 = vadd.f32 0.0, %v2434
        %v2436 = vpop.f32.mrb[0].mxu0
        %2437 = vmatprep.mubr.f32.mxu0 0.0
        %2438 = vmatmul.mubr.f32.gmra.mrb[0].mxu0 %v2093
        %v2439 = vpop.f32.mrb[0].mxu0
        %v2440 = vpop.f32.mrb[0].mxu0
        %2441 = vmatprep.mubr.f32.mxu0 0.0
        %2442 = vmatmul.mubr.f32.gmra.mrb[0].mxu0 %v2096
        %v2443 = vpop.f32.mrb[0].mxu0
        %v2444 = vpop.f32.mrb[0].mxu0
        %2445 = vdwg.mxu0
        %v2446 = vadd.f32 %v2259, %v2360
        %v2447 = vadd.f32 %v2260, %v2365
        %v2448 = vadd.f32 %v2261, %v2370
        %v2449 = vadd.f32 %v2262, %v2375
        %v2450 = vadd.f32 %v2263, %v2380
        %v2451 = vadd.f32 %v2264, %v2385
        %v2452 = vadd.f32 %v2265, %v2390
        %v2453 = vadd.f32 %v2266, %v2395
        %v2454 = vadd.f32 %v2267, %v2400
        %v2455 = vadd.f32 %v2268, %v2405
        %v2456 = vadd.f32 %v2269, %v2410
        %v2457 = vadd.f32 %v2270, %v2415
        %v2458 = vadd.f32 %v2271, %v2420
        %v2459 = vadd.f32 %v2272, %v2425
        %v2460 = vadd.f32 %v2273, %v2430
        %v2461 = vadd.f32 %v2274, %v2435
        %s2462 = scalar_lea.vmem [#allocation6], 432
        %v2463 = vld [vmem:[%s2462] sm:$0xff]
        %v2464 = vld [vmem:[%s2462 + $0x8] sm:$0xff]
        %v2465 = vld [vmem:[%s2462 + $0x10] sm:$0xff]
        %v2466 = vld [vmem:[%s2462 + $0x18] sm:$0xff]
        %v2467 = vld [vmem:[%s2462 + $0x20] sm:$0xff]
        %v2468 = vld [vmem:[%s2462 + $0x28] sm:$0xff]
        %v2469 = vld [vmem:[%s2462 + $0x30] sm:$0xff]
        %v2470 = vld [vmem:[%s2462 + $0x38] sm:$0xff]
        %v2471 = vld [vmem:[%s2462 + $0x40] sm:$0xff]
        %2472 = vmatprep.subr.mxu0 0.0
        %2473 = vmatpush1.msra.mxu0 %v2463
        %2474 = vmatprep.subr.mxu0 0.0
        %2475 = vmatpush1.msra.mxu0 %v2464
        %2476 = vmatprep.subr.mxu0 0.0
        %2477 = vmatpush1.msra.mxu0 %v2465
        %2478 = vmatprep.subr.mxu0 0.0
        %2479 = vmatpush1.msra.mxu0 %v2466
        %2480 = vmatprep.subr.mxu0 0.0
        %2481 = vmatpush1.msra.mxu0 %v2467
        %2482 = vmatprep.subr.mxu0 0.0
        %2483 = vmatpush1.msra.mxu0 %v2468
        %2484 = vmatprep.subr.mxu0 0.0
        %2485 = vmatpush1.msra.mxu0 %v2469
        %2486 = vmatprep.subr.mxu0 0.0
        %2487 = vmatpush1.msra.mxu0 %v2470
        %2488 = vmatprep.subr.mxu0 0.0
        %2489 = vmatpush1.msra.mxu0 %v2471
        %2490 = vmatprep.subr.mxu0 0.0
        %2491 = vmatpush1.msra.mxu0 0.0
        %2492 = vmatprep.subr.mxu0 0.0
        %2493 = vmatpush1.msra.mxu0 0.0
        %2494 = vmatprep.subr.mxu0 0.0
        %2495 = vmatpush1.msra.mxu0 0.0
        %2496 = vmatprep.subr.mxu0 0.0
        %2497 = vmatpush1.msra.mxu0 0.0
        %2498 = vmatprep.subr.mxu0 0.0
        %2499 = vmatpush1.msra.mxu0 0.0
        %2500 = vmatprep.subr.mxu0 0.0
        %2501 = vmatpush1.msra.mxu0 0.0
        %2502 = vmatprep.subr.mxu0 0.0
        %2503 = vmatpush1.msra.mxu0 0.0
        %2504 = vmatprep.subr.mxu0 0.0
        %2505 = vmatpush1.msra.mxu0 0.0
        %2506 = vmatprep.subr.mxu0 0.0
        %2507 = vmatpush1.msra.mxu0 0.0
        %2508 = vmatprep.subr.mxu0 0.0
        %2509 = vmatpush1.msra.mxu0 0.0
        %2510 = vmatprep.subr.mxu0 0.0
        %2511 = vmatpush1.msra.mxu0 0.0
        %2512 = vmatprep.subr.mxu0 0.0
        %2513 = vmatpush1.msra.mxu0 0.0
        %2514 = vmatprep.subr.mxu0 0.0
        %2515 = vmatpush1.msra.mxu0 0.0
        %2516 = vmatprep.subr.mxu0 0.0
        %2517 = vmatpush1.msra.mxu0 0.0
        %2518 = vmatprep.subr.mxu0 0.0
        %2519 = vmatpush1.msra.mxu0 0.0
        %2520 = vmatprep.subr.mxu0 0.0
        %2521 = vmatpush1.msra.mxu0 0.0
        %2522 = vmatprep.subr.mxu0 0.0
        %2523 = vmatpush1.msra.mxu0 0.0
        %2524 = vmatprep.subr.mxu0 0.0
        %2525 = vmatpush1.msra.mxu0 0.0
        %2526 = vmatprep.subr.mxu0 0.0
        %2527 = vmatpush1.msra.mxu0 0.0
        %2528 = vmatprep.subr.mxu0 0.0
        %2529 = vmatpush1.msra.mxu0 0.0
        %2530 = vmatprep.subr.mxu0 0.0
        %2531 = vmatpush1.msra.mxu0 0.0
        %2532 = vmatprep.subr.mxu0 0.0
        %2533 = vmatpush1.msra.mxu0 0.0
        %2534 = vmatprep.subr.mxu0 0.0
        %2535 = vmatpush1.msra.mxu0 0.0
        %2536 = vmatprep.mubr.f32.mxu0 0.0
        %2537 = vmatmul.mubr.f32.gmra.mrb[0].mxu0 %v2039
        %v2538 = vpop.f32.mrb[0].mxu0
        %v2539 = vpop.f32.mrb[0].mxu0
        %2540 = vmatprep.mubr.f32.mxu0 0.0
        %2541 = vmatmul.mubr.f32.gmra.mrb[0].mxu0 %v2042
        %v2542 = vpop.f32.mrb[0].mxu0
        %v2543 = vpop.f32.mrb[0].mxu0
        %2544 = vmatprep.mubr.f32.mxu0 0.0
        %2545 = vmatmul.mubr.f32.gmra.mrb[0].mxu0 %v2045
        %v2546 = vpop.f32.mrb[0].mxu0
        %v2547 = vpop.f32.mrb[0].mxu0
        %2548 = vmatprep.mubr.f32.mxu0 0.0
        %2549 = vmatmul.mubr.f32.gmra.mrb[0].mxu0 %v2048
        %v2550 = vpop.f32.mrb[0].mxu0
        %v2551 = vpop.f32.mrb[0].mxu0
        %2552 = vmatprep.mubr.f32.mxu0 0.0
        %2553 = vmatmul.mubr.f32.gmra.mrb[0].mxu0 %v2051
        %v2554 = vpop.f32.mrb[0].mxu0
        %v2555 = vadd.f32 0.0, %v2554
        %v2556 = vpop.f32.mrb[0].mxu0
        %2557 = vmatprep.mubr.f32.mxu0 0.0
        %2558 = vmatmul.mubr.f32.gmra.mrb[0].mxu0 %v2054
        %v2559 = vpop.f32.mrb[0].mxu0
        %v2560 = vadd.f32 0.0, %v2559
        %v2561 = vpop.f32.mrb[0].mxu0
        %2562 = vmatprep.mubr.f32.mxu0 0.0
        %2563 = vmatmul.mubr.f32.gmra.mrb[0].mxu0 %v2057
        %v2564 = vpop.f32.mrb[0].mxu0
        %v2565 = vadd.f32 0.0, %v2564
        %v2566 = vpop.f32.mrb[0].mxu0
        %2567 = vmatprep.mubr.f32.mxu0 0.0
        %2568 = vmatmul.mubr.f32.gmra.mrb[0].mxu0 %v2060
        %v2569 = vpop.f32.mrb[0].mxu0
        %v2570 = vadd.f32 0.0, %v2569
        %v2571 = vpop.f32.mrb[0].mxu0
        %2572 = vmatprep.mubr.f32.mxu0 0.0
        %2573 = vmatmul.mubr.f32.gmra.mrb[0].mxu0 %v2063
        %v2574 = vpop.f32.mrb[0].mxu0
        %v2575 = vadd.f32 0.0, %v2574
        %v2576 = vpop.f32.mrb[0].mxu0
        %2577 = vmatprep.mubr.f32.mxu0 0.0
        %2578 = vmatmul.mubr.f32.gmra.mrb[0].mxu0 %v2066
        %v2579 = vpop.f32.mrb[0].mxu0
        %v2580 = vadd.f32 0.0, %v2579
        %v2581 = vpop.f32.mrb[0].mxu0
        %2582 = vmatprep.mubr.f32.mxu0 0.0
        %2583 = vmatmul.mubr.f32.gmra.mrb[0].mxu0 %v2069
        %v2584 = vpop.f32.mrb[0].mxu0
        %v2585 = vadd.f32 0.0, %v2584
        %v2586 = vpop.f32.mrb[0].mxu0
        %2587 = vmatprep.mubr.f32.mxu0 0.0
        %2588 = vmatmul.mubr.f32.gmra.mrb[0].mxu0 %v2072
        %v2589 = vpop.f32.mrb[0].mxu0
        %v2590 = vadd.f32 0.0, %v2589
        %v2591 = vpop.f32.mrb[0].mxu0
        %2592 = vmatprep.mubr.f32.mxu0 0.0
        %2593 = vmatmul.mubr.f32.gmra.mrb[0].mxu0 %v2075
        %v2594 = vpop.f32.mrb[0].mxu0
        %v2595 = vadd.f32 0.0, %v2594
        %v2596 = vpop.f32.mrb[0].mxu0
        %2597 = vmatprep.mubr.f32.mxu0 0.0
        %2598 = vmatmul.mubr.f32.gmra.mrb[0].mxu0 %v2078
        %v2599 = vpop.f32.mrb[0].mxu0
        %v2600 = vadd.f32 0.0, %v2599
        %v2601 = vpop.f32.mrb[0].mxu0
        %2602 = vmatprep.mubr.f32.mxu0 0.0
        %2603 = vmatmul.mubr.f32.gmra.mrb[0].mxu0 %v2081
        %v2604 = vpop.f32.mrb[0].mxu0
        %v2605 = vadd.f32 0.0, %v2604
        %v2606 = vpop.f32.mrb[0].mxu0
        %2607 = vmatprep.mubr.f32.mxu0 0.0
        %2608 = vmatmul.mubr.f32.gmra.mrb[0].mxu0 %v2084
        %v2609 = vpop.f32.mrb[0].mxu0
        %v2610 = vadd.f32 0.0, %v2609
        %v2611 = vpop.f32.mrb[0].mxu0
        %2612 = vmatprep.mubr.f32.mxu0 0.0
        %2613 = vmatmul.mubr.f32.gmra.mrb[0].mxu0 %v2087
        %v2614 = vpop.f32.mrb[0].mxu0
        %v2615 = vadd.f32 0.0, %v2614
        %v2616 = vpop.f32.mrb[0].mxu0
        %2617 = vmatprep.mubr.f32.mxu0 0.0
        %2618 = vmatmul.mubr.f32.gmra.mrb[0].mxu0 %v2090
        %v2619 = vpop.f32.mrb[0].mxu0
        %v2620 = vadd.f32 0.0, %v2619
        %v2621 = vpop.f32.mrb[0].mxu0
        %2622 = vmatprep.mubr.f32.mxu0 0.0
        %2623 = vmatmul.mubr.f32.gmra.mrb[0].mxu0 %v2093
        %v2624 = vpop.f32.mrb[0].mxu0
        %v2625 = vadd.f32 0.0, %v2624
        %v2626 = vpop.f32.mrb[0].mxu0
        %2627 = vmatprep.mubr.f32.mxu0 0.0
        %2628 = vmatmul.mubr.f32.gmra.mrb[0].mxu0 %v2096
        %v2629 = vpop.f32.mrb[0].mxu0
        %v2630 = vadd.f32 0.0, %v2629
        %v2631 = vpop.f32.mrb[0].mxu0
        %2632 = vdwg.mxu0
        %v2633 = vadd.f32 %v2446, %v2555
        %v2634 = vadd.f32 %v2447, %v2560
        %v2635 = vadd.f32 %v2448, %v2565
        %v2636 = vadd.f32 %v2449, %v2570
        %v2637 = vadd.f32 %v2450, %v2575
        %v2638 = vadd.f32 %v2451, %v2580
        %v2639 = vadd.f32 %v2452, %v2585
        %v2640 = vadd.f32 %v2453, %v2590
        %v2641 = vadd.f32 %v2454, %v2595
        %v2642 = vadd.f32 %v2455, %v2600
        %v2643 = vadd.f32 %v2456, %v2605
        %v2644 = vadd.f32 %v2457, %v2610
        %v2645 = vadd.f32 %v2458, %v2615
        %v2646 = vadd.f32 %v2459, %v2620
        %v2647 = vadd.f32 %v2460, %v2625
        %v2648 = vadd.f32 %v2461, %v2630
        %v2649 = vld [vmem:[#allocation2 + $0x1] sm:$0xff]
        %v2650 = vld [vmem:[#allocation2 + $0x9] sm:$0xff]
        %v2651 = vld [vmem:[#allocation2 + $0x19] sm:$0xff]
        %v2652 = vld [vmem:[#allocation2 + $0x21] sm:$0xff]
        %v2653 = vld [vmem:[#allocation2 + $0x31] sm:$0xff]
        %v2654 = vld [vmem:[#allocation2 + $0x39] sm:$0xff]
        %v2655 = vld [vmem:[#allocation2 + $0x49] sm:$0xff]
        %v2656 = vld [vmem:[#allocation2 + $0x51] sm:$0xff]
        %v2657 = vld [vmem:[#allocation2 + $0x61] sm:$0xff]
        %v2658 = vld [vmem:[#allocation2 + $0x69] sm:$0xff]
        %v2659 = vld [vmem:[#allocation2 + $0x79] sm:$0xff]
        %v2660 = vld [vmem:[#allocation2 + $0x81] sm:$0xff]
        %v2661 = vld [vmem:[#allocation2 + $0x91] sm:$0xff]
        %v2662 = vld [vmem:[#allocation2 + $0x99] sm:$0xff]
        %v2663 = vld [vmem:[#allocation2 + $0xa9] sm:$0xff]
        %v2664 = vld [vmem:[#allocation2 + $0xb1] sm:$0xff]
        %v2665 = vld [vmem:[#allocation2 + $0xc1] sm:$0xff]
        %v2666 = vld [vmem:[#allocation2 + $0xc9] sm:$0xff]
        %v2667 = vld [vmem:[#allocation2 + $0xd9] sm:$0xff]
        %v2668 = vld [vmem:[#allocation2 + $0xe1] sm:$0xff]
        %s2669 = scalar_lea.vmem [#allocation6], 72
        %v2670 = vld [vmem:[%s2669] sm:$0xff]
        %v2671 = vld [vmem:[%s2669 + $0x8] sm:$0xff]
        %v2672 = vld [vmem:[%s2669 + $0x10] sm:$0xff]
        %v2673 = vld [vmem:[%s2669 + $0x18] sm:$0xff]
        %v2674 = vld [vmem:[%s2669 + $0x20] sm:$0xff]
        %v2675 = vld [vmem:[%s2669 + $0x28] sm:$0xff]
        %v2676 = vld [vmem:[%s2669 + $0x30] sm:$0xff]
        %v2677 = vld [vmem:[%s2669 + $0x38] sm:$0xff]
        %v2678 = vld [vmem:[%s2669 + $0x40] sm:$0xff]
        %v2680 = vsel %vm471, %v2649, 0
        %v2683 = vsel %vm471, %v2650, 0
        %v2686 = vsel %vm471, %v2651, 0
        %v2689 = vsel %vm471, %v2652, 0
        %v2692 = vsel %vm471, %v2653, 0
        %v2695 = vsel %vm471, %v2654, 0
        %v2698 = vsel %vm471, %v2655, 0
        %v2701 = vsel %vm471, %v2656, 0
        %v2704 = vsel %vm471, %v2657, 0
        %v2707 = vsel %vm471, %v2658, 0
        %v2710 = vsel %vm471, %v2659, 0
        %v2713 = vsel %vm471, %v2660, 0
        %v2716 = vsel %vm471, %v2661, 0
        %v2719 = vsel %vm471, %v2662, 0
        %v2722 = vsel %vm471, %v2663, 0
        %v2725 = vsel %vm471, %v2664, 0
        %v2728 = vsel %vm471, %v2665, 0
        %v2731 = vsel %vm471, %v2666, 0
        %v2734 = vsel %vm471, %v2667, 0
        %v2737 = vsel %vm471, %v2668, 0
        %2739 = vmatprep.subr.mxu0 0.0
        %2740 = vmatpush1.msra.mxu0 %v2670
        %2741 = vmatprep.subr.mxu0 0.0
        %2742 = vmatpush1.msra.mxu0 %v2671
        %2743 = vmatprep.subr.mxu0 0.0
        %2744 = vmatpush1.msra.mxu0 %v2672
        %2745 = vmatprep.subr.mxu0 0.0
        %2746 = vmatpush1.msra.mxu0 %v2673
        %2747 = vmatprep.subr.mxu0 0.0
        %2748 = vmatpush1.msra.mxu0 %v2674
        %2749 = vmatprep.subr.mxu0 0.0
        %2750 = vmatpush1.msra.mxu0 %v2675
        %2751 = vmatprep.subr.mxu0 0.0
        %2752 = vmatpush1.msra.mxu0 %v2676
        %2753 = vmatprep.subr.mxu0 0.0
        %2754 = vmatpush1.msra.mxu0 %v2677
        %2755 = vmatprep.subr.mxu0 0.0
        %2756 = vmatpush1.msra.mxu0 %v2678
        %2757 = vmatprep.subr.mxu0 0.0
        %2758 = vmatpush1.msra.mxu0 0.0
        %2759 = vmatprep.subr.mxu0 0.0
        %2760 = vmatpush1.msra.mxu0 0.0
        %2761 = vmatprep.subr.mxu0 0.0
        %2762 = vmatpush1.msra.mxu0 0.0
        %2763 = vmatprep.subr.mxu0 0.0
        %2764 = vmatpush1.msra.mxu0 0.0
        %2765 = vmatprep.subr.mxu0 0.0
        %2766 = vmatpush1.msra.mxu0 0.0
        %2767 = vmatprep.subr.mxu0 0.0
        %2768 = vmatpush1.msra.mxu0 0.0
        %2769 = vmatprep.subr.mxu0 0.0
        %2770 = vmatpush1.msra.mxu0 0.0
        %2771 = vmatprep.subr.mxu0 0.0
        %2772 = vmatpush1.msra.mxu0 0.0
        %2773 = vmatprep.subr.mxu0 0.0
        %2774 = vmatpush1.msra.mxu0 0.0
        %2775 = vmatprep.subr.mxu0 0.0
        %2776 = vmatpush1.msra.mxu0 0.0
        %2777 = vmatprep.subr.mxu0 0.0
        %2778 = vmatpush1.msra.mxu0 0.0
        %2779 = vmatprep.subr.mxu0 0.0
        %2780 = vmatpush1.msra.mxu0 0.0
        %2781 = vmatprep.subr.mxu0 0.0
        %2782 = vmatpush1.msra.mxu0 0.0
        %2783 = vmatprep.subr.mxu0 0.0
        %2784 = vmatpush1.msra.mxu0 0.0
        %2785 = vmatprep.subr.mxu0 0.0
        %2786 = vmatpush1.msra.mxu0 0.0
        %2787 = vmatprep.subr.mxu0 0.0
        %2788 = vmatpush1.msra.mxu0 0.0
        %2789 = vmatprep.subr.mxu0 0.0
        %2790 = vmatpush1.msra.mxu0 0.0
        %2791 = vmatprep.subr.mxu0 0.0
        %2792 = vmatpush1.msra.mxu0 0.0
        %2793 = vmatprep.subr.mxu0 0.0
        %2794 = vmatpush1.msra.mxu0 0.0
        %2795 = vmatprep.subr.mxu0 0.0
        %2796 = vmatpush1.msra.mxu0 0.0
        %2797 = vmatprep.subr.mxu0 0.0
        %2798 = vmatpush1.msra.mxu0 0.0
        %2799 = vmatprep.subr.mxu0 0.0
        %2800 = vmatpush1.msra.mxu0 0.0
        %2801 = vmatprep.subr.mxu0 0.0
        %2802 = vmatpush1.msra.mxu0 0.0
        %2803 = vmatprep.mubr.f32.mxu0 0.0
        %2804 = vmatmul.mubr.f32.gmra.mrb[0].mxu0 %v2680
        %v2805 = vpop.f32.mrb[0].mxu0
        %v2806 = vadd.f32 0.0, %v2805
        %v2807 = vpop.f32.mrb[0].mxu0
        %2808 = vmatprep.mubr.f32.mxu0 0.0
        %2809 = vmatmul.mubr.f32.gmra.mrb[0].mxu0 %v2683
        %v2810 = vpop.f32.mrb[0].mxu0
        %v2811 = vadd.f32 0.0, %v2810
        %v2812 = vpop.f32.mrb[0].mxu0
        %2813 = vmatprep.mubr.f32.mxu0 0.0
        %2814 = vmatmul.mubr.f32.gmra.mrb[0].mxu0 %v2686
        %v2815 = vpop.f32.mrb[0].mxu0
        %v2816 = vadd.f32 0.0, %v2815
        %v2817 = vpop.f32.mrb[0].mxu0
        %2818 = vmatprep.mubr.f32.mxu0 0.0
        %2819 = vmatmul.mubr.f32.gmra.mrb[0].mxu0 %v2689
        %v2820 = vpop.f32.mrb[0].mxu0
        %v2821 = vadd.f32 0.0, %v2820
        %v2822 = vpop.f32.mrb[0].mxu0
        %2823 = vmatprep.mubr.f32.mxu0 0.0
        %2824 = vmatmul.mubr.f32.gmra.mrb[0].mxu0 %v2692
        %v2825 = vpop.f32.mrb[0].mxu0
        %v2826 = vadd.f32 0.0, %v2825
        %v2827 = vpop.f32.mrb[0].mxu0
        %2828 = vmatprep.mubr.f32.mxu0 0.0
        %2829 = vmatmul.mubr.f32.gmra.mrb[0].mxu0 %v2695
        %v2830 = vpop.f32.mrb[0].mxu0
        %v2831 = vadd.f32 0.0, %v2830
        %v2832 = vpop.f32.mrb[0].mxu0
        %2833 = vmatprep.mubr.f32.mxu0 0.0
        %2834 = vmatmul.mubr.f32.gmra.mrb[0].mxu0 %v2698
        %v2835 = vpop.f32.mrb[0].mxu0
        %v2836 = vadd.f32 0.0, %v2835
        %v2837 = vpop.f32.mrb[0].mxu0
        %2838 = vmatprep.mubr.f32.mxu0 0.0
        %2839 = vmatmul.mubr.f32.gmra.mrb[0].mxu0 %v2701
        %v2840 = vpop.f32.mrb[0].mxu0
        %v2841 = vadd.f32 0.0, %v2840
        %v2842 = vpop.f32.mrb[0].mxu0
        %2843 = vmatprep.mubr.f32.mxu0 0.0
        %2844 = vmatmul.mubr.f32.gmra.mrb[0].mxu0 %v2704
        %v2845 = vpop.f32.mrb[0].mxu0
        %v2846 = vadd.f32 0.0, %v2845
        %v2847 = vpop.f32.mrb[0].mxu0
        %2848 = vmatprep.mubr.f32.mxu0 0.0
        %2849 = vmatmul.mubr.f32.gmra.mrb[0].mxu0 %v2707
        %v2850 = vpop.f32.mrb[0].mxu0
        %v2851 = vadd.f32 0.0, %v2850
        %v2852 = vpop.f32.mrb[0].mxu0
        %2853 = vmatprep.mubr.f32.mxu0 0.0
        %2854 = vmatmul.mubr.f32.gmra.mrb[0].mxu0 %v2710
        %v2855 = vpop.f32.mrb[0].mxu0
        %v2856 = vadd.f32 0.0, %v2855
        %v2857 = vpop.f32.mrb[0].mxu0
        %2858 = vmatprep.mubr.f32.mxu0 0.0
        %2859 = vmatmul.mubr.f32.gmra.mrb[0].mxu0 %v2713
        %v2860 = vpop.f32.mrb[0].mxu0
        %v2861 = vadd.f32 0.0, %v2860
        %v2862 = vpop.f32.mrb[0].mxu0
        %2863 = vmatprep.mubr.f32.mxu0 0.0
        %2864 = vmatmul.mubr.f32.gmra.mrb[0].mxu0 %v2716
        %v2865 = vpop.f32.mrb[0].mxu0
        %v2866 = vadd.f32 0.0, %v2865
        %v2867 = vpop.f32.mrb[0].mxu0
        %2868 = vmatprep.mubr.f32.mxu0 0.0
        %2869 = vmatmul.mubr.f32.gmra.mrb[0].mxu0 %v2719
        %v2870 = vpop.f32.mrb[0].mxu0
        %v2871 = vadd.f32 0.0, %v2870
        %v2872 = vpop.f32.mrb[0].mxu0
        %2873 = vmatprep.mubr.f32.mxu0 0.0
        %2874 = vmatmul.mubr.f32.gmra.mrb[0].mxu0 %v2722
        %v2875 = vpop.f32.mrb[0].mxu0
        %v2876 = vadd.f32 0.0, %v2875
        %v2877 = vpop.f32.mrb[0].mxu0
        %2878 = vmatprep.mubr.f32.mxu0 0.0
        %2879 = vmatmul.mubr.f32.gmra.mrb[0].mxu0 %v2725
        %v2880 = vpop.f32.mrb[0].mxu0
        %v2881 = vadd.f32 0.0, %v2880
        %v2882 = vpop.f32.mrb[0].mxu0
        %2883 = vmatprep.mubr.f32.mxu0 0.0
        %2884 = vmatmul.mubr.f32.gmra.mrb[0].mxu0 %v2728
        %v2885 = vpop.f32.mrb[0].mxu0
        %v2886 = vpop.f32.mrb[0].mxu0
        %2887 = vmatprep.mubr.f32.mxu0 0.0
        %2888 = vmatmul.mubr.f32.gmra.mrb[0].mxu0 %v2731
        %v2889 = vpop.f32.mrb[0].mxu0
        %v2890 = vpop.f32.mrb[0].mxu0
        %2891 = vmatprep.mubr.f32.mxu0 0.0
        %2892 = vmatmul.mubr.f32.gmra.mrb[0].mxu0 %v2734
        %v2893 = vpop.f32.mrb[0].mxu0
        %v2894 = vpop.f32.mrb[0].mxu0
        %2895 = vmatprep.mubr.f32.mxu0 0.0
        %2896 = vmatmul.mubr.f32.gmra.mrb[0].mxu0 %v2737
        %v2897 = vpop.f32.mrb[0].mxu0
        %v2898 = vpop.f32.mrb[0].mxu0
        %2899 = vdwg.mxu0
        %v2900 = vadd.f32 %v2633, %v2806
        %v2901 = vadd.f32 %v2634, %v2811
        %v2902 = vadd.f32 %v2635, %v2816
        %v2903 = vadd.f32 %v2636, %v2821
        %v2904 = vadd.f32 %v2637, %v2826
        %v2905 = vadd.f32 %v2638, %v2831
        %v2906 = vadd.f32 %v2639, %v2836
        %v2907 = vadd.f32 %v2640, %v2841
        %v2908 = vadd.f32 %v2641, %v2846
        %v2909 = vadd.f32 %v2642, %v2851
        %v2910 = vadd.f32 %v2643, %v2856
        %v2911 = vadd.f32 %v2644, %v2861
        %v2912 = vadd.f32 %v2645, %v2866
        %v2913 = vadd.f32 %v2646, %v2871
        %v2914 = vadd.f32 %v2647, %v2876
        %v2915 = vadd.f32 %v2648, %v2881
        %s2916 = scalar_lea.vmem [#allocation6], 288
        %v2917 = vld [vmem:[%s2916] sm:$0xff]
        %v2918 = vld [vmem:[%s2916 + $0x8] sm:$0xff]
        %v2919 = vld [vmem:[%s2916 + $0x10] sm:$0xff]
        %v2920 = vld [vmem:[%s2916 + $0x18] sm:$0xff]
        %v2921 = vld [vmem:[%s2916 + $0x20] sm:$0xff]
        %v2922 = vld [vmem:[%s2916 + $0x28] sm:$0xff]
        %v2923 = vld [vmem:[%s2916 + $0x30] sm:$0xff]
        %v2924 = vld [vmem:[%s2916 + $0x38] sm:$0xff]
        %v2925 = vld [vmem:[%s2916 + $0x40] sm:$0xff]
        %2926 = vmatprep.subr.mxu0 0.0
        %2927 = vmatpush1.msra.mxu0 %v2917
        %2928 = vmatprep.subr.mxu0 0.0
        %2929 = vmatpush1.msra.mxu0 %v2918
        %2930 = vmatprep.subr.mxu0 0.0
        %2931 = vmatpush1.msra.mxu0 %v2919
        %2932 = vmatprep.subr.mxu0 0.0
        %2933 = vmatpush1.msra.mxu0 %v2920
        %2934 = vmatprep.subr.mxu0 0.0
        %2935 = vmatpush1.msra.mxu0 %v2921
        %2936 = vmatprep.subr.mxu0 0.0
        %2937 = vmatpush1.msra.mxu0 %v2922
        %2938 = vmatprep.subr.mxu0 0.0
        %2939 = vmatpush1.msra.mxu0 %v2923
        %2940 = vmatprep.subr.mxu0 0.0
        %2941 = vmatpush1.msra.mxu0 %v2924
        %2942 = vmatprep.subr.mxu0 0.0
        %2943 = vmatpush1.msra.mxu0 %v2925
        %2944 = vmatprep.subr.mxu0 0.0
        %2945 = vmatpush1.msra.mxu0 0.0
        %2946 = vmatprep.subr.mxu0 0.0
        %2947 = vmatpush1.msra.mxu0 0.0
        %2948 = vmatprep.subr.mxu0 0.0
        %2949 = vmatpush1.msra.mxu0 0.0
        %2950 = vmatprep.subr.mxu0 0.0
        %2951 = vmatpush1.msra.mxu0 0.0
        %2952 = vmatprep.subr.mxu0 0.0
        %2953 = vmatpush1.msra.mxu0 0.0
        %2954 = vmatprep.subr.mxu0 0.0
        %2955 = vmatpush1.msra.mxu0 0.0
        %2956 = vmatprep.subr.mxu0 0.0
        %2957 = vmatpush1.msra.mxu0 0.0
        %2958 = vmatprep.subr.mxu0 0.0
        %2959 = vmatpush1.msra.mxu0 0.0
        %2960 = vmatprep.subr.mxu0 0.0
        %2961 = vmatpush1.msra.mxu0 0.0
        %2962 = vmatprep.subr.mxu0 0.0
        %2963 = vmatpush1.msra.mxu0 0.0
        %2964 = vmatprep.subr.mxu0 0.0
        %2965 = vmatpush1.msra.mxu0 0.0
        %2966 = vmatprep.subr.mxu0 0.0
        %2967 = vmatpush1.msra.mxu0 0.0
        %2968 = vmatprep.subr.mxu0 0.0
        %2969 = vmatpush1.msra.mxu0 0.0
        %2970 = vmatprep.subr.mxu0 0.0
        %2971 = vmatpush1.msra.mxu0 0.0
        %2972 = vmatprep.subr.mxu0 0.0
        %2973 = vmatpush1.msra.mxu0 0.0
        %2974 = vmatprep.subr.mxu0 0.0
        %2975 = vmatpush1.msra.mxu0 0.0
        %2976 = vmatprep.subr.mxu0 0.0
        %2977 = vmatpush1.msra.mxu0 0.0
        %2978 = vmatprep.subr.mxu0 0.0
        %2979 = vmatpush1.msra.mxu0 0.0
        %2980 = vmatprep.subr.mxu0 0.0
        %2981 = vmatpush1.msra.mxu0 0.0
        %2982 = vmatprep.subr.mxu0 0.0
        %2983 = vmatpush1.msra.mxu0 0.0
        %2984 = vmatprep.subr.mxu0 0.0
        %2985 = vmatpush1.msra.mxu0 0.0
        %2986 = vmatprep.subr.mxu0 0.0
        %2987 = vmatpush1.msra.mxu0 0.0
        %2988 = vmatprep.subr.mxu0 0.0
        %2989 = vmatpush1.msra.mxu0 0.0
        %2990 = vmatprep.mubr.f32.mxu0 0.0
        %2991 = vmatmul.mubr.f32.gmra.mrb[0].mxu0 %v2680
        %v2992 = vpop.f32.mrb[0].mxu0
        %v2993 = vpop.f32.mrb[0].mxu0
        %2994 = vmatprep.mubr.f32.mxu0 0.0
        %2995 = vmatmul.mubr.f32.gmra.mrb[0].mxu0 %v2683
        %v2996 = vpop.f32.mrb[0].mxu0
        %v2997 = vpop.f32.mrb[0].mxu0
        %2998 = vmatprep.mubr.f32.mxu0 0.0
        %2999 = vmatmul.mubr.f32.gmra.mrb[0].mxu0 %v2686
        %v3000 = vpop.f32.mrb[0].mxu0
        %v3001 = vadd.f32 0.0, %v3000
        %v3002 = vpop.f32.mrb[0].mxu0
        %3003 = vmatprep.mubr.f32.mxu0 0.0
        %3004 = vmatmul.mubr.f32.gmra.mrb[0].mxu0 %v2689
        %v3005 = vpop.f32.mrb[0].mxu0
        %v3006 = vadd.f32 0.0, %v3005
        %v3007 = vpop.f32.mrb[0].mxu0
        %3008 = vmatprep.mubr.f32.mxu0 0.0
        %3009 = vmatmul.mubr.f32.gmra.mrb[0].mxu0 %v2692
        %v3010 = vpop.f32.mrb[0].mxu0
        %v3011 = vadd.f32 0.0, %v3010
        %v3012 = vpop.f32.mrb[0].mxu0
        %3013 = vmatprep.mubr.f32.mxu0 0.0
        %3014 = vmatmul.mubr.f32.gmra.mrb[0].mxu0 %v2695
        %v3015 = vpop.f32.mrb[0].mxu0
        %v3016 = vadd.f32 0.0, %v3015
        %v3017 = vpop.f32.mrb[0].mxu0
        %3018 = vmatprep.mubr.f32.mxu0 0.0
        %3019 = vmatmul.mubr.f32.gmra.mrb[0].mxu0 %v2698
        %v3020 = vpop.f32.mrb[0].mxu0
        %v3021 = vadd.f32 0.0, %v3020
        %v3022 = vpop.f32.mrb[0].mxu0
        %3023 = vmatprep.mubr.f32.mxu0 0.0
        %3024 = vmatmul.mubr.f32.gmra.mrb[0].mxu0 %v2701
        %v3025 = vpop.f32.mrb[0].mxu0
        %v3026 = vadd.f32 0.0, %v3025
        %v3027 = vpop.f32.mrb[0].mxu0
        %3028 = vmatprep.mubr.f32.mxu0 0.0
        %3029 = vmatmul.mubr.f32.gmra.mrb[0].mxu0 %v2704
        %v3030 = vpop.f32.mrb[0].mxu0
        %v3031 = vadd.f32 0.0, %v3030
        %v3032 = vpop.f32.mrb[0].mxu0
        %3033 = vmatprep.mubr.f32.mxu0 0.0
        %3034 = vmatmul.mubr.f32.gmra.mrb[0].mxu0 %v2707
        %v3035 = vpop.f32.mrb[0].mxu0
        %v3036 = vadd.f32 0.0, %v3035
        %v3037 = vpop.f32.mrb[0].mxu0
        %3038 = vmatprep.mubr.f32.mxu0 0.0
        %3039 = vmatmul.mubr.f32.gmra.mrb[0].mxu0 %v2710
        %v3040 = vpop.f32.mrb[0].mxu0
        %v3041 = vadd.f32 0.0, %v3040
        %v3042 = vpop.f32.mrb[0].mxu0
        %3043 = vmatprep.mubr.f32.mxu0 0.0
        %3044 = vmatmul.mubr.f32.gmra.mrb[0].mxu0 %v2713
        %v3045 = vpop.f32.mrb[0].mxu0
        %v3046 = vadd.f32 0.0, %v3045
        %v3047 = vpop.f32.mrb[0].mxu0
        %3048 = vmatprep.mubr.f32.mxu0 0.0
        %3049 = vmatmul.mubr.f32.gmra.mrb[0].mxu0 %v2716
        %v3050 = vpop.f32.mrb[0].mxu0
        %v3051 = vadd.f32 0.0, %v3050
        %v3052 = vpop.f32.mrb[0].mxu0
        %3053 = vmatprep.mubr.f32.mxu0 0.0
        %3054 = vmatmul.mubr.f32.gmra.mrb[0].mxu0 %v2719
        %v3055 = vpop.f32.mrb[0].mxu0
        %v3056 = vadd.f32 0.0, %v3055
        %v3057 = vpop.f32.mrb[0].mxu0
        %3058 = vmatprep.mubr.f32.mxu0 0.0
        %3059 = vmatmul.mubr.f32.gmra.mrb[0].mxu0 %v2722
        %v3060 = vpop.f32.mrb[0].mxu0
        %v3061 = vadd.f32 0.0, %v3060
        %v3062 = vpop.f32.mrb[0].mxu0
        %3063 = vmatprep.mubr.f32.mxu0 0.0
        %3064 = vmatmul.mubr.f32.gmra.mrb[0].mxu0 %v2725
        %v3065 = vpop.f32.mrb[0].mxu0
        %v3066 = vadd.f32 0.0, %v3065
        %v3067 = vpop.f32.mrb[0].mxu0
        %3068 = vmatprep.mubr.f32.mxu0 0.0
        %3069 = vmatmul.mubr.f32.gmra.mrb[0].mxu0 %v2728
        %v3070 = vpop.f32.mrb[0].mxu0
        %v3071 = vadd.f32 0.0, %v3070
        %v3072 = vpop.f32.mrb[0].mxu0
        %3073 = vmatprep.mubr.f32.mxu0 0.0
        %3074 = vmatmul.mubr.f32.gmra.mrb[0].mxu0 %v2731
        %v3075 = vpop.f32.mrb[0].mxu0
        %v3076 = vadd.f32 0.0, %v3075
        %v3077 = vpop.f32.mrb[0].mxu0
        %3078 = vmatprep.mubr.f32.mxu0 0.0
        %3079 = vmatmul.mubr.f32.gmra.mrb[0].mxu0 %v2734
        %v3080 = vpop.f32.mrb[0].mxu0
        %v3081 = vpop.f32.mrb[0].mxu0
        %3082 = vmatprep.mubr.f32.mxu0 0.0
        %3083 = vmatmul.mubr.f32.gmra.mrb[0].mxu0 %v2737
        %v3084 = vpop.f32.mrb[0].mxu0
        %v3085 = vpop.f32.mrb[0].mxu0
        %3086 = vdwg.mxu0
        %v3087 = vadd.f32 %v2900, %v3001
        %v3088 = vadd.f32 %v2901, %v3006
        %v3089 = vadd.f32 %v2902, %v3011
        %v3090 = vadd.f32 %v2903, %v3016
        %v3091 = vadd.f32 %v2904, %v3021
        %v3092 = vadd.f32 %v2905, %v3026
        %v3093 = vadd.f32 %v2906, %v3031
        %v3094 = vadd.f32 %v2907, %v3036
        %v3095 = vadd.f32 %v2908, %v3041
        %v3096 = vadd.f32 %v2909, %v3046
        %v3097 = vadd.f32 %v2910, %v3051
        %v3098 = vadd.f32 %v2911, %v3056
        %v3099 = vadd.f32 %v2912, %v3061
        %v3100 = vadd.f32 %v2913, %v3066
        %v3101 = vadd.f32 %v2914, %v3071
        %v3102 = vadd.f32 %v2915, %v3076
        %s3103 = scalar_lea.vmem [#allocation6], 504
        %v3104 = vld [vmem:[%s3103] sm:$0xff]
        %v3105 = vld [vmem:[%s3103 + $0x8] sm:$0xff]
        %v3106 = vld [vmem:[%s3103 + $0x10] sm:$0xff]
        %v3107 = vld [vmem:[%s3103 + $0x18] sm:$0xff]
        %v3108 = vld [vmem:[%s3103 + $0x20] sm:$0xff]
        %v3109 = vld [vmem:[%s3103 + $0x28] sm:$0xff]
        %v3110 = vld [vmem:[%s3103 + $0x30] sm:$0xff]
        %v3111 = vld [vmem:[%s3103 + $0x38] sm:$0xff]
        %v3112 = vld [vmem:[%s3103 + $0x40] sm:$0xff]
        %3113 = vmatprep.subr.mxu0 0.0
        %3114 = vmatpush1.msra.mxu0 %v3104
        %3115 = vmatprep.subr.mxu0 0.0
        %3116 = vmatpush1.msra.mxu0 %v3105
        %3117 = vmatprep.subr.mxu0 0.0
        %3118 = vmatpush1.msra.mxu0 %v3106
        %3119 = vmatprep.subr.mxu0 0.0
        %3120 = vmatpush1.msra.mxu0 %v3107
        %3121 = vmatprep.subr.mxu0 0.0
        %3122 = vmatpush1.msra.mxu0 %v3108
        %3123 = vmatprep.subr.mxu0 0.0
        %3124 = vmatpush1.msra.mxu0 %v3109
        %3125 = vmatprep.subr.mxu0 0.0
        %3126 = vmatpush1.msra.mxu0 %v3110
        %3127 = vmatprep.subr.mxu0 0.0
        %3128 = vmatpush1.msra.mxu0 %v3111
        %3129 = vmatprep.subr.mxu0 0.0
        %3130 = vmatpush1.msra.mxu0 %v3112
        %3131 = vmatprep.subr.mxu0 0.0
        %3132 = vmatpush1.msra.mxu0 0.0
        %3133 = vmatprep.subr.mxu0 0.0
        %3134 = vmatpush1.msra.mxu0 0.0
        %3135 = vmatprep.subr.mxu0 0.0
        %3136 = vmatpush1.msra.mxu0 0.0
        %3137 = vmatprep.subr.mxu0 0.0
        %3138 = vmatpush1.msra.mxu0 0.0
        %3139 = vmatprep.subr.mxu0 0.0
        %3140 = vmatpush1.msra.mxu0 0.0
        %3141 = vmatprep.subr.mxu0 0.0
        %3142 = vmatpush1.msra.mxu0 0.0
        %3143 = vmatprep.subr.mxu0 0.0
        %3144 = vmatpush1.msra.mxu0 0.0
        %3145 = vmatprep.subr.mxu0 0.0
        %3146 = vmatpush1.msra.mxu0 0.0
        %3147 = vmatprep.subr.mxu0 0.0
        %3148 = vmatpush1.msra.mxu0 0.0
        %3149 = vmatprep.subr.mxu0 0.0
        %3150 = vmatpush1.msra.mxu0 0.0
        %3151 = vmatprep.subr.mxu0 0.0
        %3152 = vmatpush1.msra.mxu0 0.0
        %3153 = vmatprep.subr.mxu0 0.0
        %3154 = vmatpush1.msra.mxu0 0.0
        %3155 = vmatprep.subr.mxu0 0.0
        %3156 = vmatpush1.msra.mxu0 0.0
        %3157 = vmatprep.subr.mxu0 0.0
        %3158 = vmatpush1.msra.mxu0 0.0
        %3159 = vmatprep.subr.mxu0 0.0
        %3160 = vmatpush1.msra.mxu0 0.0
        %3161 = vmatprep.subr.mxu0 0.0
        %3162 = vmatpush1.msra.mxu0 0.0
        %3163 = vmatprep.subr.mxu0 0.0
        %3164 = vmatpush1.msra.mxu0 0.0
        %3165 = vmatprep.subr.mxu0 0.0
        %3166 = vmatpush1.msra.mxu0 0.0
        %3167 = vmatprep.subr.mxu0 0.0
        %3168 = vmatpush1.msra.mxu0 0.0
        %3169 = vmatprep.subr.mxu0 0.0
        %3170 = vmatpush1.msra.mxu0 0.0
        %3171 = vmatprep.subr.mxu0 0.0
        %3172 = vmatpush1.msra.mxu0 0.0
        %3173 = vmatprep.subr.mxu0 0.0
        %3174 = vmatpush1.msra.mxu0 0.0
        %3175 = vmatprep.subr.mxu0 0.0
        %3176 = vmatpush1.msra.mxu0 0.0
        %3177 = vmatprep.mubr.f32.mxu0 0.0
        %3178 = vmatmul.mubr.f32.gmra.mrb[0].mxu0 %v2680
        %v3179 = vpop.f32.mrb[0].mxu0
        %v3180 = vpop.f32.mrb[0].mxu0
        %3181 = vmatprep.mubr.f32.mxu0 0.0
        %3182 = vmatmul.mubr.f32.gmra.mrb[0].mxu0 %v2683
        %v3183 = vpop.f32.mrb[0].mxu0
        %v3184 = vpop.f32.mrb[0].mxu0
        %3185 = vmatprep.mubr.f32.mxu0 0.0
        %3186 = vmatmul.mubr.f32.gmra.mrb[0].mxu0 %v2686
        %v3187 = vpop.f32.mrb[0].mxu0
        %v3188 = vpop.f32.mrb[0].mxu0
        %3189 = vmatprep.mubr.f32.mxu0 0.0
        %3190 = vmatmul.mubr.f32.gmra.mrb[0].mxu0 %v2689
        %v3191 = vpop.f32.mrb[0].mxu0
        %v3192 = vpop.f32.mrb[0].mxu0
        %3193 = vmatprep.mubr.f32.mxu0 0.0
        %3194 = vmatmul.mubr.f32.gmra.mrb[0].mxu0 %v2692
        %v3195 = vpop.f32.mrb[0].mxu0
        %v3196 = vadd.f32 0.0, %v3195
        %v3197 = vpop.f32.mrb[0].mxu0
        %3198 = vmatprep.mubr.f32.mxu0 0.0
        %3199 = vmatmul.mubr.f32.gmra.mrb[0].mxu0 %v2695
        %v3200 = vpop.f32.mrb[0].mxu0
        %v3201 = vadd.f32 0.0, %v3200
        %v3202 = vpop.f32.mrb[0].mxu0
        %3203 = vmatprep.mubr.f32.mxu0 0.0
        %3204 = vmatmul.mubr.f32.gmra.mrb[0].mxu0 %v2698
        %v3205 = vpop.f32.mrb[0].mxu0
        %v3206 = vadd.f32 0.0, %v3205
        %v3207 = vpop.f32.mrb[0].mxu0
        %3208 = vmatprep.mubr.f32.mxu0 0.0
        %3209 = vmatmul.mubr.f32.gmra.mrb[0].mxu0 %v2701
        %v3210 = vpop.f32.mrb[0].mxu0
        %v3211 = vadd.f32 0.0, %v3210
        %v3212 = vpop.f32.mrb[0].mxu0
        %3213 = vmatprep.mubr.f32.mxu0 0.0
        %3214 = vmatmul.mubr.f32.gmra.mrb[0].mxu0 %v2704
        %v3215 = vpop.f32.mrb[0].mxu0
        %v3216 = vadd.f32 0.0, %v3215
        %v3217 = vpop.f32.mrb[0].mxu0
        %3218 = vmatprep.mubr.f32.mxu0 0.0
        %3219 = vmatmul.mubr.f32.gmra.mrb[0].mxu0 %v2707
        %v3220 = vpop.f32.mrb[0].mxu0
        %v3221 = vadd.f32 0.0, %v3220
        %v3222 = vpop.f32.mrb[0].mxu0
        %3223 = vmatprep.mubr.f32.mxu0 0.0
        %3224 = vmatmul.mubr.f32.gmra.mrb[0].mxu0 %v2710
        %v3225 = vpop.f32.mrb[0].mxu0
        %v3226 = vadd.f32 0.0, %v3225
        %v3227 = vpop.f32.mrb[0].mxu0
        %3228 = vmatprep.mubr.f32.mxu0 0.0
        %3229 = vmatmul.mubr.f32.gmra.mrb[0].mxu0 %v2713
        %v3230 = vpop.f32.mrb[0].mxu0
        %v3231 = vadd.f32 0.0, %v3230
        %v3232 = vpop.f32.mrb[0].mxu0
        %3233 = vmatprep.mubr.f32.mxu0 0.0
        %3234 = vmatmul.mubr.f32.gmra.mrb[0].mxu0 %v2716
        %v3235 = vpop.f32.mrb[0].mxu0
        %v3236 = vadd.f32 0.0, %v3235
        %v3237 = vpop.f32.mrb[0].mxu0
        %3238 = vmatprep.mubr.f32.mxu0 0.0
        %3239 = vmatmul.mubr.f32.gmra.mrb[0].mxu0 %v2719
        %v3240 = vpop.f32.mrb[0].mxu0
        %v3241 = vadd.f32 0.0, %v3240
        %v3242 = vpop.f32.mrb[0].mxu0
        %3243 = vmatprep.mubr.f32.mxu0 0.0
        %3244 = vmatmul.mubr.f32.gmra.mrb[0].mxu0 %v2722
        %v3245 = vpop.f32.mrb[0].mxu0
        %v3246 = vadd.f32 0.0, %v3245
        %v3247 = vpop.f32.mrb[0].mxu0
        %3248 = vmatprep.mubr.f32.mxu0 0.0
        %3249 = vmatmul.mubr.f32.gmra.mrb[0].mxu0 %v2725
        %v3250 = vpop.f32.mrb[0].mxu0
        %v3251 = vadd.f32 0.0, %v3250
        %v3252 = vpop.f32.mrb[0].mxu0
        %3253 = vmatprep.mubr.f32.mxu0 0.0
        %3254 = vmatmul.mubr.f32.gmra.mrb[0].mxu0 %v2728
        %v3255 = vpop.f32.mrb[0].mxu0
        %v3256 = vadd.f32 0.0, %v3255
        %v3257 = vpop.f32.mrb[0].mxu0
        %3258 = vmatprep.mubr.f32.mxu0 0.0
        %3259 = vmatmul.mubr.f32.gmra.mrb[0].mxu0 %v2731
        %v3260 = vpop.f32.mrb[0].mxu0
        %v3261 = vadd.f32 0.0, %v3260
        %v3262 = vpop.f32.mrb[0].mxu0
        %3263 = vmatprep.mubr.f32.mxu0 0.0
        %3264 = vmatmul.mubr.f32.gmra.mrb[0].mxu0 %v2734
        %v3265 = vpop.f32.mrb[0].mxu0
        %v3266 = vadd.f32 0.0, %v3265
        %v3267 = vpop.f32.mrb[0].mxu0
        %3268 = vmatprep.mubr.f32.mxu0 0.0
        %3269 = vmatmul.mubr.f32.gmra.mrb[0].mxu0 %v2737
        %v3270 = vpop.f32.mrb[0].mxu0
        %v3271 = vadd.f32 0.0, %v3270
        %v3272 = vpop.f32.mrb[0].mxu0
        %3273 = vdwg.mxu0
        %v3274 = vadd.f32 %v3087, %v3196
        %v3275 = vadd.f32 %v3088, %v3201
        %v3276 = vadd.f32 %v3089, %v3206
        %v3277 = vadd.f32 %v3090, %v3211
        %v3278 = vadd.f32 %v3091, %v3216
        %v3279 = vadd.f32 %v3092, %v3221
        %v3280 = vadd.f32 %v3093, %v3226
        %v3281 = vadd.f32 %v3094, %v3231
        %v3282 = vadd.f32 %v3095, %v3236
        %v3283 = vadd.f32 %v3096, %v3241
        %v3284 = vadd.f32 %v3097, %v3246
        %v3285 = vadd.f32 %v3098, %v3251
        %v3286 = vadd.f32 %v3099, %v3256
        %v3287 = vadd.f32 %v3100, %v3261
        %v3288 = vadd.f32 %v3101, %v3266
        %v3289 = vadd.f32 %v3102, %v3271
        %v3290 = vld [vmem:[#allocation2 + $0x2] sm:$0xff]
        %v3291 = vld [vmem:[#allocation2 + $0xa] sm:$0xff]
        %v3292 = vld [vmem:[#allocation2 + $0x1a] sm:$0xff]
        %v3293 = vld [vmem:[#allocation2 + $0x22] sm:$0xff]
        %v3294 = vld [vmem:[#allocation2 + $0x32] sm:$0xff]
        %v3295 = vld [vmem:[#allocation2 + $0x3a] sm:$0xff]
        %v3296 = vld [vmem:[#allocation2 + $0x4a] sm:$0xff]
        %v3297 = vld [vmem:[#allocation2 + $0x52] sm:$0xff]
        %v3298 = vld [vmem:[#allocation2 + $0x62] sm:$0xff]
        %v3299 = vld [vmem:[#allocation2 + $0x6a] sm:$0xff]
        %v3300 = vld [vmem:[#allocation2 + $0x7a] sm:$0xff]
        %v3301 = vld [vmem:[#allocation2 + $0x82] sm:$0xff]
        %v3302 = vld [vmem:[#allocation2 + $0x92] sm:$0xff]
        %v3303 = vld [vmem:[#allocation2 + $0x9a] sm:$0xff]
        %v3304 = vld [vmem:[#allocation2 + $0xaa] sm:$0xff]
        %v3305 = vld [vmem:[#allocation2 + $0xb2] sm:$0xff]
        %v3306 = vld [vmem:[#allocation2 + $0xc2] sm:$0xff]
        %v3307 = vld [vmem:[#allocation2 + $0xca] sm:$0xff]
        %v3308 = vld [vmem:[#allocation2 + $0xda] sm:$0xff]
        %v3309 = vld [vmem:[#allocation2 + $0xe2] sm:$0xff]
        %s3310 = scalar_lea.vmem [#allocation6], 144
        %v3311 = vld [vmem:[%s3310] sm:$0xff]
        %v3312 = vld [vmem:[%s3310 + $0x8] sm:$0xff]
        %v3313 = vld [vmem:[%s3310 + $0x10] sm:$0xff]
        %v3314 = vld [vmem:[%s3310 + $0x18] sm:$0xff]
        %v3315 = vld [vmem:[%s3310 + $0x20] sm:$0xff]
        %v3316 = vld [vmem:[%s3310 + $0x28] sm:$0xff]
        %v3317 = vld [vmem:[%s3310 + $0x30] sm:$0xff]
        %v3318 = vld [vmem:[%s3310 + $0x38] sm:$0xff]
        %v3319 = vld [vmem:[%s3310 + $0x40] sm:$0xff]
        %v3321 = vsel %vm471, %v3290, 0
        %v3324 = vsel %vm471, %v3291, 0
        %v3327 = vsel %vm471, %v3292, 0
        %v3330 = vsel %vm471, %v3293, 0
        %v3333 = vsel %vm471, %v3294, 0
        %v3336 = vsel %vm471, %v3295, 0
        %v3339 = vsel %vm471, %v3296, 0
        %v3342 = vsel %vm471, %v3297, 0
        %v3345 = vsel %vm471, %v3298, 0
        %v3348 = vsel %vm471, %v3299, 0
        %v3351 = vsel %vm471, %v3300, 0
        %v3354 = vsel %vm471, %v3301, 0
        %v3357 = vsel %vm471, %v3302, 0
        %v3360 = vsel %vm471, %v3303, 0
        %v3363 = vsel %vm471, %v3304, 0
        %v3366 = vsel %vm471, %v3305, 0
        %v3369 = vsel %vm471, %v3306, 0
        %v3372 = vsel %vm471, %v3307, 0
        %v3375 = vsel %vm471, %v3308, 0
        %v3378 = vsel %vm471, %v3309, 0
        %3380 = vmatprep.subr.mxu0 0.0
        %3381 = vmatpush1.msra.mxu0 %v3311
        %3382 = vmatprep.subr.mxu0 0.0
        %3383 = vmatpush1.msra.mxu0 %v3312
        %3384 = vmatprep.subr.mxu0 0.0
        %3385 = vmatpush1.msra.mxu0 %v3313
        %3386 = vmatprep.subr.mxu0 0.0
        %3387 = vmatpush1.msra.mxu0 %v3314
        %3388 = vmatprep.subr.mxu0 0.0
        %3389 = vmatpush1.msra.mxu0 %v3315
        %3390 = vmatprep.subr.mxu0 0.0
        %3391 = vmatpush1.msra.mxu0 %v3316
        %3392 = vmatprep.subr.mxu0 0.0
        %3393 = vmatpush1.msra.mxu0 %v3317
        %3394 = vmatprep.subr.mxu0 0.0
        %3395 = vmatpush1.msra.mxu0 %v3318
        %3396 = vmatprep.subr.mxu0 0.0
        %3397 = vmatpush1.msra.mxu0 %v3319
        %3398 = vmatprep.subr.mxu0 0.0
        %3399 = vmatpush1.msra.mxu0 0.0
        %3400 = vmatprep.subr.mxu0 0.0
        %3401 = vmatpush1.msra.mxu0 0.0
        %3402 = vmatprep.subr.mxu0 0.0
        %3403 = vmatpush1.msra.mxu0 0.0
        %3404 = vmatprep.subr.mxu0 0.0
        %3405 = vmatpush1.msra.mxu0 0.0
        %3406 = vmatprep.subr.mxu0 0.0
        %3407 = vmatpush1.msra.mxu0 0.0
        %3408 = vmatprep.subr.mxu0 0.0
        %3409 = vmatpush1.msra.mxu0 0.0
        %3410 = vmatprep.subr.mxu0 0.0
        %3411 = vmatpush1.msra.mxu0 0.0
        %3412 = vmatprep.subr.mxu0 0.0
        %3413 = vmatpush1.msra.mxu0 0.0
        %3414 = vmatprep.subr.mxu0 0.0
        %3415 = vmatpush1.msra.mxu0 0.0
        %3416 = vmatprep.subr.mxu0 0.0
        %3417 = vmatpush1.msra.mxu0 0.0
        %3418 = vmatprep.subr.mxu0 0.0
        %3419 = vmatpush1.msra.mxu0 0.0
        %3420 = vmatprep.subr.mxu0 0.0
        %3421 = vmatpush1.msra.mxu0 0.0
        %3422 = vmatprep.subr.mxu0 0.0
        %3423 = vmatpush1.msra.mxu0 0.0
        %3424 = vmatprep.subr.mxu0 0.0
        %3425 = vmatpush1.msra.mxu0 0.0
        %3426 = vmatprep.subr.mxu0 0.0
        %3427 = vmatpush1.msra.mxu0 0.0
        %3428 = vmatprep.subr.mxu0 0.0
        %3429 = vmatpush1.msra.mxu0 0.0
        %3430 = vmatprep.subr.mxu0 0.0
        %3431 = vmatpush1.msra.mxu0 0.0
        %3432 = vmatprep.subr.mxu0 0.0
        %3433 = vmatpush1.msra.mxu0 0.0
        %3434 = vmatprep.subr.mxu0 0.0
        %3435 = vmatpush1.msra.mxu0 0.0
        %3436 = vmatprep.subr.mxu0 0.0
        %3437 = vmatpush1.msra.mxu0 0.0
        %3438 = vmatprep.subr.mxu0 0.0
        %3439 = vmatpush1.msra.mxu0 0.0
        %3440 = vmatprep.subr.mxu0 0.0
        %3441 = vmatpush1.msra.mxu0 0.0
        %3442 = vmatprep.subr.mxu0 0.0
        %3443 = vmatpush1.msra.mxu0 0.0
        %3444 = vmatprep.mubr.f32.mxu0 0.0
        %3445 = vmatmul.mubr.f32.gmra.mrb[0].mxu0 %v3321
        %v3446 = vpop.f32.mrb[0].mxu0
        %v3447 = vadd.f32 0.0, %v3446
        %v3448 = vpop.f32.mrb[0].mxu0
        %3449 = vmatprep.mubr.f32.mxu0 0.0
        %3450 = vmatmul.mubr.f32.gmra.mrb[0].mxu0 %v3324
        %v3451 = vpop.f32.mrb[0].mxu0
        %v3452 = vadd.f32 0.0, %v3451
        %v3453 = vpop.f32.mrb[0].mxu0
        %3454 = vmatprep.mubr.f32.mxu0 0.0
        %3455 = vmatmul.mubr.f32.gmra.mrb[0].mxu0 %v3327
        %v3456 = vpop.f32.mrb[0].mxu0
        %v3457 = vadd.f32 0.0, %v3456
        %v3458 = vpop.f32.mrb[0].mxu0
        %3459 = vmatprep.mubr.f32.mxu0 0.0
        %3460 = vmatmul.mubr.f32.gmra.mrb[0].mxu0 %v3330
        %v3461 = vpop.f32.mrb[0].mxu0
        %v3462 = vadd.f32 0.0, %v3461
        %v3463 = vpop.f32.mrb[0].mxu0
        %3464 = vmatprep.mubr.f32.mxu0 0.0
        %3465 = vmatmul.mubr.f32.gmra.mrb[0].mxu0 %v3333
        %v3466 = vpop.f32.mrb[0].mxu0
        %v3467 = vadd.f32 0.0, %v3466
        %v3468 = vpop.f32.mrb[0].mxu0
        %3469 = vmatprep.mubr.f32.mxu0 0.0
        %3470 = vmatmul.mubr.f32.gmra.mrb[0].mxu0 %v3336
        %v3471 = vpop.f32.mrb[0].mxu0
        %v3472 = vadd.f32 0.0, %v3471
        %v3473 = vpop.f32.mrb[0].mxu0
        %3474 = vmatprep.mubr.f32.mxu0 0.0
        %3475 = vmatmul.mubr.f32.gmra.mrb[0].mxu0 %v3339
        %v3476 = vpop.f32.mrb[0].mxu0
        %v3477 = vadd.f32 0.0, %v3476
        %v3478 = vpop.f32.mrb[0].mxu0
        %3479 = vmatprep.mubr.f32.mxu0 0.0
        %3480 = vmatmul.mubr.f32.gmra.mrb[0].mxu0 %v3342
        %v3481 = vpop.f32.mrb[0].mxu0
        %v3482 = vadd.f32 0.0, %v3481
        %v3483 = vpop.f32.mrb[0].mxu0
        %3484 = vmatprep.mubr.f32.mxu0 0.0
        %3485 = vmatmul.mubr.f32.gmra.mrb[0].mxu0 %v3345
        %v3486 = vpop.f32.mrb[0].mxu0
        %v3487 = vadd.f32 0.0, %v3486
        %v3488 = vpop.f32.mrb[0].mxu0
        %3489 = vmatprep.mubr.f32.mxu0 0.0
        %3490 = vmatmul.mubr.f32.gmra.mrb[0].mxu0 %v3348
        %v3491 = vpop.f32.mrb[0].mxu0
        %v3492 = vadd.f32 0.0, %v3491
        %v3493 = vpop.f32.mrb[0].mxu0
        %3494 = vmatprep.mubr.f32.mxu0 0.0
        %3495 = vmatmul.mubr.f32.gmra.mrb[0].mxu0 %v3351
        %v3496 = vpop.f32.mrb[0].mxu0
        %v3497 = vadd.f32 0.0, %v3496
        %v3498 = vpop.f32.mrb[0].mxu0
        %3499 = vmatprep.mubr.f32.mxu0 0.0
        %3500 = vmatmul.mubr.f32.gmra.mrb[0].mxu0 %v3354
        %v3501 = vpop.f32.mrb[0].mxu0
        %v3502 = vadd.f32 0.0, %v3501
        %v3503 = vpop.f32.mrb[0].mxu0
        %3504 = vmatprep.mubr.f32.mxu0 0.0
        %3505 = vmatmul.mubr.f32.gmra.mrb[0].mxu0 %v3357
        %v3506 = vpop.f32.mrb[0].mxu0
        %v3507 = vadd.f32 0.0, %v3506
        %v3508 = vpop.f32.mrb[0].mxu0
        %3509 = vmatprep.mubr.f32.mxu0 0.0
        %3510 = vmatmul.mubr.f32.gmra.mrb[0].mxu0 %v3360
        %v3511 = vpop.f32.mrb[0].mxu0
        %v3512 = vadd.f32 0.0, %v3511
        %v3513 = vpop.f32.mrb[0].mxu0
        %3514 = vmatprep.mubr.f32.mxu0 0.0
        %3515 = vmatmul.mubr.f32.gmra.mrb[0].mxu0 %v3363
        %v3516 = vpop.f32.mrb[0].mxu0
        %v3517 = vadd.f32 0.0, %v3516
        %v3518 = vpop.f32.mrb[0].mxu0
        %3519 = vmatprep.mubr.f32.mxu0 0.0
        %3520 = vmatmul.mubr.f32.gmra.mrb[0].mxu0 %v3366
        %v3521 = vpop.f32.mrb[0].mxu0
        %v3522 = vadd.f32 0.0, %v3521
        %v3523 = vpop.f32.mrb[0].mxu0
        %3524 = vmatprep.mubr.f32.mxu0 0.0
        %3525 = vmatmul.mubr.f32.gmra.mrb[0].mxu0 %v3369
        %v3526 = vpop.f32.mrb[0].mxu0
        %v3527 = vpop.f32.mrb[0].mxu0
        %3528 = vmatprep.mubr.f32.mxu0 0.0
        %3529 = vmatmul.mubr.f32.gmra.mrb[0].mxu0 %v3372
        %v3530 = vpop.f32.mrb[0].mxu0
        %v3531 = vpop.f32.mrb[0].mxu0
        %3532 = vmatprep.mubr.f32.mxu0 0.0
        %3533 = vmatmul.mubr.f32.gmra.mrb[0].mxu0 %v3375
        %v3534 = vpop.f32.mrb[0].mxu0
        %v3535 = vpop.f32.mrb[0].mxu0
        %3536 = vmatprep.mubr.f32.mxu0 0.0
        %3537 = vmatmul.mubr.f32.gmra.mrb[0].mxu0 %v3378
        %v3538 = vpop.f32.mrb[0].mxu0
        %v3539 = vpop.f32.mrb[0].mxu0
        %3540 = vdwg.mxu0
        %v3541 = vadd.f32 %v3274, %v3447
        %v3542 = vadd.f32 %v3275, %v3452
        %v3543 = vadd.f32 %v3276, %v3457
        %v3544 = vadd.f32 %v3277, %v3462
        %v3545 = vadd.f32 %v3278, %v3467
        %v3546 = vadd.f32 %v3279, %v3472
        %v3547 = vadd.f32 %v3280, %v3477
        %v3548 = vadd.f32 %v3281, %v3482
        %v3549 = vadd.f32 %v3282, %v3487
        %v3550 = vadd.f32 %v3283, %v3492
        %v3551 = vadd.f32 %v3284, %v3497
        %v3552 = vadd.f32 %v3285, %v3502
        %v3553 = vadd.f32 %v3286, %v3507
        %v3554 = vadd.f32 %v3287, %v3512
        %v3555 = vadd.f32 %v3288, %v3517
        %v3556 = vadd.f32 %v3289, %v3522
        %s3557 = scalar_lea.vmem [#allocation6], 360
        %v3558 = vld [vmem:[%s3557] sm:$0xff]
        %v3559 = vld [vmem:[%s3557 + $0x8] sm:$0xff]
        %v3560 = vld [vmem:[%s3557 + $0x10] sm:$0xff]
        %v3561 = vld [vmem:[%s3557 + $0x18] sm:$0xff]
        %v3562 = vld [vmem:[%s3557 + $0x20] sm:$0xff]
        %v3563 = vld [vmem:[%s3557 + $0x28] sm:$0xff]
        %v3564 = vld [vmem:[%s3557 + $0x30] sm:$0xff]
        %v3565 = vld [vmem:[%s3557 + $0x38] sm:$0xff]
        %v3566 = vld [vmem:[%s3557 + $0x40] sm:$0xff]
        %3567 = vmatprep.subr.mxu0 0.0
        %3568 = vmatpush1.msra.mxu0 %v3558
        %3569 = vmatprep.subr.mxu0 0.0
        %3570 = vmatpush1.msra.mxu0 %v3559
        %3571 = vmatprep.subr.mxu0 0.0
        %3572 = vmatpush1.msra.mxu0 %v3560
        %3573 = vmatprep.subr.mxu0 0.0
        %3574 = vmatpush1.msra.mxu0 %v3561
        %3575 = vmatprep.subr.mxu0 0.0
        %3576 = vmatpush1.msra.mxu0 %v3562
        %3577 = vmatprep.subr.mxu0 0.0
        %3578 = vmatpush1.msra.mxu0 %v3563
        %3579 = vmatprep.subr.mxu0 0.0
        %3580 = vmatpush1.msra.mxu0 %v3564
        %3581 = vmatprep.subr.mxu0 0.0
        %3582 = vmatpush1.msra.mxu0 %v3565
        %3583 = vmatprep.subr.mxu0 0.0
        %3584 = vmatpush1.msra.mxu0 %v3566
        %3585 = vmatprep.subr.mxu0 0.0
        %3586 = vmatpush1.msra.mxu0 0.0
        %3587 = vmatprep.subr.mxu0 0.0
        %3588 = vmatpush1.msra.mxu0 0.0
        %3589 = vmatprep.subr.mxu0 0.0
        %3590 = vmatpush1.msra.mxu0 0.0
        %3591 = vmatprep.subr.mxu0 0.0
        %3592 = vmatpush1.msra.mxu0 0.0
        %3593 = vmatprep.subr.mxu0 0.0
        %3594 = vmatpush1.msra.mxu0 0.0
        %3595 = vmatprep.subr.mxu0 0.0
        %3596 = vmatpush1.msra.mxu0 0.0
        %3597 = vmatprep.subr.mxu0 0.0
        %3598 = vmatpush1.msra.mxu0 0.0
        %3599 = vmatprep.subr.mxu0 0.0
        %3600 = vmatpush1.msra.mxu0 0.0
        %3601 = vmatprep.subr.mxu0 0.0
        %3602 = vmatpush1.msra.mxu0 0.0
        %3603 = vmatprep.subr.mxu0 0.0
        %3604 = vmatpush1.msra.mxu0 0.0
        %3605 = vmatprep.subr.mxu0 0.0
        %3606 = vmatpush1.msra.mxu0 0.0
        %3607 = vmatprep.subr.mxu0 0.0
        %3608 = vmatpush1.msra.mxu0 0.0
        %3609 = vmatprep.subr.mxu0 0.0
        %3610 = vmatpush1.msra.mxu0 0.0
        %3611 = vmatprep.subr.mxu0 0.0
        %3612 = vmatpush1.msra.mxu0 0.0
        %3613 = vmatprep.subr.mxu0 0.0
        %3614 = vmatpush1.msra.mxu0 0.0
        %3615 = vmatprep.subr.mxu0 0.0
        %3616 = vmatpush1.msra.mxu0 0.0
        %3617 = vmatprep.subr.mxu0 0.0
        %3618 = vmatpush1.msra.mxu0 0.0
        %3619 = vmatprep.subr.mxu0 0.0
        %3620 = vmatpush1.msra.mxu0 0.0
        %3621 = vmatprep.subr.mxu0 0.0
        %3622 = vmatpush1.msra.mxu0 0.0
        %3623 = vmatprep.subr.mxu0 0.0
        %3624 = vmatpush1.msra.mxu0 0.0
        %3625 = vmatprep.subr.mxu0 0.0
        %3626 = vmatpush1.msra.mxu0 0.0
        %3627 = vmatprep.subr.mxu0 0.0
        %3628 = vmatpush1.msra.mxu0 0.0
        %3629 = vmatprep.subr.mxu0 0.0
        %3630 = vmatpush1.msra.mxu0 0.0
        %3631 = vmatprep.mubr.f32.mxu0 0.0
        %3632 = vmatmul.mubr.f32.gmra.mrb[0].mxu0 %v3321
        %v3633 = vpop.f32.mrb[0].mxu0
        %v3634 = vpop.f32.mrb[0].mxu0
        %3635 = vmatprep.mubr.f32.mxu0 0.0
        %3636 = vmatmul.mubr.f32.gmra.mrb[0].mxu0 %v3324
        %v3637 = vpop.f32.mrb[0].mxu0
        %v3638 = vpop.f32.mrb[0].mxu0
        %3639 = vmatprep.mubr.f32.mxu0 0.0
        %3640 = vmatmul.mubr.f32.gmra.mrb[0].mxu0 %v3327
        %v3641 = vpop.f32.mrb[0].mxu0
        %v3642 = vadd.f32 0.0, %v3641
        %v3643 = vpop.f32.mrb[0].mxu0
        %3644 = vmatprep.mubr.f32.mxu0 0.0
        %3645 = vmatmul.mubr.f32.gmra.mrb[0].mxu0 %v3330
        %v3646 = vpop.f32.mrb[0].mxu0
        %v3647 = vadd.f32 0.0, %v3646
        %v3648 = vpop.f32.mrb[0].mxu0
        %3649 = vmatprep.mubr.f32.mxu0 0.0
        %3650 = vmatmul.mubr.f32.gmra.mrb[0].mxu0 %v3333
        %v3651 = vpop.f32.mrb[0].mxu0
        %v3652 = vadd.f32 0.0, %v3651
        %v3653 = vpop.f32.mrb[0].mxu0
        %3654 = vmatprep.mubr.f32.mxu0 0.0
        %3655 = vmatmul.mubr.f32.gmra.mrb[0].mxu0 %v3336
        %v3656 = vpop.f32.mrb[0].mxu0
        %v3657 = vadd.f32 0.0, %v3656
        %v3658 = vpop.f32.mrb[0].mxu0
        %3659 = vmatprep.mubr.f32.mxu0 0.0
        %3660 = vmatmul.mubr.f32.gmra.mrb[0].mxu0 %v3339
        %v3661 = vpop.f32.mrb[0].mxu0
        %v3662 = vadd.f32 0.0, %v3661
        %v3663 = vpop.f32.mrb[0].mxu0
        %3664 = vmatprep.mubr.f32.mxu0 0.0
        %3665 = vmatmul.mubr.f32.gmra.mrb[0].mxu0 %v3342
        %v3666 = vpop.f32.mrb[0].mxu0
        %v3667 = vadd.f32 0.0, %v3666
        %v3668 = vpop.f32.mrb[0].mxu0
        %3669 = vmatprep.mubr.f32.mxu0 0.0
        %3670 = vmatmul.mubr.f32.gmra.mrb[0].mxu0 %v3345
        %v3671 = vpop.f32.mrb[0].mxu0
        %v3672 = vadd.f32 0.0, %v3671
        %v3673 = vpop.f32.mrb[0].mxu0
        %3674 = vmatprep.mubr.f32.mxu0 0.0
        %3675 = vmatmul.mubr.f32.gmra.mrb[0].mxu0 %v3348
        %v3676 = vpop.f32.mrb[0].mxu0
        %v3677 = vadd.f32 0.0, %v3676
        %v3678 = vpop.f32.mrb[0].mxu0
        %3679 = vmatprep.mubr.f32.mxu0 0.0
        %3680 = vmatmul.mubr.f32.gmra.mrb[0].mxu0 %v3351
        %v3681 = vpop.f32.mrb[0].mxu0
        %v3682 = vadd.f32 0.0, %v3681
        %v3683 = vpop.f32.mrb[0].mxu0
        %3684 = vmatprep.mubr.f32.mxu0 0.0
        %3685 = vmatmul.mubr.f32.gmra.mrb[0].mxu0 %v3354
        %v3686 = vpop.f32.mrb[0].mxu0
        %v3687 = vadd.f32 0.0, %v3686
        %v3688 = vpop.f32.mrb[0].mxu0
        %3689 = vmatprep.mubr.f32.mxu0 0.0
        %3690 = vmatmul.mubr.f32.gmra.mrb[0].mxu0 %v3357
        %v3691 = vpop.f32.mrb[0].mxu0
        %v3692 = vadd.f32 0.0, %v3691
        %v3693 = vpop.f32.mrb[0].mxu0
        %3694 = vmatprep.mubr.f32.mxu0 0.0
        %3695 = vmatmul.mubr.f32.gmra.mrb[0].mxu0 %v3360
        %v3696 = vpop.f32.mrb[0].mxu0
        %v3697 = vadd.f32 0.0, %v3696
        %v3698 = vpop.f32.mrb[0].mxu0
        %3699 = vmatprep.mubr.f32.mxu0 0.0
        %3700 = vmatmul.mubr.f32.gmra.mrb[0].mxu0 %v3363
        %v3701 = vpop.f32.mrb[0].mxu0
        %v3702 = vadd.f32 0.0, %v3701
        %v3703 = vpop.f32.mrb[0].mxu0
        %3704 = vmatprep.mubr.f32.mxu0 0.0
        %3705 = vmatmul.mubr.f32.gmra.mrb[0].mxu0 %v3366
        %v3706 = vpop.f32.mrb[0].mxu0
        %v3707 = vadd.f32 0.0, %v3706
        %v3708 = vpop.f32.mrb[0].mxu0
        %3709 = vmatprep.mubr.f32.mxu0 0.0
        %3710 = vmatmul.mubr.f32.gmra.mrb[0].mxu0 %v3369
        %v3711 = vpop.f32.mrb[0].mxu0
        %v3712 = vadd.f32 0.0, %v3711
        %v3713 = vpop.f32.mrb[0].mxu0
        %3714 = vmatprep.mubr.f32.mxu0 0.0
        %3715 = vmatmul.mubr.f32.gmra.mrb[0].mxu0 %v3372
        %v3716 = vpop.f32.mrb[0].mxu0
        %v3717 = vadd.f32 0.0, %v3716
        %v3718 = vpop.f32.mrb[0].mxu0
        %3719 = vmatprep.mubr.f32.mxu0 0.0
        %3720 = vmatmul.mubr.f32.gmra.mrb[0].mxu0 %v3375
        %v3721 = vpop.f32.mrb[0].mxu0
        %v3722 = vpop.f32.mrb[0].mxu0
        %3723 = vmatprep.mubr.f32.mxu0 0.0
        %3724 = vmatmul.mubr.f32.gmra.mrb[0].mxu0 %v3378
        %v3725 = vpop.f32.mrb[0].mxu0
        %v3726 = vpop.f32.mrb[0].mxu0
        %3727 = vdwg.mxu0
        %v3728 = vadd.f32 %v3541, %v3642
        %v3729 = vadd.f32 %v3542, %v3647
        %v3730 = vadd.f32 %v3543, %v3652
        %v3731 = vadd.f32 %v3544, %v3657
        %v3732 = vadd.f32 %v3545, %v3662
        %v3733 = vadd.f32 %v3546, %v3667
        %v3734 = vadd.f32 %v3547, %v3672
        %v3735 = vadd.f32 %v3548, %v3677
        %v3736 = vadd.f32 %v3549, %v3682
        %v3737 = vadd.f32 %v3550, %v3687
        %v3738 = vadd.f32 %v3551, %v3692
        %v3739 = vadd.f32 %v3552, %v3697
        %v3740 = vadd.f32 %v3553, %v3702
        %v3741 = vadd.f32 %v3554, %v3707
        %v3742 = vadd.f32 %v3555, %v3712
        %v3743 = vadd.f32 %v3556, %v3717
        %s3744 = scalar_lea.vmem [#allocation6], 576
        %v3745 = vld [vmem:[%s3744] sm:$0xff]
        %v3746 = vld [vmem:[%s3744 + $0x8] sm:$0xff]
        %v3747 = vld [vmem:[%s3744 + $0x10] sm:$0xff]
        %v3748 = vld [vmem:[%s3744 + $0x18] sm:$0xff]
        %v3749 = vld [vmem:[%s3744 + $0x20] sm:$0xff]
        %v3750 = vld [vmem:[%s3744 + $0x28] sm:$0xff]
        %v3751 = vld [vmem:[%s3744 + $0x30] sm:$0xff]
        %v3752 = vld [vmem:[%s3744 + $0x38] sm:$0xff]
        %v3753 = vld [vmem:[%s3744 + $0x40] sm:$0xff]
        %3754 = vmatprep.subr.mxu0 0.0
        %3755 = vmatpush1.msra.mxu0 %v3745
        %3756 = vmatprep.subr.mxu0 0.0
        %3757 = vmatpush1.msra.mxu0 %v3746
        %3758 = vmatprep.subr.mxu0 0.0
        %3759 = vmatpush1.msra.mxu0 %v3747
        %3760 = vmatprep.subr.mxu0 0.0
        %3761 = vmatpush1.msra.mxu0 %v3748
        %3762 = vmatprep.subr.mxu0 0.0
        %3763 = vmatpush1.msra.mxu0 %v3749
        %3764 = vmatprep.subr.mxu0 0.0
        %3765 = vmatpush1.msra.mxu0 %v3750
        %3766 = vmatprep.subr.mxu0 0.0
        %3767 = vmatpush1.msra.mxu0 %v3751
        %3768 = vmatprep.subr.mxu0 0.0
        %3769 = vmatpush1.msra.mxu0 %v3752
        %3770 = vmatprep.subr.mxu0 0.0
        %3771 = vmatpush1.msra.mxu0 %v3753
        %3772 = vmatprep.subr.mxu0 0.0
        %3773 = vmatpush1.msra.mxu0 0.0
        %3774 = vmatprep.subr.mxu0 0.0
        %3775 = vmatpush1.msra.mxu0 0.0
        %3776 = vmatprep.subr.mxu0 0.0
        %3777 = vmatpush1.msra.mxu0 0.0
        %3778 = vmatprep.subr.mxu0 0.0
        %3779 = vmatpush1.msra.mxu0 0.0
        %3780 = vmatprep.subr.mxu0 0.0
        %3781 = vmatpush1.msra.mxu0 0.0
        %3782 = vmatprep.subr.mxu0 0.0
        %3783 = vmatpush1.msra.mxu0 0.0
        %3784 = vmatprep.subr.mxu0 0.0
        %3785 = vmatpush1.msra.mxu0 0.0
        %3786 = vmatprep.subr.mxu0 0.0
        %3787 = vmatpush1.msra.mxu0 0.0
        %3788 = vmatprep.subr.mxu0 0.0
        %3789 = vmatpush1.msra.mxu0 0.0
        %3790 = vmatprep.subr.mxu0 0.0
        %3791 = vmatpush1.msra.mxu0 0.0
        %3792 = vmatprep.subr.mxu0 0.0
        %3793 = vmatpush1.msra.mxu0 0.0
        %3794 = vmatprep.subr.mxu0 0.0
        %3795 = vmatpush1.msra.mxu0 0.0
        %3796 = vmatprep.subr.mxu0 0.0
        %3797 = vmatpush1.msra.mxu0 0.0
        %3798 = vmatprep.subr.mxu0 0.0
        %3799 = vmatpush1.msra.mxu0 0.0
        %3800 = vmatprep.subr.mxu0 0.0
        %3801 = vmatpush1.msra.mxu0 0.0
        %3802 = vmatprep.subr.mxu0 0.0
        %3803 = vmatpush1.msra.mxu0 0.0
        %3804 = vmatprep.subr.mxu0 0.0
        %3805 = vmatpush1.msra.mxu0 0.0
        %3806 = vmatprep.subr.mxu0 0.0
        %3807 = vmatpush1.msra.mxu0 0.0
        %3808 = vmatprep.subr.mxu0 0.0
        %3809 = vmatpush1.msra.mxu0 0.0
        %3810 = vmatprep.subr.mxu0 0.0
        %3811 = vmatpush1.msra.mxu0 0.0
        %3812 = vmatprep.subr.mxu0 0.0
        %3813 = vmatpush1.msra.mxu0 0.0
        %3814 = vmatprep.subr.mxu0 0.0
        %3815 = vmatpush1.msra.mxu0 0.0
        %3816 = vmatprep.subr.mxu0 0.0
        %3817 = vmatpush1.msra.mxu0 0.0
        %3818 = vmatprep.mubr.f32.mxu0 0.0
        %3819 = vmatmul.mubr.f32.gmra.mrb[0].mxu0 %v3321
        %v3820 = vpop.f32.mrb[0].mxu0
        %v3821 = vpop.f32.mrb[0].mxu0
        %3822 = vmatprep.mubr.f32.mxu0 0.0
        %3823 = vmatmul.mubr.f32.gmra.mrb[0].mxu0 %v3324
        %v3824 = vpop.f32.mrb[0].mxu0
        %v3825 = vpop.f32.mrb[0].mxu0
        %3826 = vmatprep.mubr.f32.mxu0 0.0
        %3827 = vmatmul.mubr.f32.gmra.mrb[0].mxu0 %v3327
        %v3828 = vpop.f32.mrb[0].mxu0
        %v3829 = vpop.f32.mrb[0].mxu0
        %3830 = vmatprep.mubr.f32.mxu0 0.0
        %3831 = vmatmul.mubr.f32.gmra.mrb[0].mxu0 %v3330
        %v3832 = vpop.f32.mrb[0].mxu0
        %v3833 = vpop.f32.mrb[0].mxu0
        %3834 = vmatprep.mubr.f32.mxu0 0.0
        %3835 = vmatmul.mubr.f32.gmra.mrb[0].mxu0 %v3333
        %v3836 = vpop.f32.mrb[0].mxu0
        %v3837 = vadd.f32 0.0, %v3836
        %v3838 = vpop.f32.mrb[0].mxu0
        %3839 = vmatprep.mubr.f32.mxu0 0.0
        %3840 = vmatmul.mubr.f32.gmra.mrb[0].mxu0 %v3336
        %v3841 = vpop.f32.mrb[0].mxu0
        %v3842 = vadd.f32 0.0, %v3841
        %v3843 = vpop.f32.mrb[0].mxu0
        %3844 = vmatprep.mubr.f32.mxu0 0.0
        %3845 = vmatmul.mubr.f32.gmra.mrb[0].mxu0 %v3339
        %v3846 = vpop.f32.mrb[0].mxu0
        %v3847 = vadd.f32 0.0, %v3846
        %v3848 = vpop.f32.mrb[0].mxu0
        %3849 = vmatprep.mubr.f32.mxu0 0.0
        %3850 = vmatmul.mubr.f32.gmra.mrb[0].mxu0 %v3342
        %v3851 = vpop.f32.mrb[0].mxu0
        %v3852 = vadd.f32 0.0, %v3851
        %v3853 = vpop.f32.mrb[0].mxu0
        %3854 = vmatprep.mubr.f32.mxu0 0.0
        %3855 = vmatmul.mubr.f32.gmra.mrb[0].mxu0 %v3345
        %v3856 = vpop.f32.mrb[0].mxu0
        %v3857 = vadd.f32 0.0, %v3856
        %v3858 = vpop.f32.mrb[0].mxu0
        %3859 = vmatprep.mubr.f32.mxu0 0.0
        %3860 = vmatmul.mubr.f32.gmra.mrb[0].mxu0 %v3348
        %v3861 = vpop.f32.mrb[0].mxu0
        %v3862 = vadd.f32 0.0, %v3861
        %v3863 = vpop.f32.mrb[0].mxu0
        %3864 = vmatprep.mubr.f32.mxu0 0.0
        %3865 = vmatmul.mubr.f32.gmra.mrb[0].mxu0 %v3351
        %v3866 = vpop.f32.mrb[0].mxu0
        %v3867 = vadd.f32 0.0, %v3866
        %v3868 = vpop.f32.mrb[0].mxu0
        %3869 = vmatprep.mubr.f32.mxu0 0.0
        %3870 = vmatmul.mubr.f32.gmra.mrb[0].mxu0 %v3354
        %v3871 = vpop.f32.mrb[0].mxu0
        %v3872 = vadd.f32 0.0, %v3871
        %v3873 = vpop.f32.mrb[0].mxu0
        %3874 = vmatprep.mubr.f32.mxu0 0.0
        %3875 = vmatmul.mubr.f32.gmra.mrb[0].mxu0 %v3357
        %v3876 = vpop.f32.mrb[0].mxu0
        %v3877 = vadd.f32 0.0, %v3876
        %v3878 = vpop.f32.mrb[0].mxu0
        %3879 = vmatprep.mubr.f32.mxu0 0.0
        %3880 = vmatmul.mubr.f32.gmra.mrb[0].mxu0 %v3360
        %v3881 = vpop.f32.mrb[0].mxu0
        %v3882 = vadd.f32 0.0, %v3881
        %v3883 = vpop.f32.mrb[0].mxu0
        %3884 = vmatprep.mubr.f32.mxu0 0.0
        %3885 = vmatmul.mubr.f32.gmra.mrb[0].mxu0 %v3363
        %v3886 = vpop.f32.mrb[0].mxu0
        %v3887 = vadd.f32 0.0, %v3886
        %v3888 = vpop.f32.mrb[0].mxu0
        %3889 = vmatprep.mubr.f32.mxu0 0.0
        %3890 = vmatmul.mubr.f32.gmra.mrb[0].mxu0 %v3366
        %v3891 = vpop.f32.mrb[0].mxu0
        %v3892 = vadd.f32 0.0, %v3891
        %v3893 = vpop.f32.mrb[0].mxu0
        %3894 = vmatprep.mubr.f32.mxu0 0.0
        %3895 = vmatmul.mubr.f32.gmra.mrb[0].mxu0 %v3369
        %v3896 = vpop.f32.mrb[0].mxu0
        %v3897 = vadd.f32 0.0, %v3896
        %v3898 = vpop.f32.mrb[0].mxu0
        %3899 = vmatprep.mubr.f32.mxu0 0.0
        %3900 = vmatmul.mubr.f32.gmra.mrb[0].mxu0 %v3372
        %v3901 = vpop.f32.mrb[0].mxu0
        %v3902 = vadd.f32 0.0, %v3901
        %v3903 = vpop.f32.mrb[0].mxu0
        %3904 = vmatprep.mubr.f32.mxu0 0.0
        %3905 = vmatmul.mubr.f32.gmra.mrb[0].mxu0 %v3375
        %v3906 = vpop.f32.mrb[0].mxu0
        %v3907 = vadd.f32 0.0, %v3906
        %v3908 = vpop.f32.mrb[0].mxu0
        %3909 = vmatprep.mubr.f32.mxu0 0.0
        %3910 = vmatmul.mubr.f32.gmra.mrb[0].mxu0 %v3378
        %v3911 = vpop.f32.mrb[0].mxu0
        %v3912 = vadd.f32 0.0, %v3911
        %v3913 = vpop.f32.mrb[0].mxu0
        %3914 = vdwg.mxu0
        %v3915 = vadd.f32 %v3728, %v3837
        %v3916 = vadd.f32 %v3729, %v3842
        %v3917 = vadd.f32 %v3730, %v3847
        %v3918 = vadd.f32 %v3731, %v3852
        %v3919 = vadd.f32 %v3732, %v3857
        %v3920 = vadd.f32 %v3733, %v3862
        %v3921 = vadd.f32 %v3734, %v3867
        %v3922 = vadd.f32 %v3735, %v3872
        %v3923 = vadd.f32 %v3736, %v3877
        %v3924 = vadd.f32 %v3737, %v3882
        %v3925 = vadd.f32 %v3738, %v3887
        %v3926 = vadd.f32 %v3739, %v3892
        %v3927 = vadd.f32 %v3740, %v3897
        %v3928 = vadd.f32 %v3741, %v3902
        %v3929 = vadd.f32 %v3742, %v3907
        %v3930 = vadd.f32 %v3743, %v3912
        %v3931 = vmax.f32 %v3915, 0.0
        %v3932 = vmax.f32 %v3916, 0.0
        %v3933 = vmax.f32 %v3917, 0.0
        %v3934 = vmax.f32 %v3918, 0.0
        %v3935 = vmax.f32 %v3919, 0.0
        %v3936 = vmax.f32 %v3920, 0.0
        %v3937 = vmax.f32 %v3921, 0.0
        %v3938 = vmax.f32 %v3922, 0.0
        %v3939 = vmax.f32 %v3923, 0.0
        %v3940 = vmax.f32 %v3924, 0.0
        %v3941 = vmax.f32 %v3925, 0.0
        %v3942 = vmax.f32 %v3926, 0.0
        %v3943 = vmax.f32 %v3927, 0.0
        %v3944 = vmax.f32 %v3928, 0.0
        %v3945 = vmax.f32 %v3929, 0.0
        %v3946 = vmax.f32 %v3930, 0.0
        %3947 = vst [vmem:[%s271] sm:$0xff] %v3931
        %3948 = vst [vmem:[%s271 + $0x8] sm:$0xff] %v3932
        %3949 = vst [vmem:[%s271 + $0x10] sm:$0xff] %v3933
        %3950 = vst [vmem:[%s271 + $0x18] sm:$0xff] %v3934
        %3951 = vst [vmem:[%s271 + $0x20] sm:$0xff] %v3935
        %3952 = vst [vmem:[%s271 + $0x28] sm:$0xff] %v3936
        %3953 = vst [vmem:[%s271 + $0x30] sm:$0xff] %v3937
        %3954 = vst [vmem:[%s271 + $0x38] sm:$0xff] %v3938
        %3955 = vst [vmem:[%s271 + $0x40] sm:$0xff] %v3939
        %3956 = vst [vmem:[%s271 + $0x48] sm:$0xff] %v3940
        %3957 = vst [vmem:[%s271 + $0x50] sm:$0xff] %v3941
        %3958 = vst [vmem:[%s271 + $0x58] sm:$0xff] %v3942
        %3959 = vst [vmem:[%s271 + $0x60] sm:$0xff] %v3943
        %3960 = vst [vmem:[%s271 + $0x68] sm:$0xff] %v3944
        %3961 = vst [vmem:[%s271 + $0x70] sm:$0xff] %v3945
        %3962 = vst [vmem:[%s271 + $0x78] sm:$0xff] %v3946
        %s3963 = sand.u32 %s155, 1
        %s3964 = scalar_lea.sflag [#allocation5], %s3963
        %s3965 = sand.u32 %s155, 1
        %s3966 = smul.addr %s3965, 128
        %s3967 = scalar_lea.vmem [#allocation8], %s3966
        // Predicated region
        $region49: #{tpu_custom_call.1} parent=39 // pred_check
          %p3968 = pneg %p165
        $region50: #{tpu_custom_call.1} parent=39 // pred_check_branch
          %3970 = sbr.rel (%p3968) target = $region52
        $region51: #{tpu_custom_call.1} parent=39 // pred_region
          %s3971 = smul.u32 16, %s28
          %s3973 = ssub.s32 2048, 2048
          %3974 = vsyncadd %s3964, %s3973
          %s3975 = smul.addr %s27, 32
          %s3976 = sadd.s32 %s3971, %s3975
          %s3977 = smul.addr %s3976, 128
          %s3978 = scalar_lea.hbm %s5, %s3977
          %s3979 = sshll.u32 %s3967, 4
          %s3980 = int_to_ptr.vmem [resolvable:$true] %s3979
          %3985 = dma.vmem_to_hbm [thread:$0]  %s3980, 2048, %s3978, %s3964, 128, 128, 8
        $region52: #{tpu_custom_call.1} parent=39 // pred_fallthru
          _
      $region40: #{tpu_custom_call.1} parent=5 // pred_fallthru
        _
      %p3986 = scmp.le.s32.totalorder 2, %s18
      // Predicated region
      $region53: #{tpu_custom_call.1} parent=5 // pred_check
        %p3987 = pneg %p3986
      $region54: #{tpu_custom_call.1} parent=5 // pred_check_branch
        %3989 = sbr.rel (%p3987) target = $region56
      $region55: #{tpu_custom_call.1} parent=5 // pred_region
        %s3990 = ssub.s32 %s18, 2
        // Predicated region
        $region57: #{tpu_custom_call.1} parent=55 // pred_check
          %p3991 = pneg %p171
        $region58: #{tpu_custom_call.1} parent=55 // pred_check_branch
          %3993 = sbr.rel (%p3991) target = $region60
        $region59: #{tpu_custom_call.1} parent=55 // pred_region
          %s3994 = sand.u32 %s156, 1
          %s3995 = scalar_lea.sflag [#allocation5], %s3994
          %s3996 = sand.u32 %s156, 1
          %s3997 = smul.addr %s3996, 128
          %s3998 = scalar_lea.vmem [#allocation8], %s3997
          %3999 = dma.done %s3995, 2048
        $region60: #{tpu_custom_call.1} parent=55 // pred_fallthru
          _
      $region56: #{tpu_custom_call.1} parent=5 // pred_fallthru
        _
    $region6: #{tpu_custom_call.1} parent=1 // loop_footer
      %s22 = sadd.s32 1, %s18
    $region7: #{tpu_custom_call.1} parent=1 // loop_footer_branch
      %17 = sbr.rel target = $region3
    $region8: #{tpu_custom_call.1} parent=1 // loop_exit
      _
    %4000 = vsyncpa [#allocation4], 1
    %s4001 = scalar_lea.sflag [#allocation4], 1
    %4002 = vsyncpa %s4001, 1
    %4003 = vsyncpa [#allocation7], 1
    %4004 = vsyncpa [#allocation5], 1
    %s4005 = scalar_lea.sflag [#allocation5], 1
    %4006 = vsyncpa %s4005, 1

</llo_original>
